<compile_context>
chip_gen: v5e
topology: v5e:2x2
jax: 0.10.0
libtpu: 0.0.40
codegen_flags: <defaults>
</compile_context>

<pallas_src>
import functools

import jax
import jax.numpy as jnp
from jax.experimental import pallas as pl
from jax.experimental.pallas import tpu as pltpu


def pad_vocab_size(vocab_size: int, pad_to: int = 64) -> int:
    return (vocab_size + pad_to - 1) // pad_to * pad_to


TOKENS_PER_STEP = 32         # rows gathered per grid step (amortizes step cost)
MAX_TOKENS_PER_CALL = 16384  # caps scalar-prefetch SMEM usage per pallas_call


# ---------------------------------------------------------------------------
# Weight-load-time table fusion (NOT part of the per-forward call path).
# ---------------------------------------------------------------------------
def build_vocab_parallel_table(partition_weights, vocab_starts):
    """Concatenate the per-rank partitions (in vocab order) into the padded
    global table and pad the embedding dim to a multiple of 128 for lane-dense
    DMAs.  Do this ONCE when weights are loaded, not per forward call.

    Returns (table[(padded_vocab, d_pad)], embedding_dim).
    """
    order = sorted(range(len(vocab_starts)), key=lambda r: int(vocab_starts[r]))
    # The single-gather equivalence to masked-lookup + all-reduce requires
    # contiguous, disjoint, covering ranges -- assert it.
    expect = 0
    for r in order:
        assert int(vocab_starts[r]) == expect, (
            "per-rank vocab ranges must be contiguous and disjoint")
        expect += partition_weights[r].shape[0]

    d = partition_weights[0].shape[1]
    table = jnp.concatenate([partition_weights[r] for r in order], axis=0)
    d_pad = ((d + 127) // 128) * 128
    if d_pad != d:
        table = jnp.pad(table, ((0, 0), (0, d_pad - d)))
    return table, d


# ---------------------------------------------------------------------------
# Kernel: pure DMA row gather.
# ---------------------------------------------------------------------------
def _gather_dma_kernel(ids_ref, table_ref, o_ref, copy_sems, *,
                       tokens_per_step, total_vocab):
    """Gather `tokens_per_step` embedding rows per grid step via manual DMA.

    ids_ref   : SMEM (n_pad,) int32 global token ids (scalar prefetch)
    table_ref : (padded_vocab, d_pad) table left in HBM (memory_space=pl.ANY)
    o_ref     : (tokens_per_step, d_pad) VMEM output block
    copy_sems : (tokens_per_step,) DMA semaphores
    """
    t = pl.program_id(0)
    base = t * tokens_per_step

    # Read all ids up front (scalar SMEM reads before any DMA wait).
    toks = [ids_ref[base + j] for j in range(tokens_per_step)]

    # Issue one HBM->VMEM row DMA per token; out-of-range ids are clipped to a
    # valid row here and zeroed below.  All copies are in flight together,
    # hiding per-row DMA latency; nothing touches the VPU / load-store slots.
    copies = []
    for j in range(tokens_per_step):
        row = jnp.clip(toks[j], 0, total_vocab - 1)
        cp = pltpu.make_async_copy(
            table_ref.at[pl.ds(row, 1), :],
            o_ref.at[pl.ds(j, 1), :],
            copy_sems.at[j])
        cp.start()
        copies.append(cp)
    for cp in copies:
        cp.wait()

    # Ids outside [0, padded_vocab) (including the -1 tail padding) produce a
    # zero row -- identical to per-rank masking + all-reduce in the reference.
    # Predicated write, skipped at runtime for valid tokens.
    for j in range(tokens_per_step):
        invalid = jnp.logical_or(toks[j] < 0, toks[j] >= total_vocab)

        @pl.when(invalid)
        def _zero(j=j):
            o_ref[pl.ds(j, 1), :] = jnp.zeros((1, o_ref.shape[1]), o_ref.dtype)


def _embedding_gather_call(flat_ids, table, *, tokens_per_step, dim_sem):
    n_pad = flat_ids.shape[0]
    v_tot, d_pad = table.shape
    dtype = table.dtype
    num_steps = n_pad // tokens_per_step

    kernel = functools.partial(
        _gather_dma_kernel,
        tokens_per_step=tokens_per_step,
        total_vocab=v_tot)

    # Pure gather: read n*D from the table, write n*D to the output.
    bytes_accessed = int(2 * n_pad * d_pad * jnp.dtype(dtype).itemsize
                         + 4 * n_pad)

    return pl.pallas_call(
        kernel,
        out_shape=jax.ShapeDtypeStruct((n_pad, d_pad), dtype),
        grid_spec=pltpu.PrefetchScalarGridSpec(
            num_scalar_prefetch=1,                       # flat_ids -> SMEM
            grid=(num_steps,),
            in_specs=[pl.BlockSpec(memory_space=pl.ANY)],  # table stays in HBM
            out_specs=pl.BlockSpec((tokens_per_step, d_pad),
                                   lambda t, ids_ref: (t, 0)),
            scratch_shapes=[pltpu.SemaphoreType.DMA((tokens_per_step,))],
        ),
        compiler_params=pltpu.CompilerParams(
            dimension_semantics=(dim_sem,)),
        cost_estimate=pl.CostEstimate(flops=0, transcendentals=0,
                                      bytes_accessed=bytes_accessed),
    )(flat_ids, table)


# ---------------------------------------------------------------------------
# Per-forward wrapper (the hot path: no table rebuilding here).
# ---------------------------------------------------------------------------
def vocab_parallel_embedding(ids, table, embedding_dim, *,
                             tokens_per_step=TOKENS_PER_STEP,
                             max_tokens_per_call=MAX_TOKENS_PER_CALL,
                             core_parallel=False):
    """Full VocabParallelEmbedding forward (all tp ranks fused locally).

    ids           : (B, S) int32 global token ids
    table         : (padded_vocab, d_pad) table from build_vocab_parallel_table
    embedding_dim : the real (unpadded) embedding dim
    core_parallel : set True on v7x to split the token axis across the 2 TCs
    Returns (B, S, embedding_dim).
    """
    b, s = ids.shape
    n = b * s
    v_tot, d_pad = table.shape
    dim_sem = pltpu.CORE_PARALLEL if core_parallel else "parallel"

    flat = ids.reshape(-1).astype(jnp.int32)
    # Chunk the token axis so scalar-prefetch SMEM stays bounded for prefill.
    chunk = max(tokens_per_step,
                (max_tokens_per_call // tokens_per_step) * tokens_per_step)

    outs = []
    for start in range(0, n, chunk):
        ids_c = flat[start:start + chunk]
        nc = ids_c.shape[0]
        nc_pad = ((nc + tokens_per_step - 1) // tokens_per_step) * tokens_per_step
        if nc_pad != nc:
            ids_c = jnp.concatenate(
                [ids_c, jnp.full((nc_pad - nc,), -1, jnp.int32)])
        out_c = _embedding_gather_call(
            ids_c, table, tokens_per_step=tokens_per_step, dim_sem=dim_sem)
        if nc_pad != nc:
            out_c = out_c[:nc]
        outs.append(out_c)

    out = outs[0] if len(outs) == 1 else jnp.concatenate(outs, axis=0)
    if d_pad != embedding_dim:              # no slice/copy when D is aligned
        out = out[:, :embedding_dim]
    return out.reshape(b, s, embedding_dim)


if __name__ == "__main__":
    # Small, deterministic setup.
    num_embeddings = 100          # "real" vocab
    embedding_dim = 128           # lane-aligned hidden size
    tp_size = 2
    batch, seq = 2, 40            # 80 tokens -> 3 grid steps at 32 tokens/step

    num_embeddings_padded = pad_vocab_size(num_embeddings)       # 128
    per_partition = num_embeddings_padded // tp_size             # 64
    vocab_starts = [r * per_partition for r in range(tp_size)]

    key = jax.random.PRNGKey(0)
    kw, ki = jax.random.split(key)

    # Full (padded) embedding table; rows >= num_embeddings are padding rows.
    full_weight = jax.random.normal(
        kw, (num_embeddings_padded, embedding_dim), dtype=jnp.float32)
    partition_weights = [
        full_weight[s0:s0 + per_partition] for s0 in vocab_starts
    ]

    # Token ids in [0, num_embeddings)
    ids = jax.random.randint(ki, (batch, seq), 0, num_embeddings,
                             dtype=jnp.int32)

    # Weight-load-time fusion of the per-rank partitions (done once).
    table, d = build_vocab_parallel_table(partition_weights, vocab_starts)

    out = vocab_parallel_embedding(ids, table, d)
    out = jax.block_until_ready(out)

    # Reference: plain embedding lookup in the full padded table.
    ref = full_weight[ids]
    assert out.shape == (batch, seq, embedding_dim), out.shape
    assert jnp.allclose(out, ref, atol=1e-6, rtol=1e-6), "mismatch vs reference"

    print("KERNEL_OK")
</pallas_src>

<mosaic_0001>
module attributes {stable_mosaic.version = 11 : i64} {
  func.func @_gather_dma_kernel(%arg0: i32, %arg1: memref<96xi32, #tpu.memory_space<smem>>, %arg2: memref<128x128xf32, #tpu.memory_space<any>>, %arg3: memref<32x128xf32, #tpu.memory_space<vmem>>, %arg4: memref<32x!tpu.dma_semaphore, #tpu.memory_space<semaphore_mem>>) attributes {dimension_semantics = [#tpu.dimension_semantics<parallel>], iteration_bounds = array<i64: 3>, scalar_prefetch = 1 : i64, scratch_operands = 1 : i64, tpu.core_type = #tpu.core_type<tc>, window_params = [{}, {transform_indices = @transform_1, window_bounds = array<i64: 32, 128>}]} {
    %c32_i32 = arith.constant 32 : i32
    %0 = arith.muli %arg0, %c32_i32 : i32
    %c0_i32 = arith.constant 0 : i32
    %1 = arith.addi %0, %c0_i32 : i32
    %2 = arith.index_cast %1 : i32 to index
    %3 = memref.load %arg1[%2] : memref<96xi32, #tpu.memory_space<smem>>
    %c1_i32 = arith.constant 1 : i32
    %4 = arith.addi %0, %c1_i32 : i32
    %5 = arith.index_cast %4 : i32 to index
    %6 = memref.load %arg1[%5] : memref<96xi32, #tpu.memory_space<smem>>
    %c2_i32 = arith.constant 2 : i32
    %7 = arith.addi %0, %c2_i32 : i32
    %8 = arith.index_cast %7 : i32 to index
    %9 = memref.load %arg1[%8] : memref<96xi32, #tpu.memory_space<smem>>
    %c3_i32 = arith.constant 3 : i32
    %10 = arith.addi %0, %c3_i32 : i32
    %11 = arith.index_cast %10 : i32 to index
    %12 = memref.load %arg1[%11] : memref<96xi32, #tpu.memory_space<smem>>
    %c4_i32 = arith.constant 4 : i32
    %13 = arith.addi %0, %c4_i32 : i32
    %14 = arith.index_cast %13 : i32 to index
    %15 = memref.load %arg1[%14] : memref<96xi32, #tpu.memory_space<smem>>
    %c5_i32 = arith.constant 5 : i32
    %16 = arith.addi %0, %c5_i32 : i32
    %17 = arith.index_cast %16 : i32 to index
    %18 = memref.load %arg1[%17] : memref<96xi32, #tpu.memory_space<smem>>
    %c6_i32 = arith.constant 6 : i32
    %19 = arith.addi %0, %c6_i32 : i32
    %20 = arith.index_cast %19 : i32 to index
    %21 = memref.load %arg1[%20] : memref<96xi32, #tpu.memory_space<smem>>
    %c7_i32 = arith.constant 7 : i32
    %22 = arith.addi %0, %c7_i32 : i32
    %23 = arith.index_cast %22 : i32 to index
    %24 = memref.load %arg1[%23] : memref<96xi32, #tpu.memory_space<smem>>
    %c8_i32 = arith.constant 8 : i32
    %25 = arith.addi %0, %c8_i32 : i32
    %26 = arith.index_cast %25 : i32 to index
    %27 = memref.load %arg1[%26] : memref<96xi32, #tpu.memory_space<smem>>
    %c9_i32 = arith.constant 9 : i32
    %28 = arith.addi %0, %c9_i32 : i32
    %29 = arith.index_cast %28 : i32 to index
    %30 = memref.load %arg1[%29] : memref<96xi32, #tpu.memory_space<smem>>
    %c10_i32 = arith.constant 10 : i32
    %31 = arith.addi %0, %c10_i32 : i32
    %32 = arith.index_cast %31 : i32 to index
    %33 = memref.load %arg1[%32] : memref<96xi32, #tpu.memory_space<smem>>
    %c11_i32 = arith.constant 11 : i32
    %34 = arith.addi %0, %c11_i32 : i32
    %35 = arith.index_cast %34 : i32 to index
    %36 = memref.load %arg1[%35] : memref<96xi32, #tpu.memory_space<smem>>
    %c12_i32 = arith.constant 12 : i32
    %37 = arith.addi %0, %c12_i32 : i32
    %38 = arith.index_cast %37 : i32 to index
    %39 = memref.load %arg1[%38] : memref<96xi32, #tpu.memory_space<smem>>
    %c13_i32 = arith.constant 13 : i32
    %40 = arith.addi %0, %c13_i32 : i32
    %41 = arith.index_cast %40 : i32 to index
    %42 = memref.load %arg1[%41] : memref<96xi32, #tpu.memory_space<smem>>
    %c14_i32 = arith.constant 14 : i32
    %43 = arith.addi %0, %c14_i32 : i32
    %44 = arith.index_cast %43 : i32 to index
    %45 = memref.load %arg1[%44] : memref<96xi32, #tpu.memory_space<smem>>
    %c15_i32 = arith.constant 15 : i32
    %46 = arith.addi %0, %c15_i32 : i32
    %47 = arith.index_cast %46 : i32 to index
    %48 = memref.load %arg1[%47] : memref<96xi32, #tpu.memory_space<smem>>
    %c16_i32 = arith.constant 16 : i32
    %49 = arith.addi %0, %c16_i32 : i32
    %50 = arith.index_cast %49 : i32 to index
    %51 = memref.load %arg1[%50] : memref<96xi32, #tpu.memory_space<smem>>
    %c17_i32 = arith.constant 17 : i32
    %52 = arith.addi %0, %c17_i32 : i32
    %53 = arith.index_cast %52 : i32 to index
    %54 = memref.load %arg1[%53] : memref<96xi32, #tpu.memory_space<smem>>
    %c18_i32 = arith.constant 18 : i32
    %55 = arith.addi %0, %c18_i32 : i32
    %56 = arith.index_cast %55 : i32 to index
    %57 = memref.load %arg1[%56] : memref<96xi32, #tpu.memory_space<smem>>
    %c19_i32 = arith.constant 19 : i32
    %58 = arith.addi %0, %c19_i32 : i32
    %59 = arith.index_cast %58 : i32 to index
    %60 = memref.load %arg1[%59] : memref<96xi32, #tpu.memory_space<smem>>
    %c20_i32 = arith.constant 20 : i32
    %61 = arith.addi %0, %c20_i32 : i32
    %62 = arith.index_cast %61 : i32 to index
    %63 = memref.load %arg1[%62] : memref<96xi32, #tpu.memory_space<smem>>
    %c21_i32 = arith.constant 21 : i32
    %64 = arith.addi %0, %c21_i32 : i32
    %65 = arith.index_cast %64 : i32 to index
    %66 = memref.load %arg1[%65] : memref<96xi32, #tpu.memory_space<smem>>
    %c22_i32 = arith.constant 22 : i32
    %67 = arith.addi %0, %c22_i32 : i32
    %68 = arith.index_cast %67 : i32 to index
    %69 = memref.load %arg1[%68] : memref<96xi32, #tpu.memory_space<smem>>
    %c23_i32 = arith.constant 23 : i32
    %70 = arith.addi %0, %c23_i32 : i32
    %71 = arith.index_cast %70 : i32 to index
    %72 = memref.load %arg1[%71] : memref<96xi32, #tpu.memory_space<smem>>
    %c24_i32 = arith.constant 24 : i32
    %73 = arith.addi %0, %c24_i32 : i32
    %74 = arith.index_cast %73 : i32 to index
    %75 = memref.load %arg1[%74] : memref<96xi32, #tpu.memory_space<smem>>
    %c25_i32 = arith.constant 25 : i32
    %76 = arith.addi %0, %c25_i32 : i32
    %77 = arith.index_cast %76 : i32 to index
    %78 = memref.load %arg1[%77] : memref<96xi32, #tpu.memory_space<smem>>
    %c26_i32 = arith.constant 26 : i32
    %79 = arith.addi %0, %c26_i32 : i32
    %80 = arith.index_cast %79 : i32 to index
    %81 = memref.load %arg1[%80] : memref<96xi32, #tpu.memory_space<smem>>
    %c27_i32 = arith.constant 27 : i32
    %82 = arith.addi %0, %c27_i32 : i32
    %83 = arith.index_cast %82 : i32 to index
    %84 = memref.load %arg1[%83] : memref<96xi32, #tpu.memory_space<smem>>
    %c28_i32 = arith.constant 28 : i32
    %85 = arith.addi %0, %c28_i32 : i32
    %86 = arith.index_cast %85 : i32 to index
    %87 = memref.load %arg1[%86] : memref<96xi32, #tpu.memory_space<smem>>
    %c29_i32 = arith.constant 29 : i32
    %88 = arith.addi %0, %c29_i32 : i32
    %89 = arith.index_cast %88 : i32 to index
    %90 = memref.load %arg1[%89] : memref<96xi32, #tpu.memory_space<smem>>
    %c30_i32 = arith.constant 30 : i32
    %91 = arith.addi %0, %c30_i32 : i32
    %92 = arith.index_cast %91 : i32 to index
    %93 = memref.load %arg1[%92] : memref<96xi32, #tpu.memory_space<smem>>
    %c31_i32 = arith.constant 31 : i32
    %94 = arith.addi %0, %c31_i32 : i32
    %95 = arith.index_cast %94 : i32 to index
    %96 = memref.load %arg1[%95] : memref<96xi32, #tpu.memory_space<smem>>
    %c0_i32_0 = arith.constant 0 : i32
    %c127_i32 = arith.constant 127 : i32
    %97 = arith.maxsi %c0_i32_0, %3 : i32
    %98 = arith.minsi %c127_i32, %97 : i32
    %c0_i32_1 = arith.constant 0 : i32
    %c0_i32_2 = arith.constant 0 : i32
    %99 = tpu.memref_slice %arg2[%98, %c0_i32_2] : memref<128x128xf32, #tpu.memory_space<any>> -> memref<1x128xf32, #tpu.memory_space<any>>
    %c0_i32_3 = arith.constant 0 : i32
    %c0_i32_4 = arith.constant 0 : i32
    %100 = tpu.memref_slice %arg3[%c0_i32_3, %c0_i32_4] : memref<32x128xf32, #tpu.memory_space<vmem>> -> memref<1x128xf32, #tpu.memory_space<vmem>>
    %101 = tpu.memref_slice %arg4[%c0_i32_1] : memref<32x!tpu.dma_semaphore, #tpu.memory_space<semaphore_mem>> -> memref<1x!tpu.dma_semaphore, #tpu.memory_space<semaphore_mem>>
    %102 = tpu.memref_squeeze %101 : memref<1x!tpu.dma_semaphore, #tpu.memory_space<semaphore_mem>> -> memref<!tpu.dma_semaphore, #tpu.memory_space<semaphore_mem>>
    tpu.enqueue_dma source(%99 : memref<1x128xf32, #tpu.memory_space<any>>) target(%100 : memref<1x128xf32, #tpu.memory_space<vmem>>) target_semaphore(%102 : memref<!tpu.dma_semaphore, #tpu.memory_space<semaphore_mem>>)
    %c0_i32_5 = arith.constant 0 : i32
    %c127_i32_6 = arith.constant 127 : i32
    %103 = arith.maxsi %c0_i32_5, %6 : i32
    %104 = arith.minsi %c127_i32_6, %103 : i32
    %c1_i32_7 = arith.constant 1 : i32
    %c0_i32_8 = arith.constant 0 : i32
    %105 = tpu.memref_slice %arg2[%104, %c0_i32_8] : memref<128x128xf32, #tpu.memory_space<any>> -> memref<1x128xf32, #tpu.memory_space<any>>
    %c1_i32_9 = arith.constant 1 : i32
    %c0_i32_10 = arith.constant 0 : i32
    %106 = tpu.memref_slice %arg3[%c1_i32_9, %c0_i32_10] : memref<32x128xf32, #tpu.memory_space<vmem>> -> memref<1x128xf32, #tpu.memory_space<vmem>>
    %107 = tpu.memref_slice %arg4[%c1_i32_7] : memref<32x!tpu.dma_semaphore, #tpu.memory_space<semaphore_mem>> -> memref<1x!tpu.dma_semaphore, #tpu.memory_space<semaphore_mem>>
    %108 = tpu.memref_squeeze %107 : memref<1x!tpu.dma_semaphore, #tpu.memory_space<semaphore_mem>> -> memref<!tpu.dma_semaphore, #tpu.memory_space<semaphore_mem>>
    tpu.enqueue_dma source(%105 : memref<1x128xf32, #tpu.memory_space<any>>) target(%106 : memref<1x128xf32, #tpu.memory_space<vmem>>) target_semaphore(%108 : memref<!tpu.dma_semaphore, #tpu.memory_space<semaphore_mem>>)
    %c0_i32_11 = arith.constant 0 : i32
    %c127_i32_12 = arith.constant 127 : i32
    %109 = arith.maxsi %c0_i32_11, %9 : i32
    %110 = arith.minsi %c127_i32_12, %109 : i32
    %c2_i32_13 = arith.constant 2 : i32
    %c0_i32_14 = arith.constant 0 : i32
    %111 = tpu.memref_slice %arg2[%110, %c0_i32_14] : memref<128x128xf32, #tpu.memory_space<any>> -> memref<1x128xf32, #tpu.memory_space<any>>
    %c2_i32_15 = arith.constant 2 : i32
    %c0_i32_16 = arith.constant 0 : i32
    %112 = tpu.memref_slice %arg3[%c2_i32_15, %c0_i32_16] : memref<32x128xf32, #tpu.memory_space<vmem>> -> memref<1x128xf32, #tpu.memory_space<vmem>>
    %113 = tpu.memref_slice %arg4[%c2_i32_13] : memref<32x!tpu.dma_semaphore, #tpu.memory_space<semaphore_mem>> -> memref<1x!tpu.dma_semaphore, #tpu.memory_space<semaphore_mem>>
    %114 = tpu.memref_squeeze %113 : memref<1x!tpu.dma_semaphore, #tpu.memory_space<semaphore_mem>> -> memref<!tpu.dma_semaphore, #tpu.memory_space<semaphore_mem>>
    tpu.enqueue_dma source(%111 : memref<1x128xf32, #tpu.memory_space<any>>) target(%112 : memref<1x128xf32, #tpu.memory_space<vmem>>) target_semaphore(%114 : memref<!tpu.dma_semaphore, #tpu.memory_space<semaphore_mem>>)
    %c0_i32_17 = arith.constant 0 : i32
    %c127_i32_18 = arith.constant 127 : i32
    %115 = arith.maxsi %c0_i32_17, %12 : i32
    %116 = arith.minsi %c127_i32_18, %115 : i32
    %c3_i32_19 = arith.constant 3 : i32
    %c0_i32_20 = arith.constant 0 : i32
    %117 = tpu.memref_slice %arg2[%116, %c0_i32_20] : memref<128x128xf32, #tpu.memory_space<any>> -> memref<1x128xf32, #tpu.memory_space<any>>
    %c3_i32_21 = arith.constant 3 : i32
    %c0_i32_22 = arith.constant 0 : i32
    %118 = tpu.memref_slice %arg3[%c3_i32_21, %c0_i32_22] : memref<32x128xf32, #tpu.memory_space<vmem>> -> memref<1x128xf32, #tpu.memory_space<vmem>>
    %119 = tpu.memref_slice %arg4[%c3_i32_19] : memref<32x!tpu.dma_semaphore, #tpu.memory_space<semaphore_mem>> -> memref<1x!tpu.dma_semaphore, #tpu.memory_space<semaphore_mem>>
    %120 = tpu.memref_squeeze %119 : memref<1x!tpu.dma_semaphore, #tpu.memory_space<semaphore_mem>> -> memref<!tpu.dma_semaphore, #tpu.memory_space<semaphore_mem>>
    tpu.enqueue_dma source(%117 : memref<1x128xf32, #tpu.memory_space<any>>) target(%118 : memref<1x128xf32, #tpu.memory_space<vmem>>) target_semaphore(%120 : memref<!tpu.dma_semaphore, #tpu.memory_space<semaphore_mem>>)
    %c0_i32_23 = arith.constant 0 : i32
    %c127_i32_24 = arith.constant 127 : i32
    %121 = arith.maxsi %c0_i32_23, %15 : i32
    %122 = arith.minsi %c127_i32_24, %121 : i32
    %c4_i32_25 = arith.constant 4 : i32
    %c0_i32_26 = arith.constant 0 : i32
    %123 = tpu.memref_slice %arg2[%122, %c0_i32_26] : memref<128x128xf32, #tpu.memory_space<any>> -> memref<1x128xf32, #tpu.memory_space<any>>
    %c4_i32_27 = arith.constant 4 : i32
    %c0_i32_28 = arith.constant 0 : i32
    %124 = tpu.memref_slice %arg3[%c4_i32_27, %c0_i32_28] : memref<32x128xf32, #tpu.memory_space<vmem>> -> memref<1x128xf32, #tpu.memory_space<vmem>>
    %125 = tpu.memref_slice %arg4[%c4_i32_25] : memref<32x!tpu.dma_semaphore, #tpu.memory_space<semaphore_mem>> -> memref<1x!tpu.dma_semaphore, #tpu.memory_space<semaphore_mem>>
    %126 = tpu.memref_squeeze %125 : memref<1x!tpu.dma_semaphore, #tpu.memory_space<semaphore_mem>> -> memref<!tpu.dma_semaphore, #tpu.memory_space<semaphore_mem>>
    tpu.enqueue_dma source(%123 : memref<1x128xf32, #tpu.memory_space<any>>) target(%124 : memref<1x128xf32, #tpu.memory_space<vmem>>) target_semaphore(%126 : memref<!tpu.dma_semaphore, #tpu.memory_space<semaphore_mem>>)
    %c0_i32_29 = arith.constant 0 : i32
    %c127_i32_30 = arith.constant 127 : i32
    %127 = arith.maxsi %c0_i32_29, %18 : i32
    %128 = arith.minsi %c127_i32_30, %127 : i32
    %c5_i32_31 = arith.constant 5 : i32
    %c0_i32_32 = arith.constant 0 : i32
    %129 = tpu.memref_slice %arg2[%128, %c0_i32_32] : memref<128x128xf32, #tpu.memory_space<any>> -> memref<1x128xf32, #tpu.memory_space<any>>
    %c5_i32_33 = arith.constant 5 : i32
    %c0_i32_34 = arith.constant 0 : i32
    %130 = tpu.memref_slice %arg3[%c5_i32_33, %c0_i32_34] : memref<32x128xf32, #tpu.memory_space<vmem>> -> memref<1x128xf32, #tpu.memory_space<vmem>>
    %131 = tpu.memref_slice %arg4[%c5_i32_31] : memref<32x!tpu.dma_semaphore, #tpu.memory_space<semaphore_mem>> -> memref<1x!tpu.dma_semaphore, #tpu.memory_space<semaphore_mem>>
    %132 = tpu.memref_squeeze %131 : memref<1x!tpu.dma_semaphore, #tpu.memory_space<semaphore_mem>> -> memref<!tpu.dma_semaphore, #tpu.memory_space<semaphore_mem>>
    tpu.enqueue_dma source(%129 : memref<1x128xf32, #tpu.memory_space<any>>) target(%130 : memref<1x128xf32, #tpu.memory_space<vmem>>) target_semaphore(%132 : memref<!tpu.dma_semaphore, #tpu.memory_space<semaphore_mem>>)
    %c0_i32_35 = arith.constant 0 : i32
    %c127_i32_36 = arith.constant 127 : i32
    %133 = arith.maxsi %c0_i32_35, %21 : i32
    %134 = arith.minsi %c127_i32_36, %133 : i32
    %c6_i32_37 = arith.constant 6 : i32
    %c0_i32_38 = arith.constant 0 : i32
    %135 = tpu.memref_slice %arg2[%134, %c0_i32_38] : memref<128x128xf32, #tpu.memory_space<any>> -> memref<1x128xf32, #tpu.memory_space<any>>
    %c6_i32_39 = arith.constant 6 : i32
    %c0_i32_40 = arith.constant 0 : i32
    %136 = tpu.memref_slice %arg3[%c6_i32_39, %c0_i32_40] : memref<32x128xf32, #tpu.memory_space<vmem>> -> memref<1x128xf32, #tpu.memory_space<vmem>>
    %137 = tpu.memref_slice %arg4[%c6_i32_37] : memref<32x!tpu.dma_semaphore, #tpu.memory_space<semaphore_mem>> -> memref<1x!tpu.dma_semaphore, #tpu.memory_space<semaphore_mem>>
    %138 = tpu.memref_squeeze %137 : memref<1x!tpu.dma_semaphore, #tpu.memory_space<semaphore_mem>> -> memref<!tpu.dma_semaphore, #tpu.memory_space<semaphore_mem>>
    tpu.enqueue_dma source(%135 : memref<1x128xf32, #tpu.memory_space<any>>) target(%136 : memref<1x128xf32, #tpu.memory_space<vmem>>) target_semaphore(%138 : memref<!tpu.dma_semaphore, #tpu.memory_space<semaphore_mem>>)
    %c0_i32_41 = arith.constant 0 : i32
    %c127_i32_42 = arith.constant 127 : i32
    %139 = arith.maxsi %c0_i32_41, %24 : i32
    %140 = arith.minsi %c127_i32_42, %139 : i32
    %c7_i32_43 = arith.constant 7 : i32
    %c0_i32_44 = arith.constant 0 : i32
    %141 = tpu.memref_slice %arg2[%140, %c0_i32_44] : memref<128x128xf32, #tpu.memory_space<any>> -> memref<1x128xf32, #tpu.memory_space<any>>
    %c7_i32_45 = arith.constant 7 : i32
    %c0_i32_46 = arith.constant 0 : i32
    %142 = tpu.memref_slice %arg3[%c7_i32_45, %c0_i32_46] : memref<32x128xf32, #tpu.memory_space<vmem>> -> memref<1x128xf32, #tpu.memory_space<vmem>>
    %143 = tpu.memref_slice %arg4[%c7_i32_43] : memref<32x!tpu.dma_semaphore, #tpu.memory_space<semaphore_mem>> -> memref<1x!tpu.dma_semaphore, #tpu.memory_space<semaphore_mem>>
    %144 = tpu.memref_squeeze %143 : memref<1x!tpu.dma_semaphore, #tpu.memory_space<semaphore_mem>> -> memref<!tpu.dma_semaphore, #tpu.memory_space<semaphore_mem>>
    tpu.enqueue_dma source(%141 : memref<1x128xf32, #tpu.memory_space<any>>) target(%142 : memref<1x128xf32, #tpu.memory_space<vmem>>) target_semaphore(%144 : memref<!tpu.dma_semaphore, #tpu.memory_space<semaphore_mem>>)
    %c0_i32_47 = arith.constant 0 : i32
    %c127_i32_48 = arith.constant 127 : i32
    %145 = arith.maxsi %c0_i32_47, %27 : i32
    %146 = arith.minsi %c127_i32_48, %145 : i32
    %c8_i32_49 = arith.constant 8 : i32
    %c0_i32_50 = arith.constant 0 : i32
    %147 = tpu.memref_slice %arg2[%146, %c0_i32_50] : memref<128x128xf32, #tpu.memory_space<any>> -> memref<1x128xf32, #tpu.memory_space<any>>
    %c8_i32_51 = arith.constant 8 : i32
    %c0_i32_52 = arith.constant 0 : i32
    %148 = tpu.memref_slice %arg3[%c8_i32_51, %c0_i32_52] : memref<32x128xf32, #tpu.memory_space<vmem>> -> memref<1x128xf32, #tpu.memory_space<vmem>>
    %149 = tpu.memref_slice %arg4[%c8_i32_49] : memref<32x!tpu.dma_semaphore, #tpu.memory_space<semaphore_mem>> -> memref<1x!tpu.dma_semaphore, #tpu.memory_space<semaphore_mem>>
    %150 = tpu.memref_squeeze %149 : memref<1x!tpu.dma_semaphore, #tpu.memory_space<semaphore_mem>> -> memref<!tpu.dma_semaphore, #tpu.memory_space<semaphore_mem>>
    tpu.enqueue_dma source(%147 : memref<1x128xf32, #tpu.memory_space<any>>) target(%148 : memref<1x128xf32, #tpu.memory_space<vmem>>) target_semaphore(%150 : memref<!tpu.dma_semaphore, #tpu.memory_space<semaphore_mem>>)
    %c0_i32_53 = arith.constant 0 : i32
    %c127_i32_54 = arith.constant 127 : i32
    %151 = arith.maxsi %c0_i32_53, %30 : i32
    %152 = arith.minsi %c127_i32_54, %151 : i32
    %c9_i32_55 = arith.constant 9 : i32
    %c0_i32_56 = arith.constant 0 : i32
    %153 = tpu.memref_slice %arg2[%152, %c0_i32_56] : memref<128x128xf32, #tpu.memory_space<any>> -> memref<1x128xf32, #tpu.memory_space<any>>
    %c9_i32_57 = arith.constant 9 : i32
    %c0_i32_58 = arith.constant 0 : i32
    %154 = tpu.memref_slice %arg3[%c9_i32_57, %c0_i32_58] : memref<32x128xf32, #tpu.memory_space<vmem>> -> memref<1x128xf32, #tpu.memory_space<vmem>>
    %155 = tpu.memref_slice %arg4[%c9_i32_55] : memref<32x!tpu.dma_semaphore, #tpu.memory_space<semaphore_mem>> -> memref<1x!tpu.dma_semaphore, #tpu.memory_space<semaphore_mem>>
    %156 = tpu.memref_squeeze %155 : memref<1x!tpu.dma_semaphore, #tpu.memory_space<semaphore_mem>> -> memref<!tpu.dma_semaphore, #tpu.memory_space<semaphore_mem>>
    tpu.enqueue_dma source(%153 : memref<1x128xf32, #tpu.memory_space<any>>) target(%154 : memref<1x128xf32, #tpu.memory_space<vmem>>) target_semaphore(%156 : memref<!tpu.dma_semaphore, #tpu.memory_space<semaphore_mem>>)
    %c0_i32_59 = arith.constant 0 : i32
    %c127_i32_60 = arith.constant 127 : i32
    %157 = arith.maxsi %c0_i32_59, %33 : i32
    %158 = arith.minsi %c127_i32_60, %157 : i32
    %c10_i32_61 = arith.constant 10 : i32
    %c0_i32_62 = arith.constant 0 : i32
    %159 = tpu.memref_slice %arg2[%158, %c0_i32_62] : memref<128x128xf32, #tpu.memory_space<any>> -> memref<1x128xf32, #tpu.memory_space<any>>
    %c10_i32_63 = arith.constant 10 : i32
    %c0_i32_64 = arith.constant 0 : i32
    %160 = tpu.memref_slice %arg3[%c10_i32_63, %c0_i32_64] : memref<32x128xf32, #tpu.memory_space<vmem>> -> memref<1x128xf32, #tpu.memory_space<vmem>>
    %161 = tpu.memref_slice %arg4[%c10_i32_61] : memref<32x!tpu.dma_semaphore, #tpu.memory_space<semaphore_mem>> -> memref<1x!tpu.dma_semaphore, #tpu.memory_space<semaphore_mem>>
    %162 = tpu.memref_squeeze %161 : memref<1x!tpu.dma_semaphore, #tpu.memory_space<semaphore_mem>> -> memref<!tpu.dma_semaphore, #tpu.memory_space<semaphore_mem>>
    tpu.enqueue_dma source(%159 : memref<1x128xf32, #tpu.memory_space<any>>) target(%160 : memref<1x128xf32, #tpu.memory_space<vmem>>) target_semaphore(%162 : memref<!tpu.dma_semaphore, #tpu.memory_space<semaphore_mem>>)
    %c0_i32_65 = arith.constant 0 : i32
    %c127_i32_66 = arith.constant 127 : i32
    %163 = arith.maxsi %c0_i32_65, %36 : i32
    %164 = arith.minsi %c127_i32_66, %163 : i32
    %c11_i32_67 = arith.constant 11 : i32
    %c0_i32_68 = arith.constant 0 : i32
    %165 = tpu.memref_slice %arg2[%164, %c0_i32_68] : memref<128x128xf32, #tpu.memory_space<any>> -> memref<1x128xf32, #tpu.memory_space<any>>
    %c11_i32_69 = arith.constant 11 : i32
    %c0_i32_70 = arith.constant 0 : i32
    %166 = tpu.memref_slice %arg3[%c11_i32_69, %c0_i32_70] : memref<32x128xf32, #tpu.memory_space<vmem>> -> memref<1x128xf32, #tpu.memory_space<vmem>>
    %167 = tpu.memref_slice %arg4[%c11_i32_67] : memref<32x!tpu.dma_semaphore, #tpu.memory_space<semaphore_mem>> -> memref<1x!tpu.dma_semaphore, #tpu.memory_space<semaphore_mem>>
    %168 = tpu.memref_squeeze %167 : memref<1x!tpu.dma_semaphore, #tpu.memory_space<semaphore_mem>> -> memref<!tpu.dma_semaphore, #tpu.memory_space<semaphore_mem>>
    tpu.enqueue_dma source(%165 : memref<1x128xf32, #tpu.memory_space<any>>) target(%166 : memref<1x128xf32, #tpu.memory_space<vmem>>) target_semaphore(%168 : memref<!tpu.dma_semaphore, #tpu.memory_space<semaphore_mem>>)
    %c0_i32_71 = arith.constant 0 : i32
    %c127_i32_72 = arith.constant 127 : i32
    %169 = arith.maxsi %c0_i32_71, %39 : i32
    %170 = arith.minsi %c127_i32_72, %169 : i32
    %c12_i32_73 = arith.constant 12 : i32
    %c0_i32_74 = arith.constant 0 : i32
    %171 = tpu.memref_slice %arg2[%170, %c0_i32_74] : memref<128x128xf32, #tpu.memory_space<any>> -> memref<1x128xf32, #tpu.memory_space<any>>
    %c12_i32_75 = arith.constant 12 : i32
    %c0_i32_76 = arith.constant 0 : i32
    %172 = tpu.memref_slice %arg3[%c12_i32_75, %c0_i32_76] : memref<32x128xf32, #tpu.memory_space<vmem>> -> memref<1x128xf32, #tpu.memory_space<vmem>>
    %173 = tpu.memref_slice %arg4[%c12_i32_73] : memref<32x!tpu.dma_semaphore, #tpu.memory_space<semaphore_mem>> -> memref<1x!tpu.dma_semaphore, #tpu.memory_space<semaphore_mem>>
    %174 = tpu.memref_squeeze %173 : memref<1x!tpu.dma_semaphore, #tpu.memory_space<semaphore_mem>> -> memref<!tpu.dma_semaphore, #tpu.memory_space<semaphore_mem>>
    tpu.enqueue_dma source(%171 : memref<1x128xf32, #tpu.memory_space<any>>) target(%172 : memref<1x128xf32, #tpu.memory_space<vmem>>) target_semaphore(%174 : memref<!tpu.dma_semaphore, #tpu.memory_space<semaphore_mem>>)
    %c0_i32_77 = arith.constant 0 : i32
    %c127_i32_78 = arith.constant 127 : i32
    %175 = arith.maxsi %c0_i32_77, %42 : i32
    %176 = arith.minsi %c127_i32_78, %175 : i32
    %c13_i32_79 = arith.constant 13 : i32
    %c0_i32_80 = arith.constant 0 : i32
    %177 = tpu.memref_slice %arg2[%176, %c0_i32_80] : memref<128x128xf32, #tpu.memory_space<any>> -> memref<1x128xf32, #tpu.memory_space<any>>
    %c13_i32_81 = arith.constant 13 : i32
    %c0_i32_82 = arith.constant 0 : i32
    %178 = tpu.memref_slice %arg3[%c13_i32_81, %c0_i32_82] : memref<32x128xf32, #tpu.memory_space<vmem>> -> memref<1x128xf32, #tpu.memory_space<vmem>>
    %179 = tpu.memref_slice %arg4[%c13_i32_79] : memref<32x!tpu.dma_semaphore, #tpu.memory_space<semaphore_mem>> -> memref<1x!tpu.dma_semaphore, #tpu.memory_space<semaphore_mem>>
    %180 = tpu.memref_squeeze %179 : memref<1x!tpu.dma_semaphore, #tpu.memory_space<semaphore_mem>> -> memref<!tpu.dma_semaphore, #tpu.memory_space<semaphore_mem>>
    tpu.enqueue_dma source(%177 : memref<1x128xf32, #tpu.memory_space<any>>) target(%178 : memref<1x128xf32, #tpu.memory_space<vmem>>) target_semaphore(%180 : memref<!tpu.dma_semaphore, #tpu.memory_space<semaphore_mem>>)
    %c0_i32_83 = arith.constant 0 : i32
    %c127_i32_84 = arith.constant 127 : i32
    %181 = arith.maxsi %c0_i32_83, %45 : i32
    %182 = arith.minsi %c127_i32_84, %181 : i32
    %c14_i32_85 = arith.constant 14 : i32
    %c0_i32_86 = arith.constant 0 : i32
    %183 = tpu.memref_slice %arg2[%182, %c0_i32_86] : memref<128x128xf32, #tpu.memory_space<any>> -> memref<1x128xf32, #tpu.memory_space<any>>
    %c14_i32_87 = arith.constant 14 : i32
    %c0_i32_88 = arith.constant 0 : i32
    %184 = tpu.memref_slice %arg3[%c14_i32_87, %c0_i32_88] : memref<32x128xf32, #tpu.memory_space<vmem>> -> memref<1x128xf32, #tpu.memory_space<vmem>>
    %185 = tpu.memref_slice %arg4[%c14_i32_85] : memref<32x!tpu.dma_semaphore, #tpu.memory_space<semaphore_mem>> -> memref<1x!tpu.dma_semaphore, #tpu.memory_space<semaphore_mem>>
    %186 = tpu.memref_squeeze %185 : memref<1x!tpu.dma_semaphore, #tpu.memory_space<semaphore_mem>> -> memref<!tpu.dma_semaphore, #tpu.memory_space<semaphore_mem>>
    tpu.enqueue_dma source(%183 : memref<1x128xf32, #tpu.memory_space<any>>) target(%184 : memref<1x128xf32, #tpu.memory_space<vmem>>) target_semaphore(%186 : memref<!tpu.dma_semaphore, #tpu.memory_space<semaphore_mem>>)
    %c0_i32_89 = arith.constant 0 : i32
    %c127_i32_90 = arith.constant 127 : i32
    %187 = arith.maxsi %c0_i32_89, %48 : i32
    %188 = arith.minsi %c127_i32_90, %187 : i32
    %c15_i32_91 = arith.constant 15 : i32
    %c0_i32_92 = arith.constant 0 : i32
    %189 = tpu.memref_slice %arg2[%188, %c0_i32_92] : memref<128x128xf32, #tpu.memory_space<any>> -> memref<1x128xf32, #tpu.memory_space<any>>
    %c15_i32_93 = arith.constant 15 : i32
    %c0_i32_94 = arith.constant 0 : i32
    %190 = tpu.memref_slice %arg3[%c15_i32_93, %c0_i32_94] : memref<32x128xf32, #tpu.memory_space<vmem>> -> memref<1x128xf32, #tpu.memory_space<vmem>>
    %191 = tpu.memref_slice %arg4[%c15_i32_91] : memref<32x!tpu.dma_semaphore, #tpu.memory_space<semaphore_mem>> -> memref<1x!tpu.dma_semaphore, #tpu.memory_space<semaphore_mem>>
    %192 = tpu.memref_squeeze %191 : memref<1x!tpu.dma_semaphore, #tpu.memory_space<semaphore_mem>> -> memref<!tpu.dma_semaphore, #tpu.memory_space<semaphore_mem>>
    tpu.enqueue_dma source(%189 : memref<1x128xf32, #tpu.memory_space<any>>) target(%190 : memref<1x128xf32, #tpu.memory_space<vmem>>) target_semaphore(%192 : memref<!tpu.dma_semaphore, #tpu.memory_space<semaphore_mem>>)
    %c0_i32_95 = arith.constant 0 : i32
    %c127_i32_96 = arith.constant 127 : i32
    %193 = arith.maxsi %c0_i32_95, %51 : i32
    %194 = arith.minsi %c127_i32_96, %193 : i32
    %c16_i32_97 = arith.constant 16 : i32
    %c0_i32_98 = arith.constant 0 : i32
    %195 = tpu.memref_slice %arg2[%194, %c0_i32_98] : memref<128x128xf32, #tpu.memory_space<any>> -> memref<1x128xf32, #tpu.memory_space<any>>
    %c16_i32_99 = arith.constant 16 : i32
    %c0_i32_100 = arith.constant 0 : i32
    %196 = tpu.memref_slice %arg3[%c16_i32_99, %c0_i32_100] : memref<32x128xf32, #tpu.memory_space<vmem>> -> memref<1x128xf32, #tpu.memory_space<vmem>>
    %197 = tpu.memref_slice %arg4[%c16_i32_97] : memref<32x!tpu.dma_semaphore, #tpu.memory_space<semaphore_mem>> -> memref<1x!tpu.dma_semaphore, #tpu.memory_space<semaphore_mem>>
    %198 = tpu.memref_squeeze %197 : memref<1x!tpu.dma_semaphore, #tpu.memory_space<semaphore_mem>> -> memref<!tpu.dma_semaphore, #tpu.memory_space<semaphore_mem>>
    tpu.enqueue_dma source(%195 : memref<1x128xf32, #tpu.memory_space<any>>) target(%196 : memref<1x128xf32, #tpu.memory_space<vmem>>) target_semaphore(%198 : memref<!tpu.dma_semaphore, #tpu.memory_space<semaphore_mem>>)
    %c0_i32_101 = arith.constant 0 : i32
    %c127_i32_102 = arith.constant 127 : i32
    %199 = arith.maxsi %c0_i32_101, %54 : i32
    %200 = arith.minsi %c127_i32_102, %199 : i32
    %c17_i32_103 = arith.constant 17 : i32
    %c0_i32_104 = arith.constant 0 : i32
    %201 = tpu.memref_slice %arg2[%200, %c0_i32_104] : memref<128x128xf32, #tpu.memory_space<any>> -> memref<1x128xf32, #tpu.memory_space<any>>
    %c17_i32_105 = arith.constant 17 : i32
    %c0_i32_106 = arith.constant 0 : i32
    %202 = tpu.memref_slice %arg3[%c17_i32_105, %c0_i32_106] : memref<32x128xf32, #tpu.memory_space<vmem>> -> memref<1x128xf32, #tpu.memory_space<vmem>>
    %203 = tpu.memref_slice %arg4[%c17_i32_103] : memref<32x!tpu.dma_semaphore, #tpu.memory_space<semaphore_mem>> -> memref<1x!tpu.dma_semaphore, #tpu.memory_space<semaphore_mem>>
    %204 = tpu.memref_squeeze %203 : memref<1x!tpu.dma_semaphore, #tpu.memory_space<semaphore_mem>> -> memref<!tpu.dma_semaphore, #tpu.memory_space<semaphore_mem>>
    tpu.enqueue_dma source(%201 : memref<1x128xf32, #tpu.memory_space<any>>) target(%202 : memref<1x128xf32, #tpu.memory_space<vmem>>) target_semaphore(%204 : memref<!tpu.dma_semaphore, #tpu.memory_space<semaphore_mem>>)
    %c0_i32_107 = arith.constant 0 : i32
    %c127_i32_108 = arith.constant 127 : i32
    %205 = arith.maxsi %c0_i32_107, %57 : i32
    %206 = arith.minsi %c127_i32_108, %205 : i32
    %c18_i32_109 = arith.constant 18 : i32
    %c0_i32_110 = arith.constant 0 : i32
    %207 = tpu.memref_slice %arg2[%206, %c0_i32_110] : memref<128x128xf32, #tpu.memory_space<any>> -> memref<1x128xf32, #tpu.memory_space<any>>
    %c18_i32_111 = arith.constant 18 : i32
    %c0_i32_112 = arith.constant 0 : i32
    %208 = tpu.memref_slice %arg3[%c18_i32_111, %c0_i32_112] : memref<32x128xf32, #tpu.memory_space<vmem>> -> memref<1x128xf32, #tpu.memory_space<vmem>>
    %209 = tpu.memref_slice %arg4[%c18_i32_109] : memref<32x!tpu.dma_semaphore, #tpu.memory_space<semaphore_mem>> -> memref<1x!tpu.dma_semaphore, #tpu.memory_space<semaphore_mem>>
    %210 = tpu.memref_squeeze %209 : memref<1x!tpu.dma_semaphore, #tpu.memory_space<semaphore_mem>> -> memref<!tpu.dma_semaphore, #tpu.memory_space<semaphore_mem>>
    tpu.enqueue_dma source(%207 : memref<1x128xf32, #tpu.memory_space<any>>) target(%208 : memref<1x128xf32, #tpu.memory_space<vmem>>) target_semaphore(%210 : memref<!tpu.dma_semaphore, #tpu.memory_space<semaphore_mem>>)
    %c0_i32_113 = arith.constant 0 : i32
    %c127_i32_114 = arith.constant 127 : i32
    %211 = arith.maxsi %c0_i32_113, %60 : i32
    %212 = arith.minsi %c127_i32_114, %211 : i32
    %c19_i32_115 = arith.constant 19 : i32
    %c0_i32_116 = arith.constant 0 : i32
    %213 = tpu.memref_slice %arg2[%212, %c0_i32_116] : memref<128x128xf32, #tpu.memory_space<any>> -> memref<1x128xf32, #tpu.memory_space<any>>
    %c19_i32_117 = arith.constant 19 : i32
    %c0_i32_118 = arith.constant 0 : i32
    %214 = tpu.memref_slice %arg3[%c19_i32_117, %c0_i32_118] : memref<32x128xf32, #tpu.memory_space<vmem>> -> memref<1x128xf32, #tpu.memory_space<vmem>>
    %215 = tpu.memref_slice %arg4[%c19_i32_115] : memref<32x!tpu.dma_semaphore, #tpu.memory_space<semaphore_mem>> -> memref<1x!tpu.dma_semaphore, #tpu.memory_space<semaphore_mem>>
    %216 = tpu.memref_squeeze %215 : memref<1x!tpu.dma_semaphore, #tpu.memory_space<semaphore_mem>> -> memref<!tpu.dma_semaphore, #tpu.memory_space<semaphore_mem>>
    tpu.enqueue_dma source(%213 : memref<1x128xf32, #tpu.memory_space<any>>) target(%214 : memref<1x128xf32, #tpu.memory_space<vmem>>) target_semaphore(%216 : memref<!tpu.dma_semaphore, #tpu.memory_space<semaphore_mem>>)
    %c0_i32_119 = arith.constant 0 : i32
    %c127_i32_120 = arith.constant 127 : i32
    %217 = arith.maxsi %c0_i32_119, %63 : i32
    %218 = arith.minsi %c127_i32_120, %217 : i32
    %c20_i32_121 = arith.constant 20 : i32
    %c0_i32_122 = arith.constant 0 : i32
    %219 = tpu.memref_slice %arg2[%218, %c0_i32_122] : memref<128x128xf32, #tpu.memory_space<any>> -> memref<1x128xf32, #tpu.memory_space<any>>
    %c20_i32_123 = arith.constant 20 : i32
    %c0_i32_124 = arith.constant 0 : i32
    %220 = tpu.memref_slice %arg3[%c20_i32_123, %c0_i32_124] : memref<32x128xf32, #tpu.memory_space<vmem>> -> memref<1x128xf32, #tpu.memory_space<vmem>>
    %221 = tpu.memref_slice %arg4[%c20_i32_121] : memref<32x!tpu.dma_semaphore, #tpu.memory_space<semaphore_mem>> -> memref<1x!tpu.dma_semaphore, #tpu.memory_space<semaphore_mem>>
    %222 = tpu.memref_squeeze %221 : memref<1x!tpu.dma_semaphore, #tpu.memory_space<semaphore_mem>> -> memref<!tpu.dma_semaphore, #tpu.memory_space<semaphore_mem>>
    tpu.enqueue_dma source(%219 : memref<1x128xf32, #tpu.memory_space<any>>) target(%220 : memref<1x128xf32, #tpu.memory_space<vmem>>) target_semaphore(%222 : memref<!tpu.dma_semaphore, #tpu.memory_space<semaphore_mem>>)
    %c0_i32_125 = arith.constant 0 : i32
    %c127_i32_126 = arith.constant 127 : i32
    %223 = arith.maxsi %c0_i32_125, %66 : i32
    %224 = arith.minsi %c127_i32_126, %223 : i32
    %c21_i32_127 = arith.constant 21 : i32
    %c0_i32_128 = arith.constant 0 : i32
    %225 = tpu.memref_slice %arg2[%224, %c0_i32_128] : memref<128x128xf32, #tpu.memory_space<any>> -> memref<1x128xf32, #tpu.memory_space<any>>
    %c21_i32_129 = arith.constant 21 : i32
    %c0_i32_130 = arith.constant 0 : i32
    %226 = tpu.memref_slice %arg3[%c21_i32_129, %c0_i32_130] : memref<32x128xf32, #tpu.memory_space<vmem>> -> memref<1x128xf32, #tpu.memory_space<vmem>>
    %227 = tpu.memref_slice %arg4[%c21_i32_127] : memref<32x!tpu.dma_semaphore, #tpu.memory_space<semaphore_mem>> -> memref<1x!tpu.dma_semaphore, #tpu.memory_space<semaphore_mem>>
    %228 = tpu.memref_squeeze %227 : memref<1x!tpu.dma_semaphore, #tpu.memory_space<semaphore_mem>> -> memref<!tpu.dma_semaphore, #tpu.memory_space<semaphore_mem>>
    tpu.enqueue_dma source(%225 : memref<1x128xf32, #tpu.memory_space<any>>) target(%226 : memref<1x128xf32, #tpu.memory_space<vmem>>) target_semaphore(%228 : memref<!tpu.dma_semaphore, #tpu.memory_space<semaphore_mem>>)
    %c0_i32_131 = arith.constant 0 : i32
    %c127_i32_132 = arith.constant 127 : i32
    %229 = arith.maxsi %c0_i32_131, %69 : i32
    %230 = arith.minsi %c127_i32_132, %229 : i32
    %c22_i32_133 = arith.constant 22 : i32
    %c0_i32_134 = arith.constant 0 : i32
    %231 = tpu.memref_slice %arg2[%230, %c0_i32_134] : memref<128x128xf32, #tpu.memory_space<any>> -> memref<1x128xf32, #tpu.memory_space<any>>
    %c22_i32_135 = arith.constant 22 : i32
    %c0_i32_136 = arith.constant 0 : i32
    %232 = tpu.memref_slice %arg3[%c22_i32_135, %c0_i32_136] : memref<32x128xf32, #tpu.memory_space<vmem>> -> memref<1x128xf32, #tpu.memory_space<vmem>>
    %233 = tpu.memref_slice %arg4[%c22_i32_133] : memref<32x!tpu.dma_semaphore, #tpu.memory_space<semaphore_mem>> -> memref<1x!tpu.dma_semaphore, #tpu.memory_space<semaphore_mem>>
    %234 = tpu.memref_squeeze %233 : memref<1x!tpu.dma_semaphore, #tpu.memory_space<semaphore_mem>> -> memref<!tpu.dma_semaphore, #tpu.memory_space<semaphore_mem>>
    tpu.enqueue_dma source(%231 : memref<1x128xf32, #tpu.memory_space<any>>) target(%232 : memref<1x128xf32, #tpu.memory_space<vmem>>) target_semaphore(%234 : memref<!tpu.dma_semaphore, #tpu.memory_space<semaphore_mem>>)
    %c0_i32_137 = arith.constant 0 : i32
    %c127_i32_138 = arith.constant 127 : i32
    %235 = arith.maxsi %c0_i32_137, %72 : i32
    %236 = arith.minsi %c127_i32_138, %235 : i32
    %c23_i32_139 = arith.constant 23 : i32
    %c0_i32_140 = arith.constant 0 : i32
    %237 = tpu.memref_slice %arg2[%236, %c0_i32_140] : memref<128x128xf32, #tpu.memory_space<any>> -> memref<1x128xf32, #tpu.memory_space<any>>
    %c23_i32_141 = arith.constant 23 : i32
    %c0_i32_142 = arith.constant 0 : i32
    %238 = tpu.memref_slice %arg3[%c23_i32_141, %c0_i32_142] : memref<32x128xf32, #tpu.memory_space<vmem>> -> memref<1x128xf32, #tpu.memory_space<vmem>>
    %239 = tpu.memref_slice %arg4[%c23_i32_139] : memref<32x!tpu.dma_semaphore, #tpu.memory_space<semaphore_mem>> -> memref<1x!tpu.dma_semaphore, #tpu.memory_space<semaphore_mem>>
    %240 = tpu.memref_squeeze %239 : memref<1x!tpu.dma_semaphore, #tpu.memory_space<semaphore_mem>> -> memref<!tpu.dma_semaphore, #tpu.memory_space<semaphore_mem>>
    tpu.enqueue_dma source(%237 : memref<1x128xf32, #tpu.memory_space<any>>) target(%238 : memref<1x128xf32, #tpu.memory_space<vmem>>) target_semaphore(%240 : memref<!tpu.dma_semaphore, #tpu.memory_space<semaphore_mem>>)
    %c0_i32_143 = arith.constant 0 : i32
    %c127_i32_144 = arith.constant 127 : i32
    %241 = arith.maxsi %c0_i32_143, %75 : i32
    %242 = arith.minsi %c127_i32_144, %241 : i32
    %c24_i32_145 = arith.constant 24 : i32
    %c0_i32_146 = arith.constant 0 : i32
    %243 = tpu.memref_slice %arg2[%242, %c0_i32_146] : memref<128x128xf32, #tpu.memory_space<any>> -> memref<1x128xf32, #tpu.memory_space<any>>
    %c24_i32_147 = arith.constant 24 : i32
    %c0_i32_148 = arith.constant 0 : i32
    %244 = tpu.memref_slice %arg3[%c24_i32_147, %c0_i32_148] : memref<32x128xf32, #tpu.memory_space<vmem>> -> memref<1x128xf32, #tpu.memory_space<vmem>>
    %245 = tpu.memref_slice %arg4[%c24_i32_145] : memref<32x!tpu.dma_semaphore, #tpu.memory_space<semaphore_mem>> -> memref<1x!tpu.dma_semaphore, #tpu.memory_space<semaphore_mem>>
    %246 = tpu.memref_squeeze %245 : memref<1x!tpu.dma_semaphore, #tpu.memory_space<semaphore_mem>> -> memref<!tpu.dma_semaphore, #tpu.memory_space<semaphore_mem>>
    tpu.enqueue_dma source(%243 : memref<1x128xf32, #tpu.memory_space<any>>) target(%244 : memref<1x128xf32, #tpu.memory_space<vmem>>) target_semaphore(%246 : memref<!tpu.dma_semaphore, #tpu.memory_space<semaphore_mem>>)
    %c0_i32_149 = arith.constant 0 : i32
    %c127_i32_150 = arith.constant 127 : i32
    %247 = arith.maxsi %c0_i32_149, %78 : i32
    %248 = arith.minsi %c127_i32_150, %247 : i32
    %c25_i32_151 = arith.constant 25 : i32
    %c0_i32_152 = arith.constant 0 : i32
    %249 = tpu.memref_slice %arg2[%248, %c0_i32_152] : memref<128x128xf32, #tpu.memory_space<any>> -> memref<1x128xf32, #tpu.memory_space<any>>
    %c25_i32_153 = arith.constant 25 : i32
    %c0_i32_154 = arith.constant 0 : i32
    %250 = tpu.memref_slice %arg3[%c25_i32_153, %c0_i32_154] : memref<32x128xf32, #tpu.memory_space<vmem>> -> memref<1x128xf32, #tpu.memory_space<vmem>>
    %251 = tpu.memref_slice %arg4[%c25_i32_151] : memref<32x!tpu.dma_semaphore, #tpu.memory_space<semaphore_mem>> -> memref<1x!tpu.dma_semaphore, #tpu.memory_space<semaphore_mem>>
    %252 = tpu.memref_squeeze %251 : memref<1x!tpu.dma_semaphore, #tpu.memory_space<semaphore_mem>> -> memref<!tpu.dma_semaphore, #tpu.memory_space<semaphore_mem>>
    tpu.enqueue_dma source(%249 : memref<1x128xf32, #tpu.memory_space<any>>) target(%250 : memref<1x128xf32, #tpu.memory_space<vmem>>) target_semaphore(%252 : memref<!tpu.dma_semaphore, #tpu.memory_space<semaphore_mem>>)
    %c0_i32_155 = arith.constant 0 : i32
    %c127_i32_156 = arith.constant 127 : i32
    %253 = arith.maxsi %c0_i32_155, %81 : i32
    %254 = arith.minsi %c127_i32_156, %253 : i32
    %c26_i32_157 = arith.constant 26 : i32
    %c0_i32_158 = arith.constant 0 : i32
    %255 = tpu.memref_slice %arg2[%254, %c0_i32_158] : memref<128x128xf32, #tpu.memory_space<any>> -> memref<1x128xf32, #tpu.memory_space<any>>
    %c26_i32_159 = arith.constant 26 : i32
    %c0_i32_160 = arith.constant 0 : i32
    %256 = tpu.memref_slice %arg3[%c26_i32_159, %c0_i32_160] : memref<32x128xf32, #tpu.memory_space<vmem>> -> memref<1x128xf32, #tpu.memory_space<vmem>>
    %257 = tpu.memref_slice %arg4[%c26_i32_157] : memref<32x!tpu.dma_semaphore, #tpu.memory_space<semaphore_mem>> -> memref<1x!tpu.dma_semaphore, #tpu.memory_space<semaphore_mem>>
    %258 = tpu.memref_squeeze %257 : memref<1x!tpu.dma_semaphore, #tpu.memory_space<semaphore_mem>> -> memref<!tpu.dma_semaphore, #tpu.memory_space<semaphore_mem>>
    tpu.enqueue_dma source(%255 : memref<1x128xf32, #tpu.memory_space<any>>) target(%256 : memref<1x128xf32, #tpu.memory_space<vmem>>) target_semaphore(%258 : memref<!tpu.dma_semaphore, #tpu.memory_space<semaphore_mem>>)
    %c0_i32_161 = arith.constant 0 : i32
    %c127_i32_162 = arith.constant 127 : i32
    %259 = arith.maxsi %c0_i32_161, %84 : i32
    %260 = arith.minsi %c127_i32_162, %259 : i32
    %c27_i32_163 = arith.constant 27 : i32
    %c0_i32_164 = arith.constant 0 : i32
    %261 = tpu.memref_slice %arg2[%260, %c0_i32_164] : memref<128x128xf32, #tpu.memory_space<any>> -> memref<1x128xf32, #tpu.memory_space<any>>
    %c27_i32_165 = arith.constant 27 : i32
    %c0_i32_166 = arith.constant 0 : i32
    %262 = tpu.memref_slice %arg3[%c27_i32_165, %c0_i32_166] : memref<32x128xf32, #tpu.memory_space<vmem>> -> memref<1x128xf32, #tpu.memory_space<vmem>>
    %263 = tpu.memref_slice %arg4[%c27_i32_163] : memref<32x!tpu.dma_semaphore, #tpu.memory_space<semaphore_mem>> -> memref<1x!tpu.dma_semaphore, #tpu.memory_space<semaphore_mem>>
    %264 = tpu.memref_squeeze %263 : memref<1x!tpu.dma_semaphore, #tpu.memory_space<semaphore_mem>> -> memref<!tpu.dma_semaphore, #tpu.memory_space<semaphore_mem>>
    tpu.enqueue_dma source(%261 : memref<1x128xf32, #tpu.memory_space<any>>) target(%262 : memref<1x128xf32, #tpu.memory_space<vmem>>) target_semaphore(%264 : memref<!tpu.dma_semaphore, #tpu.memory_space<semaphore_mem>>)
    %c0_i32_167 = arith.constant 0 : i32
    %c127_i32_168 = arith.constant 127 : i32
    %265 = arith.maxsi %c0_i32_167, %87 : i32
    %266 = arith.minsi %c127_i32_168, %265 : i32
    %c28_i32_169 = arith.constant 28 : i32
    %c0_i32_170 = arith.constant 0 : i32
    %267 = tpu.memref_slice %arg2[%266, %c0_i32_170] : memref<128x128xf32, #tpu.memory_space<any>> -> memref<1x128xf32, #tpu.memory_space<any>>
    %c28_i32_171 = arith.constant 28 : i32
    %c0_i32_172 = arith.constant 0 : i32
    %268 = tpu.memref_slice %arg3[%c28_i32_171, %c0_i32_172] : memref<32x128xf32, #tpu.memory_space<vmem>> -> memref<1x128xf32, #tpu.memory_space<vmem>>
    %269 = tpu.memref_slice %arg4[%c28_i32_169] : memref<32x!tpu.dma_semaphore, #tpu.memory_space<semaphore_mem>> -> memref<1x!tpu.dma_semaphore, #tpu.memory_space<semaphore_mem>>
    %270 = tpu.memref_squeeze %269 : memref<1x!tpu.dma_semaphore, #tpu.memory_space<semaphore_mem>> -> memref<!tpu.dma_semaphore, #tpu.memory_space<semaphore_mem>>
    tpu.enqueue_dma source(%267 : memref<1x128xf32, #tpu.memory_space<any>>) target(%268 : memref<1x128xf32, #tpu.memory_space<vmem>>) target_semaphore(%270 : memref<!tpu.dma_semaphore, #tpu.memory_space<semaphore_mem>>)
    %c0_i32_173 = arith.constant 0 : i32
    %c127_i32_174 = arith.constant 127 : i32
    %271 = arith.maxsi %c0_i32_173, %90 : i32
    %272 = arith.minsi %c127_i32_174, %271 : i32
    %c29_i32_175 = arith.constant 29 : i32
    %c0_i32_176 = arith.constant 0 : i32
    %273 = tpu.memref_slice %arg2[%272, %c0_i32_176] : memref<128x128xf32, #tpu.memory_space<any>> -> memref<1x128xf32, #tpu.memory_space<any>>
    %c29_i32_177 = arith.constant 29 : i32
    %c0_i32_178 = arith.constant 0 : i32
    %274 = tpu.memref_slice %arg3[%c29_i32_177, %c0_i32_178] : memref<32x128xf32, #tpu.memory_space<vmem>> -> memref<1x128xf32, #tpu.memory_space<vmem>>
    %275 = tpu.memref_slice %arg4[%c29_i32_175] : memref<32x!tpu.dma_semaphore, #tpu.memory_space<semaphore_mem>> -> memref<1x!tpu.dma_semaphore, #tpu.memory_space<semaphore_mem>>
    %276 = tpu.memref_squeeze %275 : memref<1x!tpu.dma_semaphore, #tpu.memory_space<semaphore_mem>> -> memref<!tpu.dma_semaphore, #tpu.memory_space<semaphore_mem>>
    tpu.enqueue_dma source(%273 : memref<1x128xf32, #tpu.memory_space<any>>) target(%274 : memref<1x128xf32, #tpu.memory_space<vmem>>) target_semaphore(%276 : memref<!tpu.dma_semaphore, #tpu.memory_space<semaphore_mem>>)
    %c0_i32_179 = arith.constant 0 : i32
    %c127_i32_180 = arith.constant 127 : i32
    %277 = arith.maxsi %c0_i32_179, %93 : i32
    %278 = arith.minsi %c127_i32_180, %277 : i32
    %c30_i32_181 = arith.constant 30 : i32
    %c0_i32_182 = arith.constant 0 : i32
    %279 = tpu.memref_slice %arg2[%278, %c0_i32_182] : memref<128x128xf32, #tpu.memory_space<any>> -> memref<1x128xf32, #tpu.memory_space<any>>
    %c30_i32_183 = arith.constant 30 : i32
    %c0_i32_184 = arith.constant 0 : i32
    %280 = tpu.memref_slice %arg3[%c30_i32_183, %c0_i32_184] : memref<32x128xf32, #tpu.memory_space<vmem>> -> memref<1x128xf32, #tpu.memory_space<vmem>>
    %281 = tpu.memref_slice %arg4[%c30_i32_181] : memref<32x!tpu.dma_semaphore, #tpu.memory_space<semaphore_mem>> -> memref<1x!tpu.dma_semaphore, #tpu.memory_space<semaphore_mem>>
    %282 = tpu.memref_squeeze %281 : memref<1x!tpu.dma_semaphore, #tpu.memory_space<semaphore_mem>> -> memref<!tpu.dma_semaphore, #tpu.memory_space<semaphore_mem>>
    tpu.enqueue_dma source(%279 : memref<1x128xf32, #tpu.memory_space<any>>) target(%280 : memref<1x128xf32, #tpu.memory_space<vmem>>) target_semaphore(%282 : memref<!tpu.dma_semaphore, #tpu.memory_space<semaphore_mem>>)
    %c0_i32_185 = arith.constant 0 : i32
    %c127_i32_186 = arith.constant 127 : i32
    %283 = arith.maxsi %c0_i32_185, %96 : i32
    %284 = arith.minsi %c127_i32_186, %283 : i32
    %c31_i32_187 = arith.constant 31 : i32
    %c0_i32_188 = arith.constant 0 : i32
    %285 = tpu.memref_slice %arg2[%284, %c0_i32_188] : memref<128x128xf32, #tpu.memory_space<any>> -> memref<1x128xf32, #tpu.memory_space<any>>
    %c31_i32_189 = arith.constant 31 : i32
    %c0_i32_190 = arith.constant 0 : i32
    %286 = tpu.memref_slice %arg3[%c31_i32_189, %c0_i32_190] : memref<32x128xf32, #tpu.memory_space<vmem>> -> memref<1x128xf32, #tpu.memory_space<vmem>>
    %287 = tpu.memref_slice %arg4[%c31_i32_187] : memref<32x!tpu.dma_semaphore, #tpu.memory_space<semaphore_mem>> -> memref<1x!tpu.dma_semaphore, #tpu.memory_space<semaphore_mem>>
    %288 = tpu.memref_squeeze %287 : memref<1x!tpu.dma_semaphore, #tpu.memory_space<semaphore_mem>> -> memref<!tpu.dma_semaphore, #tpu.memory_space<semaphore_mem>>
    tpu.enqueue_dma source(%285 : memref<1x128xf32, #tpu.memory_space<any>>) target(%286 : memref<1x128xf32, #tpu.memory_space<vmem>>) target_semaphore(%288 : memref<!tpu.dma_semaphore, #tpu.memory_space<semaphore_mem>>)
    %c0_i32_191 = arith.constant 0 : i32
    %c0_i32_192 = arith.constant 0 : i32
    %289 = tpu.memref_slice %arg2[%98, %c0_i32_192] : memref<128x128xf32, #tpu.memory_space<any>> -> memref<1x128xf32, #tpu.memory_space<any>>
    %c0_i32_193 = arith.constant 0 : i32
    %c0_i32_194 = arith.constant 0 : i32
    %290 = tpu.memref_slice %arg3[%c0_i32_193, %c0_i32_194] : memref<32x128xf32, #tpu.memory_space<vmem>> -> memref<1x128xf32, #tpu.memory_space<vmem>>
    %291 = tpu.memref_slice %arg4[%c0_i32_191] : memref<32x!tpu.dma_semaphore, #tpu.memory_space<semaphore_mem>> -> memref<1x!tpu.dma_semaphore, #tpu.memory_space<semaphore_mem>>
    %292 = tpu.memref_squeeze %291 : memref<1x!tpu.dma_semaphore, #tpu.memory_space<semaphore_mem>> -> memref<!tpu.dma_semaphore, #tpu.memory_space<semaphore_mem>>
    tpu.wait_dma2 semaphore(%292 : memref<!tpu.dma_semaphore, #tpu.memory_space<semaphore_mem>>) src(%289 : memref<1x128xf32, #tpu.memory_space<any>>) dst(%290 : memref<1x128xf32, #tpu.memory_space<vmem>>)
    %c1_i32_195 = arith.constant 1 : i32
    %c0_i32_196 = arith.constant 0 : i32
    %293 = tpu.memref_slice %arg2[%104, %c0_i32_196] : memref<128x128xf32, #tpu.memory_space<any>> -> memref<1x128xf32, #tpu.memory_space<any>>
    %c1_i32_197 = arith.constant 1 : i32
    %c0_i32_198 = arith.constant 0 : i32
    %294 = tpu.memref_slice %arg3[%c1_i32_197, %c0_i32_198] : memref<32x128xf32, #tpu.memory_space<vmem>> -> memref<1x128xf32, #tpu.memory_space<vmem>>
    %295 = tpu.memref_slice %arg4[%c1_i32_195] : memref<32x!tpu.dma_semaphore, #tpu.memory_space<semaphore_mem>> -> memref<1x!tpu.dma_semaphore, #tpu.memory_space<semaphore_mem>>
    %296 = tpu.memref_squeeze %295 : memref<1x!tpu.dma_semaphore, #tpu.memory_space<semaphore_mem>> -> memref<!tpu.dma_semaphore, #tpu.memory_space<semaphore_mem>>
    tpu.wait_dma2 semaphore(%296 : memref<!tpu.dma_semaphore, #tpu.memory_space<semaphore_mem>>) src(%293 : memref<1x128xf32, #tpu.memory_space<any>>) dst(%294 : memref<1x128xf32, #tpu.memory_space<vmem>>)
    %c2_i32_199 = arith.constant 2 : i32
    %c0_i32_200 = arith.constant 0 : i32
    %297 = tpu.memref_slice %arg2[%110, %c0_i32_200] : memref<128x128xf32, #tpu.memory_space<any>> -> memref<1x128xf32, #tpu.memory_space<any>>
    %c2_i32_201 = arith.constant 2 : i32
    %c0_i32_202 = arith.constant 0 : i32
    %298 = tpu.memref_slice %arg3[%c2_i32_201, %c0_i32_202] : memref<32x128xf32, #tpu.memory_space<vmem>> -> memref<1x128xf32, #tpu.memory_space<vmem>>
    %299 = tpu.memref_slice %arg4[%c2_i32_199] : memref<32x!tpu.dma_semaphore, #tpu.memory_space<semaphore_mem>> -> memref<1x!tpu.dma_semaphore, #tpu.memory_space<semaphore_mem>>
    %300 = tpu.memref_squeeze %299 : memref<1x!tpu.dma_semaphore, #tpu.memory_space<semaphore_mem>> -> memref<!tpu.dma_semaphore, #tpu.memory_space<semaphore_mem>>
    tpu.wait_dma2 semaphore(%300 : memref<!tpu.dma_semaphore, #tpu.memory_space<semaphore_mem>>) src(%297 : memref<1x128xf32, #tpu.memory_space<any>>) dst(%298 : memref<1x128xf32, #tpu.memory_space<vmem>>)
    %c3_i32_203 = arith.constant 3 : i32
    %c0_i32_204 = arith.constant 0 : i32
    %301 = tpu.memref_slice %arg2[%116, %c0_i32_204] : memref<128x128xf32, #tpu.memory_space<any>> -> memref<1x128xf32, #tpu.memory_space<any>>
    %c3_i32_205 = arith.constant 3 : i32
    %c0_i32_206 = arith.constant 0 : i32
    %302 = tpu.memref_slice %arg3[%c3_i32_205, %c0_i32_206] : memref<32x128xf32, #tpu.memory_space<vmem>> -> memref<1x128xf32, #tpu.memory_space<vmem>>
    %303 = tpu.memref_slice %arg4[%c3_i32_203] : memref<32x!tpu.dma_semaphore, #tpu.memory_space<semaphore_mem>> -> memref<1x!tpu.dma_semaphore, #tpu.memory_space<semaphore_mem>>
    %304 = tpu.memref_squeeze %303 : memref<1x!tpu.dma_semaphore, #tpu.memory_space<semaphore_mem>> -> memref<!tpu.dma_semaphore, #tpu.memory_space<semaphore_mem>>
    tpu.wait_dma2 semaphore(%304 : memref<!tpu.dma_semaphore, #tpu.memory_space<semaphore_mem>>) src(%301 : memref<1x128xf32, #tpu.memory_space<any>>) dst(%302 : memref<1x128xf32, #tpu.memory_space<vmem>>)
    %c4_i32_207 = arith.constant 4 : i32
    %c0_i32_208 = arith.constant 0 : i32
    %305 = tpu.memref_slice %arg2[%122, %c0_i32_208] : memref<128x128xf32, #tpu.memory_space<any>> -> memref<1x128xf32, #tpu.memory_space<any>>
    %c4_i32_209 = arith.constant 4 : i32
    %c0_i32_210 = arith.constant 0 : i32
    %306 = tpu.memref_slice %arg3[%c4_i32_209, %c0_i32_210] : memref<32x128xf32, #tpu.memory_space<vmem>> -> memref<1x128xf32, #tpu.memory_space<vmem>>
    %307 = tpu.memref_slice %arg4[%c4_i32_207] : memref<32x!tpu.dma_semaphore, #tpu.memory_space<semaphore_mem>> -> memref<1x!tpu.dma_semaphore, #tpu.memory_space<semaphore_mem>>
    %308 = tpu.memref_squeeze %307 : memref<1x!tpu.dma_semaphore, #tpu.memory_space<semaphore_mem>> -> memref<!tpu.dma_semaphore, #tpu.memory_space<semaphore_mem>>
    tpu.wait_dma2 semaphore(%308 : memref<!tpu.dma_semaphore, #tpu.memory_space<semaphore_mem>>) src(%305 : memref<1x128xf32, #tpu.memory_space<any>>) dst(%306 : memref<1x128xf32, #tpu.memory_space<vmem>>)
    %c5_i32_211 = arith.constant 5 : i32
    %c0_i32_212 = arith.constant 0 : i32
    %309 = tpu.memref_slice %arg2[%128, %c0_i32_212] : memref<128x128xf32, #tpu.memory_space<any>> -> memref<1x128xf32, #tpu.memory_space<any>>
    %c5_i32_213 = arith.constant 5 : i32
    %c0_i32_214 = arith.constant 0 : i32
    %310 = tpu.memref_slice %arg3[%c5_i32_213, %c0_i32_214] : memref<32x128xf32, #tpu.memory_space<vmem>> -> memref<1x128xf32, #tpu.memory_space<vmem>>
    %311 = tpu.memref_slice %arg4[%c5_i32_211] : memref<32x!tpu.dma_semaphore, #tpu.memory_space<semaphore_mem>> -> memref<1x!tpu.dma_semaphore, #tpu.memory_space<semaphore_mem>>
    %312 = tpu.memref_squeeze %311 : memref<1x!tpu.dma_semaphore, #tpu.memory_space<semaphore_mem>> -> memref<!tpu.dma_semaphore, #tpu.memory_space<semaphore_mem>>
    tpu.wait_dma2 semaphore(%312 : memref<!tpu.dma_semaphore, #tpu.memory_space<semaphore_mem>>) src(%309 : memref<1x128xf32, #tpu.memory_space<any>>) dst(%310 : memref<1x128xf32, #tpu.memory_space<vmem>>)
    %c6_i32_215 = arith.constant 6 : i32
    %c0_i32_216 = arith.constant 0 : i32
    %313 = tpu.memref_slice %arg2[%134, %c0_i32_216] : memref<128x128xf32, #tpu.memory_space<any>> -> memref<1x128xf32, #tpu.memory_space<any>>
    %c6_i32_217 = arith.constant 6 : i32
    %c0_i32_218 = arith.constant 0 : i32
    %314 = tpu.memref_slice %arg3[%c6_i32_217, %c0_i32_218] : memref<32x128xf32, #tpu.memory_space<vmem>> -> memref<1x128xf32, #tpu.memory_space<vmem>>
    %315 = tpu.memref_slice %arg4[%c6_i32_215] : memref<32x!tpu.dma_semaphore, #tpu.memory_space<semaphore_mem>> -> memref<1x!tpu.dma_semaphore, #tpu.memory_space<semaphore_mem>>
    %316 = tpu.memref_squeeze %315 : memref<1x!tpu.dma_semaphore, #tpu.memory_space<semaphore_mem>> -> memref<!tpu.dma_semaphore, #tpu.memory_space<semaphore_mem>>
    tpu.wait_dma2 semaphore(%316 : memref<!tpu.dma_semaphore, #tpu.memory_space<semaphore_mem>>) src(%313 : memref<1x128xf32, #tpu.memory_space<any>>) dst(%314 : memref<1x128xf32, #tpu.memory_space<vmem>>)
    %c7_i32_219 = arith.constant 7 : i32
    %c0_i32_220 = arith.constant 0 : i32
    %317 = tpu.memref_slice %arg2[%140, %c0_i32_220] : memref<128x128xf32, #tpu.memory_space<any>> -> memref<1x128xf32, #tpu.memory_space<any>>
    %c7_i32_221 = arith.constant 7 : i32
    %c0_i32_222 = arith.constant 0 : i32
    %318 = tpu.memref_slice %arg3[%c7_i32_221, %c0_i32_222] : memref<32x128xf32, #tpu.memory_space<vmem>> -> memref<1x128xf32, #tpu.memory_space<vmem>>
    %319 = tpu.memref_slice %arg4[%c7_i32_219] : memref<32x!tpu.dma_semaphore, #tpu.memory_space<semaphore_mem>> -> memref<1x!tpu.dma_semaphore, #tpu.memory_space<semaphore_mem>>
    %320 = tpu.memref_squeeze %319 : memref<1x!tpu.dma_semaphore, #tpu.memory_space<semaphore_mem>> -> memref<!tpu.dma_semaphore, #tpu.memory_space<semaphore_mem>>
    tpu.wait_dma2 semaphore(%320 : memref<!tpu.dma_semaphore, #tpu.memory_space<semaphore_mem>>) src(%317 : memref<1x128xf32, #tpu.memory_space<any>>) dst(%318 : memref<1x128xf32, #tpu.memory_space<vmem>>)
    %c8_i32_223 = arith.constant 8 : i32
    %c0_i32_224 = arith.constant 0 : i32
    %321 = tpu.memref_slice %arg2[%146, %c0_i32_224] : memref<128x128xf32, #tpu.memory_space<any>> -> memref<1x128xf32, #tpu.memory_space<any>>
    %c8_i32_225 = arith.constant 8 : i32
    %c0_i32_226 = arith.constant 0 : i32
    %322 = tpu.memref_slice %arg3[%c8_i32_225, %c0_i32_226] : memref<32x128xf32, #tpu.memory_space<vmem>> -> memref<1x128xf32, #tpu.memory_space<vmem>>
    %323 = tpu.memref_slice %arg4[%c8_i32_223] : memref<32x!tpu.dma_semaphore, #tpu.memory_space<semaphore_mem>> -> memref<1x!tpu.dma_semaphore, #tpu.memory_space<semaphore_mem>>
    %324 = tpu.memref_squeeze %323 : memref<1x!tpu.dma_semaphore, #tpu.memory_space<semaphore_mem>> -> memref<!tpu.dma_semaphore, #tpu.memory_space<semaphore_mem>>
    tpu.wait_dma2 semaphore(%324 : memref<!tpu.dma_semaphore, #tpu.memory_space<semaphore_mem>>) src(%321 : memref<1x128xf32, #tpu.memory_space<any>>) dst(%322 : memref<1x128xf32, #tpu.memory_space<vmem>>)
    %c9_i32_227 = arith.constant 9 : i32
    %c0_i32_228 = arith.constant 0 : i32
    %325 = tpu.memref_slice %arg2[%152, %c0_i32_228] : memref<128x128xf32, #tpu.memory_space<any>> -> memref<1x128xf32, #tpu.memory_space<any>>
    %c9_i32_229 = arith.constant 9 : i32
    %c0_i32_230 = arith.constant 0 : i32
    %326 = tpu.memref_slice %arg3[%c9_i32_229, %c0_i32_230] : memref<32x128xf32, #tpu.memory_space<vmem>> -> memref<1x128xf32, #tpu.memory_space<vmem>>
    %327 = tpu.memref_slice %arg4[%c9_i32_227] : memref<32x!tpu.dma_semaphore, #tpu.memory_space<semaphore_mem>> -> memref<1x!tpu.dma_semaphore, #tpu.memory_space<semaphore_mem>>
    %328 = tpu.memref_squeeze %327 : memref<1x!tpu.dma_semaphore, #tpu.memory_space<semaphore_mem>> -> memref<!tpu.dma_semaphore, #tpu.memory_space<semaphore_mem>>
    tpu.wait_dma2 semaphore(%328 : memref<!tpu.dma_semaphore, #tpu.memory_space<semaphore_mem>>) src(%325 : memref<1x128xf32, #tpu.memory_space<any>>) dst(%326 : memref<1x128xf32, #tpu.memory_space<vmem>>)
    %c10_i32_231 = arith.constant 10 : i32
    %c0_i32_232 = arith.constant 0 : i32
    %329 = tpu.memref_slice %arg2[%158, %c0_i32_232] : memref<128x128xf32, #tpu.memory_space<any>> -> memref<1x128xf32, #tpu.memory_space<any>>
    %c10_i32_233 = arith.constant 10 : i32
    %c0_i32_234 = arith.constant 0 : i32
    %330 = tpu.memref_slice %arg3[%c10_i32_233, %c0_i32_234] : memref<32x128xf32, #tpu.memory_space<vmem>> -> memref<1x128xf32, #tpu.memory_space<vmem>>
    %331 = tpu.memref_slice %arg4[%c10_i32_231] : memref<32x!tpu.dma_semaphore, #tpu.memory_space<semaphore_mem>> -> memref<1x!tpu.dma_semaphore, #tpu.memory_space<semaphore_mem>>
    %332 = tpu.memref_squeeze %331 : memref<1x!tpu.dma_semaphore, #tpu.memory_space<semaphore_mem>> -> memref<!tpu.dma_semaphore, #tpu.memory_space<semaphore_mem>>
    tpu.wait_dma2 semaphore(%332 : memref<!tpu.dma_semaphore, #tpu.memory_space<semaphore_mem>>) src(%329 : memref<1x128xf32, #tpu.memory_space<any>>) dst(%330 : memref<1x128xf32, #tpu.memory_space<vmem>>)
    %c11_i32_235 = arith.constant 11 : i32
    %c0_i32_236 = arith.constant 0 : i32
    %333 = tpu.memref_slice %arg2[%164, %c0_i32_236] : memref<128x128xf32, #tpu.memory_space<any>> -> memref<1x128xf32, #tpu.memory_space<any>>
    %c11_i32_237 = arith.constant 11 : i32
    %c0_i32_238 = arith.constant 0 : i32
    %334 = tpu.memref_slice %arg3[%c11_i32_237, %c0_i32_238] : memref<32x128xf32, #tpu.memory_space<vmem>> -> memref<1x128xf32, #tpu.memory_space<vmem>>
    %335 = tpu.memref_slice %arg4[%c11_i32_235] : memref<32x!tpu.dma_semaphore, #tpu.memory_space<semaphore_mem>> -> memref<1x!tpu.dma_semaphore, #tpu.memory_space<semaphore_mem>>
    %336 = tpu.memref_squeeze %335 : memref<1x!tpu.dma_semaphore, #tpu.memory_space<semaphore_mem>> -> memref<!tpu.dma_semaphore, #tpu.memory_space<semaphore_mem>>
    tpu.wait_dma2 semaphore(%336 : memref<!tpu.dma_semaphore, #tpu.memory_space<semaphore_mem>>) src(%333 : memref<1x128xf32, #tpu.memory_space<any>>) dst(%334 : memref<1x128xf32, #tpu.memory_space<vmem>>)
    %c12_i32_239 = arith.constant 12 : i32
    %c0_i32_240 = arith.constant 0 : i32
    %337 = tpu.memref_slice %arg2[%170, %c0_i32_240] : memref<128x128xf32, #tpu.memory_space<any>> -> memref<1x128xf32, #tpu.memory_space<any>>
    %c12_i32_241 = arith.constant 12 : i32
    %c0_i32_242 = arith.constant 0 : i32
    %338 = tpu.memref_slice %arg3[%c12_i32_241, %c0_i32_242] : memref<32x128xf32, #tpu.memory_space<vmem>> -> memref<1x128xf32, #tpu.memory_space<vmem>>
    %339 = tpu.memref_slice %arg4[%c12_i32_239] : memref<32x!tpu.dma_semaphore, #tpu.memory_space<semaphore_mem>> -> memref<1x!tpu.dma_semaphore, #tpu.memory_space<semaphore_mem>>
    %340 = tpu.memref_squeeze %339 : memref<1x!tpu.dma_semaphore, #tpu.memory_space<semaphore_mem>> -> memref<!tpu.dma_semaphore, #tpu.memory_space<semaphore_mem>>
    tpu.wait_dma2 semaphore(%340 : memref<!tpu.dma_semaphore, #tpu.memory_space<semaphore_mem>>) src(%337 : memref<1x128xf32, #tpu.memory_space<any>>) dst(%338 : memref<1x128xf32, #tpu.memory_space<vmem>>)
    %c13_i32_243 = arith.constant 13 : i32
    %c0_i32_244 = arith.constant 0 : i32
    %341 = tpu.memref_slice %arg2[%176, %c0_i32_244] : memref<128x128xf32, #tpu.memory_space<any>> -> memref<1x128xf32, #tpu.memory_space<any>>
    %c13_i32_245 = arith.constant 13 : i32
    %c0_i32_246 = arith.constant 0 : i32
    %342 = tpu.memref_slice %arg3[%c13_i32_245, %c0_i32_246] : memref<32x128xf32, #tpu.memory_space<vmem>> -> memref<1x128xf32, #tpu.memory_space<vmem>>
    %343 = tpu.memref_slice %arg4[%c13_i32_243] : memref<32x!tpu.dma_semaphore, #tpu.memory_space<semaphore_mem>> -> memref<1x!tpu.dma_semaphore, #tpu.memory_space<semaphore_mem>>
    %344 = tpu.memref_squeeze %343 : memref<1x!tpu.dma_semaphore, #tpu.memory_space<semaphore_mem>> -> memref<!tpu.dma_semaphore, #tpu.memory_space<semaphore_mem>>
    tpu.wait_dma2 semaphore(%344 : memref<!tpu.dma_semaphore, #tpu.memory_space<semaphore_mem>>) src(%341 : memref<1x128xf32, #tpu.memory_space<any>>) dst(%342 : memref<1x128xf32, #tpu.memory_space<vmem>>)
    %c14_i32_247 = arith.constant 14 : i32
    %c0_i32_248 = arith.constant 0 : i32
    %345 = tpu.memref_slice %arg2[%182, %c0_i32_248] : memref<128x128xf32, #tpu.memory_space<any>> -> memref<1x128xf32, #tpu.memory_space<any>>
    %c14_i32_249 = arith.constant 14 : i32
    %c0_i32_250 = arith.constant 0 : i32
    %346 = tpu.memref_slice %arg3[%c14_i32_249, %c0_i32_250] : memref<32x128xf32, #tpu.memory_space<vmem>> -> memref<1x128xf32, #tpu.memory_space<vmem>>
    %347 = tpu.memref_slice %arg4[%c14_i32_247] : memref<32x!tpu.dma_semaphore, #tpu.memory_space<semaphore_mem>> -> memref<1x!tpu.dma_semaphore, #tpu.memory_space<semaphore_mem>>
    %348 = tpu.memref_squeeze %347 : memref<1x!tpu.dma_semaphore, #tpu.memory_space<semaphore_mem>> -> memref<!tpu.dma_semaphore, #tpu.memory_space<semaphore_mem>>
    tpu.wait_dma2 semaphore(%348 : memref<!tpu.dma_semaphore, #tpu.memory_space<semaphore_mem>>) src(%345 : memref<1x128xf32, #tpu.memory_space<any>>) dst(%346 : memref<1x128xf32, #tpu.memory_space<vmem>>)
    %c15_i32_251 = arith.constant 15 : i32
    %c0_i32_252 = arith.constant 0 : i32
    %349 = tpu.memref_slice %arg2[%188, %c0_i32_252] : memref<128x128xf32, #tpu.memory_space<any>> -> memref<1x128xf32, #tpu.memory_space<any>>
    %c15_i32_253 = arith.constant 15 : i32
    %c0_i32_254 = arith.constant 0 : i32
    %350 = tpu.memref_slice %arg3[%c15_i32_253, %c0_i32_254] : memref<32x128xf32, #tpu.memory_space<vmem>> -> memref<1x128xf32, #tpu.memory_space<vmem>>
    %351 = tpu.memref_slice %arg4[%c15_i32_251] : memref<32x!tpu.dma_semaphore, #tpu.memory_space<semaphore_mem>> -> memref<1x!tpu.dma_semaphore, #tpu.memory_space<semaphore_mem>>
    %352 = tpu.memref_squeeze %351 : memref<1x!tpu.dma_semaphore, #tpu.memory_space<semaphore_mem>> -> memref<!tpu.dma_semaphore, #tpu.memory_space<semaphore_mem>>
    tpu.wait_dma2 semaphore(%352 : memref<!tpu.dma_semaphore, #tpu.memory_space<semaphore_mem>>) src(%349 : memref<1x128xf32, #tpu.memory_space<any>>) dst(%350 : memref<1x128xf32, #tpu.memory_space<vmem>>)
    %c16_i32_255 = arith.constant 16 : i32
    %c0_i32_256 = arith.constant 0 : i32
    %353 = tpu.memref_slice %arg2[%194, %c0_i32_256] : memref<128x128xf32, #tpu.memory_space<any>> -> memref<1x128xf32, #tpu.memory_space<any>>
    %c16_i32_257 = arith.constant 16 : i32
    %c0_i32_258 = arith.constant 0 : i32
    %354 = tpu.memref_slice %arg3[%c16_i32_257, %c0_i32_258] : memref<32x128xf32, #tpu.memory_space<vmem>> -> memref<1x128xf32, #tpu.memory_space<vmem>>
    %355 = tpu.memref_slice %arg4[%c16_i32_255] : memref<32x!tpu.dma_semaphore, #tpu.memory_space<semaphore_mem>> -> memref<1x!tpu.dma_semaphore, #tpu.memory_space<semaphore_mem>>
    %356 = tpu.memref_squeeze %355 : memref<1x!tpu.dma_semaphore, #tpu.memory_space<semaphore_mem>> -> memref<!tpu.dma_semaphore, #tpu.memory_space<semaphore_mem>>
    tpu.wait_dma2 semaphore(%356 : memref<!tpu.dma_semaphore, #tpu.memory_space<semaphore_mem>>) src(%353 : memref<1x128xf32, #tpu.memory_space<any>>) dst(%354 : memref<1x128xf32, #tpu.memory_space<vmem>>)
    %c17_i32_259 = arith.constant 17 : i32
    %c0_i32_260 = arith.constant 0 : i32
    %357 = tpu.memref_slice %arg2[%200, %c0_i32_260] : memref<128x128xf32, #tpu.memory_space<any>> -> memref<1x128xf32, #tpu.memory_space<any>>
    %c17_i32_261 = arith.constant 17 : i32
    %c0_i32_262 = arith.constant 0 : i32
    %358 = tpu.memref_slice %arg3[%c17_i32_261, %c0_i32_262] : memref<32x128xf32, #tpu.memory_space<vmem>> -> memref<1x128xf32, #tpu.memory_space<vmem>>
    %359 = tpu.memref_slice %arg4[%c17_i32_259] : memref<32x!tpu.dma_semaphore, #tpu.memory_space<semaphore_mem>> -> memref<1x!tpu.dma_semaphore, #tpu.memory_space<semaphore_mem>>
    %360 = tpu.memref_squeeze %359 : memref<1x!tpu.dma_semaphore, #tpu.memory_space<semaphore_mem>> -> memref<!tpu.dma_semaphore, #tpu.memory_space<semaphore_mem>>
    tpu.wait_dma2 semaphore(%360 : memref<!tpu.dma_semaphore, #tpu.memory_space<semaphore_mem>>) src(%357 : memref<1x128xf32, #tpu.memory_space<any>>) dst(%358 : memref<1x128xf32, #tpu.memory_space<vmem>>)
    %c18_i32_263 = arith.constant 18 : i32
    %c0_i32_264 = arith.constant 0 : i32
    %361 = tpu.memref_slice %arg2[%206, %c0_i32_264] : memref<128x128xf32, #tpu.memory_space<any>> -> memref<1x128xf32, #tpu.memory_space<any>>
    %c18_i32_265 = arith.constant 18 : i32
    %c0_i32_266 = arith.constant 0 : i32
    %362 = tpu.memref_slice %arg3[%c18_i32_265, %c0_i32_266] : memref<32x128xf32, #tpu.memory_space<vmem>> -> memref<1x128xf32, #tpu.memory_space<vmem>>
    %363 = tpu.memref_slice %arg4[%c18_i32_263] : memref<32x!tpu.dma_semaphore, #tpu.memory_space<semaphore_mem>> -> memref<1x!tpu.dma_semaphore, #tpu.memory_space<semaphore_mem>>
    %364 = tpu.memref_squeeze %363 : memref<1x!tpu.dma_semaphore, #tpu.memory_space<semaphore_mem>> -> memref<!tpu.dma_semaphore, #tpu.memory_space<semaphore_mem>>
    tpu.wait_dma2 semaphore(%364 : memref<!tpu.dma_semaphore, #tpu.memory_space<semaphore_mem>>) src(%361 : memref<1x128xf32, #tpu.memory_space<any>>) dst(%362 : memref<1x128xf32, #tpu.memory_space<vmem>>)
    %c19_i32_267 = arith.constant 19 : i32
    %c0_i32_268 = arith.constant 0 : i32
    %365 = tpu.memref_slice %arg2[%212, %c0_i32_268] : memref<128x128xf32, #tpu.memory_space<any>> -> memref<1x128xf32, #tpu.memory_space<any>>
    %c19_i32_269 = arith.constant 19 : i32
    %c0_i32_270 = arith.constant 0 : i32
    %366 = tpu.memref_slice %arg3[%c19_i32_269, %c0_i32_270] : memref<32x128xf32, #tpu.memory_space<vmem>> -> memref<1x128xf32, #tpu.memory_space<vmem>>
    %367 = tpu.memref_slice %arg4[%c19_i32_267] : memref<32x!tpu.dma_semaphore, #tpu.memory_space<semaphore_mem>> -> memref<1x!tpu.dma_semaphore, #tpu.memory_space<semaphore_mem>>
    %368 = tpu.memref_squeeze %367 : memref<1x!tpu.dma_semaphore, #tpu.memory_space<semaphore_mem>> -> memref<!tpu.dma_semaphore, #tpu.memory_space<semaphore_mem>>
    tpu.wait_dma2 semaphore(%368 : memref<!tpu.dma_semaphore, #tpu.memory_space<semaphore_mem>>) src(%365 : memref<1x128xf32, #tpu.memory_space<any>>) dst(%366 : memref<1x128xf32, #tpu.memory_space<vmem>>)
    %c20_i32_271 = arith.constant 20 : i32
    %c0_i32_272 = arith.constant 0 : i32
    %369 = tpu.memref_slice %arg2[%218, %c0_i32_272] : memref<128x128xf32, #tpu.memory_space<any>> -> memref<1x128xf32, #tpu.memory_space<any>>
    %c20_i32_273 = arith.constant 20 : i32
    %c0_i32_274 = arith.constant 0 : i32
    %370 = tpu.memref_slice %arg3[%c20_i32_273, %c0_i32_274] : memref<32x128xf32, #tpu.memory_space<vmem>> -> memref<1x128xf32, #tpu.memory_space<vmem>>
    %371 = tpu.memref_slice %arg4[%c20_i32_271] : memref<32x!tpu.dma_semaphore, #tpu.memory_space<semaphore_mem>> -> memref<1x!tpu.dma_semaphore, #tpu.memory_space<semaphore_mem>>
    %372 = tpu.memref_squeeze %371 : memref<1x!tpu.dma_semaphore, #tpu.memory_space<semaphore_mem>> -> memref<!tpu.dma_semaphore, #tpu.memory_space<semaphore_mem>>
    tpu.wait_dma2 semaphore(%372 : memref<!tpu.dma_semaphore, #tpu.memory_space<semaphore_mem>>) src(%369 : memref<1x128xf32, #tpu.memory_space<any>>) dst(%370 : memref<1x128xf32, #tpu.memory_space<vmem>>)
    %c21_i32_275 = arith.constant 21 : i32
    %c0_i32_276 = arith.constant 0 : i32
    %373 = tpu.memref_slice %arg2[%224, %c0_i32_276] : memref<128x128xf32, #tpu.memory_space<any>> -> memref<1x128xf32, #tpu.memory_space<any>>
    %c21_i32_277 = arith.constant 21 : i32
    %c0_i32_278 = arith.constant 0 : i32
    %374 = tpu.memref_slice %arg3[%c21_i32_277, %c0_i32_278] : memref<32x128xf32, #tpu.memory_space<vmem>> -> memref<1x128xf32, #tpu.memory_space<vmem>>
    %375 = tpu.memref_slice %arg4[%c21_i32_275] : memref<32x!tpu.dma_semaphore, #tpu.memory_space<semaphore_mem>> -> memref<1x!tpu.dma_semaphore, #tpu.memory_space<semaphore_mem>>
    %376 = tpu.memref_squeeze %375 : memref<1x!tpu.dma_semaphore, #tpu.memory_space<semaphore_mem>> -> memref<!tpu.dma_semaphore, #tpu.memory_space<semaphore_mem>>
    tpu.wait_dma2 semaphore(%376 : memref<!tpu.dma_semaphore, #tpu.memory_space<semaphore_mem>>) src(%373 : memref<1x128xf32, #tpu.memory_space<any>>) dst(%374 : memref<1x128xf32, #tpu.memory_space<vmem>>)
    %c22_i32_279 = arith.constant 22 : i32
    %c0_i32_280 = arith.constant 0 : i32
    %377 = tpu.memref_slice %arg2[%230, %c0_i32_280] : memref<128x128xf32, #tpu.memory_space<any>> -> memref<1x128xf32, #tpu.memory_space<any>>
    %c22_i32_281 = arith.constant 22 : i32
    %c0_i32_282 = arith.constant 0 : i32
    %378 = tpu.memref_slice %arg3[%c22_i32_281, %c0_i32_282] : memref<32x128xf32, #tpu.memory_space<vmem>> -> memref<1x128xf32, #tpu.memory_space<vmem>>
    %379 = tpu.memref_slice %arg4[%c22_i32_279] : memref<32x!tpu.dma_semaphore, #tpu.memory_space<semaphore_mem>> -> memref<1x!tpu.dma_semaphore, #tpu.memory_space<semaphore_mem>>
    %380 = tpu.memref_squeeze %379 : memref<1x!tpu.dma_semaphore, #tpu.memory_space<semaphore_mem>> -> memref<!tpu.dma_semaphore, #tpu.memory_space<semaphore_mem>>
    tpu.wait_dma2 semaphore(%380 : memref<!tpu.dma_semaphore, #tpu.memory_space<semaphore_mem>>) src(%377 : memref<1x128xf32, #tpu.memory_space<any>>) dst(%378 : memref<1x128xf32, #tpu.memory_space<vmem>>)
    %c23_i32_283 = arith.constant 23 : i32
    %c0_i32_284 = arith.constant 0 : i32
    %381 = tpu.memref_slice %arg2[%236, %c0_i32_284] : memref<128x128xf32, #tpu.memory_space<any>> -> memref<1x128xf32, #tpu.memory_space<any>>
    %c23_i32_285 = arith.constant 23 : i32
    %c0_i32_286 = arith.constant 0 : i32
    %382 = tpu.memref_slice %arg3[%c23_i32_285, %c0_i32_286] : memref<32x128xf32, #tpu.memory_space<vmem>> -> memref<1x128xf32, #tpu.memory_space<vmem>>
    %383 = tpu.memref_slice %arg4[%c23_i32_283] : memref<32x!tpu.dma_semaphore, #tpu.memory_space<semaphore_mem>> -> memref<1x!tpu.dma_semaphore, #tpu.memory_space<semaphore_mem>>
    %384 = tpu.memref_squeeze %383 : memref<1x!tpu.dma_semaphore, #tpu.memory_space<semaphore_mem>> -> memref<!tpu.dma_semaphore, #tpu.memory_space<semaphore_mem>>
    tpu.wait_dma2 semaphore(%384 : memref<!tpu.dma_semaphore, #tpu.memory_space<semaphore_mem>>) src(%381 : memref<1x128xf32, #tpu.memory_space<any>>) dst(%382 : memref<1x128xf32, #tpu.memory_space<vmem>>)
    %c24_i32_287 = arith.constant 24 : i32
    %c0_i32_288 = arith.constant 0 : i32
    %385 = tpu.memref_slice %arg2[%242, %c0_i32_288] : memref<128x128xf32, #tpu.memory_space<any>> -> memref<1x128xf32, #tpu.memory_space<any>>
    %c24_i32_289 = arith.constant 24 : i32
    %c0_i32_290 = arith.constant 0 : i32
    %386 = tpu.memref_slice %arg3[%c24_i32_289, %c0_i32_290] : memref<32x128xf32, #tpu.memory_space<vmem>> -> memref<1x128xf32, #tpu.memory_space<vmem>>
    %387 = tpu.memref_slice %arg4[%c24_i32_287] : memref<32x!tpu.dma_semaphore, #tpu.memory_space<semaphore_mem>> -> memref<1x!tpu.dma_semaphore, #tpu.memory_space<semaphore_mem>>
    %388 = tpu.memref_squeeze %387 : memref<1x!tpu.dma_semaphore, #tpu.memory_space<semaphore_mem>> -> memref<!tpu.dma_semaphore, #tpu.memory_space<semaphore_mem>>
    tpu.wait_dma2 semaphore(%388 : memref<!tpu.dma_semaphore, #tpu.memory_space<semaphore_mem>>) src(%385 : memref<1x128xf32, #tpu.memory_space<any>>) dst(%386 : memref<1x128xf32, #tpu.memory_space<vmem>>)
    %c25_i32_291 = arith.constant 25 : i32
    %c0_i32_292 = arith.constant 0 : i32
    %389 = tpu.memref_slice %arg2[%248, %c0_i32_292] : memref<128x128xf32, #tpu.memory_space<any>> -> memref<1x128xf32, #tpu.memory_space<any>>
    %c25_i32_293 = arith.constant 25 : i32
    %c0_i32_294 = arith.constant 0 : i32
    %390 = tpu.memref_slice %arg3[%c25_i32_293, %c0_i32_294] : memref<32x128xf32, #tpu.memory_space<vmem>> -> memref<1x128xf32, #tpu.memory_space<vmem>>
    %391 = tpu.memref_slice %arg4[%c25_i32_291] : memref<32x!tpu.dma_semaphore, #tpu.memory_space<semaphore_mem>> -> memref<1x!tpu.dma_semaphore, #tpu.memory_space<semaphore_mem>>
    %392 = tpu.memref_squeeze %391 : memref<1x!tpu.dma_semaphore, #tpu.memory_space<semaphore_mem>> -> memref<!tpu.dma_semaphore, #tpu.memory_space<semaphore_mem>>
    tpu.wait_dma2 semaphore(%392 : memref<!tpu.dma_semaphore, #tpu.memory_space<semaphore_mem>>) src(%389 : memref<1x128xf32, #tpu.memory_space<any>>) dst(%390 : memref<1x128xf32, #tpu.memory_space<vmem>>)
    %c26_i32_295 = arith.constant 26 : i32
    %c0_i32_296 = arith.constant 0 : i32
    %393 = tpu.memref_slice %arg2[%254, %c0_i32_296] : memref<128x128xf32, #tpu.memory_space<any>> -> memref<1x128xf32, #tpu.memory_space<any>>
    %c26_i32_297 = arith.constant 26 : i32
    %c0_i32_298 = arith.constant 0 : i32
    %394 = tpu.memref_slice %arg3[%c26_i32_297, %c0_i32_298] : memref<32x128xf32, #tpu.memory_space<vmem>> -> memref<1x128xf32, #tpu.memory_space<vmem>>
    %395 = tpu.memref_slice %arg4[%c26_i32_295] : memref<32x!tpu.dma_semaphore, #tpu.memory_space<semaphore_mem>> -> memref<1x!tpu.dma_semaphore, #tpu.memory_space<semaphore_mem>>
    %396 = tpu.memref_squeeze %395 : memref<1x!tpu.dma_semaphore, #tpu.memory_space<semaphore_mem>> -> memref<!tpu.dma_semaphore, #tpu.memory_space<semaphore_mem>>
    tpu.wait_dma2 semaphore(%396 : memref<!tpu.dma_semaphore, #tpu.memory_space<semaphore_mem>>) src(%393 : memref<1x128xf32, #tpu.memory_space<any>>) dst(%394 : memref<1x128xf32, #tpu.memory_space<vmem>>)
    %c27_i32_299 = arith.constant 27 : i32
    %c0_i32_300 = arith.constant 0 : i32
    %397 = tpu.memref_slice %arg2[%260, %c0_i32_300] : memref<128x128xf32, #tpu.memory_space<any>> -> memref<1x128xf32, #tpu.memory_space<any>>
    %c27_i32_301 = arith.constant 27 : i32
    %c0_i32_302 = arith.constant 0 : i32
    %398 = tpu.memref_slice %arg3[%c27_i32_301, %c0_i32_302] : memref<32x128xf32, #tpu.memory_space<vmem>> -> memref<1x128xf32, #tpu.memory_space<vmem>>
    %399 = tpu.memref_slice %arg4[%c27_i32_299] : memref<32x!tpu.dma_semaphore, #tpu.memory_space<semaphore_mem>> -> memref<1x!tpu.dma_semaphore, #tpu.memory_space<semaphore_mem>>
    %400 = tpu.memref_squeeze %399 : memref<1x!tpu.dma_semaphore, #tpu.memory_space<semaphore_mem>> -> memref<!tpu.dma_semaphore, #tpu.memory_space<semaphore_mem>>
    tpu.wait_dma2 semaphore(%400 : memref<!tpu.dma_semaphore, #tpu.memory_space<semaphore_mem>>) src(%397 : memref<1x128xf32, #tpu.memory_space<any>>) dst(%398 : memref<1x128xf32, #tpu.memory_space<vmem>>)
    %c28_i32_303 = arith.constant 28 : i32
    %c0_i32_304 = arith.constant 0 : i32
    %401 = tpu.memref_slice %arg2[%266, %c0_i32_304] : memref<128x128xf32, #tpu.memory_space<any>> -> memref<1x128xf32, #tpu.memory_space<any>>
    %c28_i32_305 = arith.constant 28 : i32
    %c0_i32_306 = arith.constant 0 : i32
    %402 = tpu.memref_slice %arg3[%c28_i32_305, %c0_i32_306] : memref<32x128xf32, #tpu.memory_space<vmem>> -> memref<1x128xf32, #tpu.memory_space<vmem>>
    %403 = tpu.memref_slice %arg4[%c28_i32_303] : memref<32x!tpu.dma_semaphore, #tpu.memory_space<semaphore_mem>> -> memref<1x!tpu.dma_semaphore, #tpu.memory_space<semaphore_mem>>
    %404 = tpu.memref_squeeze %403 : memref<1x!tpu.dma_semaphore, #tpu.memory_space<semaphore_mem>> -> memref<!tpu.dma_semaphore, #tpu.memory_space<semaphore_mem>>
    tpu.wait_dma2 semaphore(%404 : memref<!tpu.dma_semaphore, #tpu.memory_space<semaphore_mem>>) src(%401 : memref<1x128xf32, #tpu.memory_space<any>>) dst(%402 : memref<1x128xf32, #tpu.memory_space<vmem>>)
    %c29_i32_307 = arith.constant 29 : i32
    %c0_i32_308 = arith.constant 0 : i32
    %405 = tpu.memref_slice %arg2[%272, %c0_i32_308] : memref<128x128xf32, #tpu.memory_space<any>> -> memref<1x128xf32, #tpu.memory_space<any>>
    %c29_i32_309 = arith.constant 29 : i32
    %c0_i32_310 = arith.constant 0 : i32
    %406 = tpu.memref_slice %arg3[%c29_i32_309, %c0_i32_310] : memref<32x128xf32, #tpu.memory_space<vmem>> -> memref<1x128xf32, #tpu.memory_space<vmem>>
    %407 = tpu.memref_slice %arg4[%c29_i32_307] : memref<32x!tpu.dma_semaphore, #tpu.memory_space<semaphore_mem>> -> memref<1x!tpu.dma_semaphore, #tpu.memory_space<semaphore_mem>>
    %408 = tpu.memref_squeeze %407 : memref<1x!tpu.dma_semaphore, #tpu.memory_space<semaphore_mem>> -> memref<!tpu.dma_semaphore, #tpu.memory_space<semaphore_mem>>
    tpu.wait_dma2 semaphore(%408 : memref<!tpu.dma_semaphore, #tpu.memory_space<semaphore_mem>>) src(%405 : memref<1x128xf32, #tpu.memory_space<any>>) dst(%406 : memref<1x128xf32, #tpu.memory_space<vmem>>)
    %c30_i32_311 = arith.constant 30 : i32
    %c0_i32_312 = arith.constant 0 : i32
    %409 = tpu.memref_slice %arg2[%278, %c0_i32_312] : memref<128x128xf32, #tpu.memory_space<any>> -> memref<1x128xf32, #tpu.memory_space<any>>
    %c30_i32_313 = arith.constant 30 : i32
    %c0_i32_314 = arith.constant 0 : i32
    %410 = tpu.memref_slice %arg3[%c30_i32_313, %c0_i32_314] : memref<32x128xf32, #tpu.memory_space<vmem>> -> memref<1x128xf32, #tpu.memory_space<vmem>>
    %411 = tpu.memref_slice %arg4[%c30_i32_311] : memref<32x!tpu.dma_semaphore, #tpu.memory_space<semaphore_mem>> -> memref<1x!tpu.dma_semaphore, #tpu.memory_space<semaphore_mem>>
    %412 = tpu.memref_squeeze %411 : memref<1x!tpu.dma_semaphore, #tpu.memory_space<semaphore_mem>> -> memref<!tpu.dma_semaphore, #tpu.memory_space<semaphore_mem>>
    tpu.wait_dma2 semaphore(%412 : memref<!tpu.dma_semaphore, #tpu.memory_space<semaphore_mem>>) src(%409 : memref<1x128xf32, #tpu.memory_space<any>>) dst(%410 : memref<1x128xf32, #tpu.memory_space<vmem>>)
    %c31_i32_315 = arith.constant 31 : i32
    %c0_i32_316 = arith.constant 0 : i32
    %413 = tpu.memref_slice %arg2[%284, %c0_i32_316] : memref<128x128xf32, #tpu.memory_space<any>> -> memref<1x128xf32, #tpu.memory_space<any>>
    %c31_i32_317 = arith.constant 31 : i32
    %c0_i32_318 = arith.constant 0 : i32
    %414 = tpu.memref_slice %arg3[%c31_i32_317, %c0_i32_318] : memref<32x128xf32, #tpu.memory_space<vmem>> -> memref<1x128xf32, #tpu.memory_space<vmem>>
    %415 = tpu.memref_slice %arg4[%c31_i32_315] : memref<32x!tpu.dma_semaphore, #tpu.memory_space<semaphore_mem>> -> memref<1x!tpu.dma_semaphore, #tpu.memory_space<semaphore_mem>>
    %416 = tpu.memref_squeeze %415 : memref<1x!tpu.dma_semaphore, #tpu.memory_space<semaphore_mem>> -> memref<!tpu.dma_semaphore, #tpu.memory_space<semaphore_mem>>
    tpu.wait_dma2 semaphore(%416 : memref<!tpu.dma_semaphore, #tpu.memory_space<semaphore_mem>>) src(%413 : memref<1x128xf32, #tpu.memory_space<any>>) dst(%414 : memref<1x128xf32, #tpu.memory_space<vmem>>)
    %c0_i32_319 = arith.constant 0 : i32
    %417 = arith.cmpi slt, %3, %c0_i32_319 : i32
    %c128_i32 = arith.constant 128 : i32
    %418 = arith.cmpi sge, %3, %c128_i32 : i32
    %419 = arith.ori %417, %418 : i1
    %420 = arith.extui %419 : i1 to i32
    %c0_i32_320 = arith.constant 0 : i32
    %421 = arith.cmpi ne, %420, %c0_i32_320 : i32
    scf.if %421 {
      %cst = arith.constant 0.000000e+00 : f32
      %577 = vector.broadcast %cst : f32 to vector<1x128xf32>
      %c0 = arith.constant 0 : index
      %c0_414 = arith.constant 0 : index
      %578 = vector.load %arg3[%c0, %c0_414] : memref<32x128xf32, #tpu.memory_space<vmem>>, vector<1x128xf32>
      tpu.vector_store %arg3[%c0, %c0_414], %577 {strides = array<i32>} : memref<32x128xf32, #tpu.memory_space<vmem>>, vector<1x128xf32>,
    } else {
    }
    %c0_i32_321 = arith.constant 0 : i32
    %422 = arith.cmpi slt, %6, %c0_i32_321 : i32
    %c128_i32_322 = arith.constant 128 : i32
    %423 = arith.cmpi sge, %6, %c128_i32_322 : i32
    %424 = arith.ori %422, %423 : i1
    %425 = arith.extui %424 : i1 to i32
    %c0_i32_323 = arith.constant 0 : i32
    %426 = arith.cmpi ne, %425, %c0_i32_323 : i32
    scf.if %426 {
      %cst = arith.constant 0.000000e+00 : f32
      %577 = vector.broadcast %cst : f32 to vector<1x128xf32>
      %c1 = arith.constant 1 : index
      %c0 = arith.constant 0 : index
      %578 = vector.load %arg3[%c1, %c0] : memref<32x128xf32, #tpu.memory_space<vmem>>, vector<1x128xf32>
      tpu.vector_store %arg3[%c1, %c0], %577 {strides = array<i32>} : memref<32x128xf32, #tpu.memory_space<vmem>>, vector<1x128xf32>,
    } else {
    }
    %c0_i32_324 = arith.constant 0 : i32
    %427 = arith.cmpi slt, %9, %c0_i32_324 : i32
    %c128_i32_325 = arith.constant 128 : i32
    %428 = arith.cmpi sge, %9, %c128_i32_325 : i32
    %429 = arith.ori %427, %428 : i1
    %430 = arith.extui %429 : i1 to i32
    %c0_i32_326 = arith.constant 0 : i32
    %431 = arith.cmpi ne, %430, %c0_i32_326 : i32
    scf.if %431 {
      %cst = arith.constant 0.000000e+00 : f32
      %577 = vector.broadcast %cst : f32 to vector<1x128xf32>
      %c2 = arith.constant 2 : index
      %c0 = arith.constant 0 : index
      %578 = vector.load %arg3[%c2, %c0] : memref<32x128xf32, #tpu.memory_space<vmem>>, vector<1x128xf32>
      tpu.vector_store %arg3[%c2, %c0], %577 {strides = array<i32>} : memref<32x128xf32, #tpu.memory_space<vmem>>, vector<1x128xf32>,
    } else {
    }
    %c0_i32_327 = arith.constant 0 : i32
    %432 = arith.cmpi slt, %12, %c0_i32_327 : i32
    %c128_i32_328 = arith.constant 128 : i32
    %433 = arith.cmpi sge, %12, %c128_i32_328 : i32
    %434 = arith.ori %432, %433 : i1
    %435 = arith.extui %434 : i1 to i32
    %c0_i32_329 = arith.constant 0 : i32
    %436 = arith.cmpi ne, %435, %c0_i32_329 : i32
    scf.if %436 {
      %cst = arith.constant 0.000000e+00 : f32
      %577 = vector.broadcast %cst : f32 to vector<1x128xf32>
      %c3 = arith.constant 3 : index
      %c0 = arith.constant 0 : index
      %578 = vector.load %arg3[%c3, %c0] : memref<32x128xf32, #tpu.memory_space<vmem>>, vector<1x128xf32>
      tpu.vector_store %arg3[%c3, %c0], %577 {strides = array<i32>} : memref<32x128xf32, #tpu.memory_space<vmem>>, vector<1x128xf32>,
    } else {
    }
    %c0_i32_330 = arith.constant 0 : i32
    %437 = arith.cmpi slt, %15, %c0_i32_330 : i32
    %c128_i32_331 = arith.constant 128 : i32
    %438 = arith.cmpi sge, %15, %c128_i32_331 : i32
    %439 = arith.ori %437, %438 : i1
    %440 = arith.extui %439 : i1 to i32
    %c0_i32_332 = arith.constant 0 : i32
    %441 = arith.cmpi ne, %440, %c0_i32_332 : i32
    scf.if %441 {
      %cst = arith.constant 0.000000e+00 : f32
      %577 = vector.broadcast %cst : f32 to vector<1x128xf32>
      %c4 = arith.constant 4 : index
      %c0 = arith.constant 0 : index
      %578 = vector.load %arg3[%c4, %c0] : memref<32x128xf32, #tpu.memory_space<vmem>>, vector<1x128xf32>
      tpu.vector_store %arg3[%c4, %c0], %577 {strides = array<i32>} : memref<32x128xf32, #tpu.memory_space<vmem>>, vector<1x128xf32>,
    } else {
    }
    %c0_i32_333 = arith.constant 0 : i32
    %442 = arith.cmpi slt, %18, %c0_i32_333 : i32
    %c128_i32_334 = arith.constant 128 : i32
    %443 = arith.cmpi sge, %18, %c128_i32_334 : i32
    %444 = arith.ori %442, %443 : i1
    %445 = arith.extui %444 : i1 to i32
    %c0_i32_335 = arith.constant 0 : i32
    %446 = arith.cmpi ne, %445, %c0_i32_335 : i32
    scf.if %446 {
      %cst = arith.constant 0.000000e+00 : f32
      %577 = vector.broadcast %cst : f32 to vector<1x128xf32>
      %c5 = arith.constant 5 : index
      %c0 = arith.constant 0 : index
      %578 = vector.load %arg3[%c5, %c0] : memref<32x128xf32, #tpu.memory_space<vmem>>, vector<1x128xf32>
      tpu.vector_store %arg3[%c5, %c0], %577 {strides = array<i32>} : memref<32x128xf32, #tpu.memory_space<vmem>>, vector<1x128xf32>,
    } else {
    }
    %c0_i32_336 = arith.constant 0 : i32
    %447 = arith.cmpi slt, %21, %c0_i32_336 : i32
    %c128_i32_337 = arith.constant 128 : i32
    %448 = arith.cmpi sge, %21, %c128_i32_337 : i32
    %449 = arith.ori %447, %448 : i1
    %450 = arith.extui %449 : i1 to i32
    %c0_i32_338 = arith.constant 0 : i32
    %451 = arith.cmpi ne, %450, %c0_i32_338 : i32
    scf.if %451 {
      %cst = arith.constant 0.000000e+00 : f32
      %577 = vector.broadcast %cst : f32 to vector<1x128xf32>
      %c6 = arith.constant 6 : index
      %c0 = arith.constant 0 : index
      %578 = vector.load %arg3[%c6, %c0] : memref<32x128xf32, #tpu.memory_space<vmem>>, vector<1x128xf32>
      tpu.vector_store %arg3[%c6, %c0], %577 {strides = array<i32>} : memref<32x128xf32, #tpu.memory_space<vmem>>, vector<1x128xf32>,
    } else {
    }
    %c0_i32_339 = arith.constant 0 : i32
    %452 = arith.cmpi slt, %24, %c0_i32_339 : i32
    %c128_i32_340 = arith.constant 128 : i32
    %453 = arith.cmpi sge, %24, %c128_i32_340 : i32
    %454 = arith.ori %452, %453 : i1
    %455 = arith.extui %454 : i1 to i32
    %c0_i32_341 = arith.constant 0 : i32
    %456 = arith.cmpi ne, %455, %c0_i32_341 : i32
    scf.if %456 {
      %cst = arith.constant 0.000000e+00 : f32
      %577 = vector.broadcast %cst : f32 to vector<1x128xf32>
      %c7 = arith.constant 7 : index
      %c0 = arith.constant 0 : index
      %578 = vector.load %arg3[%c7, %c0] : memref<32x128xf32, #tpu.memory_space<vmem>>, vector<1x128xf32>
      tpu.vector_store %arg3[%c7, %c0], %577 {strides = array<i32>} : memref<32x128xf32, #tpu.memory_space<vmem>>, vector<1x128xf32>,
    } else {
    }
    %c0_i32_342 = arith.constant 0 : i32
    %457 = arith.cmpi slt, %27, %c0_i32_342 : i32
    %c128_i32_343 = arith.constant 128 : i32
    %458 = arith.cmpi sge, %27, %c128_i32_343 : i32
    %459 = arith.ori %457, %458 : i1
    %460 = arith.extui %459 : i1 to i32
    %c0_i32_344 = arith.constant 0 : i32
    %461 = arith.cmpi ne, %460, %c0_i32_344 : i32
    scf.if %461 {
      %cst = arith.constant 0.000000e+00 : f32
      %577 = vector.broadcast %cst : f32 to vector<1x128xf32>
      %c8 = arith.constant 8 : index
      %c0 = arith.constant 0 : index
      %578 = vector.load %arg3[%c8, %c0] : memref<32x128xf32, #tpu.memory_space<vmem>>, vector<1x128xf32>
      tpu.vector_store %arg3[%c8, %c0], %577 {strides = array<i32>} : memref<32x128xf32, #tpu.memory_space<vmem>>, vector<1x128xf32>,
    } else {
    }
    %c0_i32_345 = arith.constant 0 : i32
    %462 = arith.cmpi slt, %30, %c0_i32_345 : i32
    %c128_i32_346 = arith.constant 128 : i32
    %463 = arith.cmpi sge, %30, %c128_i32_346 : i32
    %464 = arith.ori %462, %463 : i1
    %465 = arith.extui %464 : i1 to i32
    %c0_i32_347 = arith.constant 0 : i32
    %466 = arith.cmpi ne, %465, %c0_i32_347 : i32
    scf.if %466 {
      %cst = arith.constant 0.000000e+00 : f32
      %577 = vector.broadcast %cst : f32 to vector<1x128xf32>
      %c9 = arith.constant 9 : index
      %c0 = arith.constant 0 : index
      %578 = vector.load %arg3[%c9, %c0] : memref<32x128xf32, #tpu.memory_space<vmem>>, vector<1x128xf32>
      tpu.vector_store %arg3[%c9, %c0], %577 {strides = array<i32>} : memref<32x128xf32, #tpu.memory_space<vmem>>, vector<1x128xf32>,
    } else {
    }
    %c0_i32_348 = arith.constant 0 : i32
    %467 = arith.cmpi slt, %33, %c0_i32_348 : i32
    %c128_i32_349 = arith.constant 128 : i32
    %468 = arith.cmpi sge, %33, %c128_i32_349 : i32
    %469 = arith.ori %467, %468 : i1
    %470 = arith.extui %469 : i1 to i32
    %c0_i32_350 = arith.constant 0 : i32
    %471 = arith.cmpi ne, %470, %c0_i32_350 : i32
    scf.if %471 {
      %cst = arith.constant 0.000000e+00 : f32
      %577 = vector.broadcast %cst : f32 to vector<1x128xf32>
      %c10 = arith.constant 10 : index
      %c0 = arith.constant 0 : index
      %578 = vector.load %arg3[%c10, %c0] : memref<32x128xf32, #tpu.memory_space<vmem>>, vector<1x128xf32>
      tpu.vector_store %arg3[%c10, %c0], %577 {strides = array<i32>} : memref<32x128xf32, #tpu.memory_space<vmem>>, vector<1x128xf32>,
    } else {
    }
    %c0_i32_351 = arith.constant 0 : i32
    %472 = arith.cmpi slt, %36, %c0_i32_351 : i32
    %c128_i32_352 = arith.constant 128 : i32
    %473 = arith.cmpi sge, %36, %c128_i32_352 : i32
    %474 = arith.ori %472, %473 : i1
    %475 = arith.extui %474 : i1 to i32
    %c0_i32_353 = arith.constant 0 : i32
    %476 = arith.cmpi ne, %475, %c0_i32_353 : i32
    scf.if %476 {
      %cst = arith.constant 0.000000e+00 : f32
      %577 = vector.broadcast %cst : f32 to vector<1x128xf32>
      %c11 = arith.constant 11 : index
      %c0 = arith.constant 0 : index
      %578 = vector.load %arg3[%c11, %c0] : memref<32x128xf32, #tpu.memory_space<vmem>>, vector<1x128xf32>
      tpu.vector_store %arg3[%c11, %c0], %577 {strides = array<i32>} : memref<32x128xf32, #tpu.memory_space<vmem>>, vector<1x128xf32>,
    } else {
    }
    %c0_i32_354 = arith.constant 0 : i32
    %477 = arith.cmpi slt, %39, %c0_i32_354 : i32
    %c128_i32_355 = arith.constant 128 : i32
    %478 = arith.cmpi sge, %39, %c128_i32_355 : i32
    %479 = arith.ori %477, %478 : i1
    %480 = arith.extui %479 : i1 to i32
    %c0_i32_356 = arith.constant 0 : i32
    %481 = arith.cmpi ne, %480, %c0_i32_356 : i32
    scf.if %481 {
      %cst = arith.constant 0.000000e+00 : f32
      %577 = vector.broadcast %cst : f32 to vector<1x128xf32>
      %c12 = arith.constant 12 : index
      %c0 = arith.constant 0 : index
      %578 = vector.load %arg3[%c12, %c0] : memref<32x128xf32, #tpu.memory_space<vmem>>, vector<1x128xf32>
      tpu.vector_store %arg3[%c12, %c0], %577 {strides = array<i32>} : memref<32x128xf32, #tpu.memory_space<vmem>>, vector<1x128xf32>,
    } else {
    }
    %c0_i32_357 = arith.constant 0 : i32
    %482 = arith.cmpi slt, %42, %c0_i32_357 : i32
    %c128_i32_358 = arith.constant 128 : i32
    %483 = arith.cmpi sge, %42, %c128_i32_358 : i32
    %484 = arith.ori %482, %483 : i1
    %485 = arith.extui %484 : i1 to i32
    %c0_i32_359 = arith.constant 0 : i32
    %486 = arith.cmpi ne, %485, %c0_i32_359 : i32
    scf.if %486 {
      %cst = arith.constant 0.000000e+00 : f32
      %577 = vector.broadcast %cst : f32 to vector<1x128xf32>
      %c13 = arith.constant 13 : index
      %c0 = arith.constant 0 : index
      %578 = vector.load %arg3[%c13, %c0] : memref<32x128xf32, #tpu.memory_space<vmem>>, vector<1x128xf32>
      tpu.vector_store %arg3[%c13, %c0], %577 {strides = array<i32>} : memref<32x128xf32, #tpu.memory_space<vmem>>, vector<1x128xf32>,
    } else {
    }
    %c0_i32_360 = arith.constant 0 : i32
    %487 = arith.cmpi slt, %45, %c0_i32_360 : i32
    %c128_i32_361 = arith.constant 128 : i32
    %488 = arith.cmpi sge, %45, %c128_i32_361 : i32
    %489 = arith.ori %487, %488 : i1
    %490 = arith.extui %489 : i1 to i32
    %c0_i32_362 = arith.constant 0 : i32
    %491 = arith.cmpi ne, %490, %c0_i32_362 : i32
    scf.if %491 {
      %cst = arith.constant 0.000000e+00 : f32
      %577 = vector.broadcast %cst : f32 to vector<1x128xf32>
      %c14 = arith.constant 14 : index
      %c0 = arith.constant 0 : index
      %578 = vector.load %arg3[%c14, %c0] : memref<32x128xf32, #tpu.memory_space<vmem>>, vector<1x128xf32>
      tpu.vector_store %arg3[%c14, %c0], %577 {strides = array<i32>} : memref<32x128xf32, #tpu.memory_space<vmem>>, vector<1x128xf32>,
    } else {
    }
    %c0_i32_363 = arith.constant 0 : i32
    %492 = arith.cmpi slt, %48, %c0_i32_363 : i32
    %c128_i32_364 = arith.constant 128 : i32
    %493 = arith.cmpi sge, %48, %c128_i32_364 : i32
    %494 = arith.ori %492, %493 : i1
    %495 = arith.extui %494 : i1 to i32
    %c0_i32_365 = arith.constant 0 : i32
    %496 = arith.cmpi ne, %495, %c0_i32_365 : i32
    scf.if %496 {
      %cst = arith.constant 0.000000e+00 : f32
      %577 = vector.broadcast %cst : f32 to vector<1x128xf32>
      %c15 = arith.constant 15 : index
      %c0 = arith.constant 0 : index
      %578 = vector.load %arg3[%c15, %c0] : memref<32x128xf32, #tpu.memory_space<vmem>>, vector<1x128xf32>
      tpu.vector_store %arg3[%c15, %c0], %577 {strides = array<i32>} : memref<32x128xf32, #tpu.memory_space<vmem>>, vector<1x128xf32>,
    } else {
    }
    %c0_i32_366 = arith.constant 0 : i32
    %497 = arith.cmpi slt, %51, %c0_i32_366 : i32
    %c128_i32_367 = arith.constant 128 : i32
    %498 = arith.cmpi sge, %51, %c128_i32_367 : i32
    %499 = arith.ori %497, %498 : i1
    %500 = arith.extui %499 : i1 to i32
    %c0_i32_368 = arith.constant 0 : i32
    %501 = arith.cmpi ne, %500, %c0_i32_368 : i32
    scf.if %501 {
      %cst = arith.constant 0.000000e+00 : f32
      %577 = vector.broadcast %cst : f32 to vector<1x128xf32>
      %c16 = arith.constant 16 : index
      %c0 = arith.constant 0 : index
      %578 = vector.load %arg3[%c16, %c0] : memref<32x128xf32, #tpu.memory_space<vmem>>, vector<1x128xf32>
      tpu.vector_store %arg3[%c16, %c0], %577 {strides = array<i32>} : memref<32x128xf32, #tpu.memory_space<vmem>>, vector<1x128xf32>,
    } else {
    }
    %c0_i32_369 = arith.constant 0 : i32
    %502 = arith.cmpi slt, %54, %c0_i32_369 : i32
    %c128_i32_370 = arith.constant 128 : i32
    %503 = arith.cmpi sge, %54, %c128_i32_370 : i32
    %504 = arith.ori %502, %503 : i1
    %505 = arith.extui %504 : i1 to i32
    %c0_i32_371 = arith.constant 0 : i32
    %506 = arith.cmpi ne, %505, %c0_i32_371 : i32
    scf.if %506 {
      %cst = arith.constant 0.000000e+00 : f32
      %577 = vector.broadcast %cst : f32 to vector<1x128xf32>
      %c17 = arith.constant 17 : index
      %c0 = arith.constant 0 : index
      %578 = vector.load %arg3[%c17, %c0] : memref<32x128xf32, #tpu.memory_space<vmem>>, vector<1x128xf32>
      tpu.vector_store %arg3[%c17, %c0], %577 {strides = array<i32>} : memref<32x128xf32, #tpu.memory_space<vmem>>, vector<1x128xf32>,
    } else {
    }
    %c0_i32_372 = arith.constant 0 : i32
    %507 = arith.cmpi slt, %57, %c0_i32_372 : i32
    %c128_i32_373 = arith.constant 128 : i32
    %508 = arith.cmpi sge, %57, %c128_i32_373 : i32
    %509 = arith.ori %507, %508 : i1
    %510 = arith.extui %509 : i1 to i32
    %c0_i32_374 = arith.constant 0 : i32
    %511 = arith.cmpi ne, %510, %c0_i32_374 : i32
    scf.if %511 {
      %cst = arith.constant 0.000000e+00 : f32
      %577 = vector.broadcast %cst : f32 to vector<1x128xf32>
      %c18 = arith.constant 18 : index
      %c0 = arith.constant 0 : index
      %578 = vector.load %arg3[%c18, %c0] : memref<32x128xf32, #tpu.memory_space<vmem>>, vector<1x128xf32>
      tpu.vector_store %arg3[%c18, %c0], %577 {strides = array<i32>} : memref<32x128xf32, #tpu.memory_space<vmem>>, vector<1x128xf32>,
    } else {
    }
    %c0_i32_375 = arith.constant 0 : i32
    %512 = arith.cmpi slt, %60, %c0_i32_375 : i32
    %c128_i32_376 = arith.constant 128 : i32
    %513 = arith.cmpi sge, %60, %c128_i32_376 : i32
    %514 = arith.ori %512, %513 : i1
    %515 = arith.extui %514 : i1 to i32
    %c0_i32_377 = arith.constant 0 : i32
    %516 = arith.cmpi ne, %515, %c0_i32_377 : i32
    scf.if %516 {
      %cst = arith.constant 0.000000e+00 : f32
      %577 = vector.broadcast %cst : f32 to vector<1x128xf32>
      %c19 = arith.constant 19 : index
      %c0 = arith.constant 0 : index
      %578 = vector.load %arg3[%c19, %c0] : memref<32x128xf32, #tpu.memory_space<vmem>>, vector<1x128xf32>
      tpu.vector_store %arg3[%c19, %c0], %577 {strides = array<i32>} : memref<32x128xf32, #tpu.memory_space<vmem>>, vector<1x128xf32>,
    } else {
    }
    %c0_i32_378 = arith.constant 0 : i32
    %517 = arith.cmpi slt, %63, %c0_i32_378 : i32
    %c128_i32_379 = arith.constant 128 : i32
    %518 = arith.cmpi sge, %63, %c128_i32_379 : i32
    %519 = arith.ori %517, %518 : i1
    %520 = arith.extui %519 : i1 to i32
    %c0_i32_380 = arith.constant 0 : i32
    %521 = arith.cmpi ne, %520, %c0_i32_380 : i32
    scf.if %521 {
      %cst = arith.constant 0.000000e+00 : f32
      %577 = vector.broadcast %cst : f32 to vector<1x128xf32>
      %c20 = arith.constant 20 : index
      %c0 = arith.constant 0 : index
      %578 = vector.load %arg3[%c20, %c0] : memref<32x128xf32, #tpu.memory_space<vmem>>, vector<1x128xf32>
      tpu.vector_store %arg3[%c20, %c0], %577 {strides = array<i32>} : memref<32x128xf32, #tpu.memory_space<vmem>>, vector<1x128xf32>,
    } else {
    }
    %c0_i32_381 = arith.constant 0 : i32
    %522 = arith.cmpi slt, %66, %c0_i32_381 : i32
    %c128_i32_382 = arith.constant 128 : i32
    %523 = arith.cmpi sge, %66, %c128_i32_382 : i32
    %524 = arith.ori %522, %523 : i1
    %525 = arith.extui %524 : i1 to i32
    %c0_i32_383 = arith.constant 0 : i32
    %526 = arith.cmpi ne, %525, %c0_i32_383 : i32
    scf.if %526 {
      %cst = arith.constant 0.000000e+00 : f32
      %577 = vector.broadcast %cst : f32 to vector<1x128xf32>
      %c21 = arith.constant 21 : index
      %c0 = arith.constant 0 : index
      %578 = vector.load %arg3[%c21, %c0] : memref<32x128xf32, #tpu.memory_space<vmem>>, vector<1x128xf32>
      tpu.vector_store %arg3[%c21, %c0], %577 {strides = array<i32>} : memref<32x128xf32, #tpu.memory_space<vmem>>, vector<1x128xf32>,
    } else {
    }
    %c0_i32_384 = arith.constant 0 : i32
    %527 = arith.cmpi slt, %69, %c0_i32_384 : i32
    %c128_i32_385 = arith.constant 128 : i32
    %528 = arith.cmpi sge, %69, %c128_i32_385 : i32
    %529 = arith.ori %527, %528 : i1
    %530 = arith.extui %529 : i1 to i32
    %c0_i32_386 = arith.constant 0 : i32
    %531 = arith.cmpi ne, %530, %c0_i32_386 : i32
    scf.if %531 {
      %cst = arith.constant 0.000000e+00 : f32
      %577 = vector.broadcast %cst : f32 to vector<1x128xf32>
      %c22 = arith.constant 22 : index
      %c0 = arith.constant 0 : index
      %578 = vector.load %arg3[%c22, %c0] : memref<32x128xf32, #tpu.memory_space<vmem>>, vector<1x128xf32>
      tpu.vector_store %arg3[%c22, %c0], %577 {strides = array<i32>} : memref<32x128xf32, #tpu.memory_space<vmem>>, vector<1x128xf32>,
    } else {
    }
    %c0_i32_387 = arith.constant 0 : i32
    %532 = arith.cmpi slt, %72, %c0_i32_387 : i32
    %c128_i32_388 = arith.constant 128 : i32
    %533 = arith.cmpi sge, %72, %c128_i32_388 : i32
    %534 = arith.ori %532, %533 : i1
    %535 = arith.extui %534 : i1 to i32
    %c0_i32_389 = arith.constant 0 : i32
    %536 = arith.cmpi ne, %535, %c0_i32_389 : i32
    scf.if %536 {
      %cst = arith.constant 0.000000e+00 : f32
      %577 = vector.broadcast %cst : f32 to vector<1x128xf32>
      %c23 = arith.constant 23 : index
      %c0 = arith.constant 0 : index
      %578 = vector.load %arg3[%c23, %c0] : memref<32x128xf32, #tpu.memory_space<vmem>>, vector<1x128xf32>
      tpu.vector_store %arg3[%c23, %c0], %577 {strides = array<i32>} : memref<32x128xf32, #tpu.memory_space<vmem>>, vector<1x128xf32>,
    } else {
    }
    %c0_i32_390 = arith.constant 0 : i32
    %537 = arith.cmpi slt, %75, %c0_i32_390 : i32
    %c128_i32_391 = arith.constant 128 : i32
    %538 = arith.cmpi sge, %75, %c128_i32_391 : i32
    %539 = arith.ori %537, %538 : i1
    %540 = arith.extui %539 : i1 to i32
    %c0_i32_392 = arith.constant 0 : i32
    %541 = arith.cmpi ne, %540, %c0_i32_392 : i32
    scf.if %541 {
      %cst = arith.constant 0.000000e+00 : f32
      %577 = vector.broadcast %cst : f32 to vector<1x128xf32>
      %c24 = arith.constant 24 : index
      %c0 = arith.constant 0 : index
      %578 = vector.load %arg3[%c24, %c0] : memref<32x128xf32, #tpu.memory_space<vmem>>, vector<1x128xf32>
      tpu.vector_store %arg3[%c24, %c0], %577 {strides = array<i32>} : memref<32x128xf32, #tpu.memory_space<vmem>>, vector<1x128xf32>,
    } else {
    }
    %c0_i32_393 = arith.constant 0 : i32
    %542 = arith.cmpi slt, %78, %c0_i32_393 : i32
    %c128_i32_394 = arith.constant 128 : i32
    %543 = arith.cmpi sge, %78, %c128_i32_394 : i32
    %544 = arith.ori %542, %543 : i1
    %545 = arith.extui %544 : i1 to i32
    %c0_i32_395 = arith.constant 0 : i32
    %546 = arith.cmpi ne, %545, %c0_i32_395 : i32
    scf.if %546 {
      %cst = arith.constant 0.000000e+00 : f32
      %577 = vector.broadcast %cst : f32 to vector<1x128xf32>
      %c25 = arith.constant 25 : index
      %c0 = arith.constant 0 : index
      %578 = vector.load %arg3[%c25, %c0] : memref<32x128xf32, #tpu.memory_space<vmem>>, vector<1x128xf32>
      tpu.vector_store %arg3[%c25, %c0], %577 {strides = array<i32>} : memref<32x128xf32, #tpu.memory_space<vmem>>, vector<1x128xf32>,
    } else {
    }
    %c0_i32_396 = arith.constant 0 : i32
    %547 = arith.cmpi slt, %81, %c0_i32_396 : i32
    %c128_i32_397 = arith.constant 128 : i32
    %548 = arith.cmpi sge, %81, %c128_i32_397 : i32
    %549 = arith.ori %547, %548 : i1
    %550 = arith.extui %549 : i1 to i32
    %c0_i32_398 = arith.constant 0 : i32
    %551 = arith.cmpi ne, %550, %c0_i32_398 : i32
    scf.if %551 {
      %cst = arith.constant 0.000000e+00 : f32
      %577 = vector.broadcast %cst : f32 to vector<1x128xf32>
      %c26 = arith.constant 26 : index
      %c0 = arith.constant 0 : index
      %578 = vector.load %arg3[%c26, %c0] : memref<32x128xf32, #tpu.memory_space<vmem>>, vector<1x128xf32>
      tpu.vector_store %arg3[%c26, %c0], %577 {strides = array<i32>} : memref<32x128xf32, #tpu.memory_space<vmem>>, vector<1x128xf32>,
    } else {
    }
    %c0_i32_399 = arith.constant 0 : i32
    %552 = arith.cmpi slt, %84, %c0_i32_399 : i32
    %c128_i32_400 = arith.constant 128 : i32
    %553 = arith.cmpi sge, %84, %c128_i32_400 : i32
    %554 = arith.ori %552, %553 : i1
    %555 = arith.extui %554 : i1 to i32
    %c0_i32_401 = arith.constant 0 : i32
    %556 = arith.cmpi ne, %555, %c0_i32_401 : i32
    scf.if %556 {
      %cst = arith.constant 0.000000e+00 : f32
      %577 = vector.broadcast %cst : f32 to vector<1x128xf32>
      %c27 = arith.constant 27 : index
      %c0 = arith.constant 0 : index
      %578 = vector.load %arg3[%c27, %c0] : memref<32x128xf32, #tpu.memory_space<vmem>>, vector<1x128xf32>
      tpu.vector_store %arg3[%c27, %c0], %577 {strides = array<i32>} : memref<32x128xf32, #tpu.memory_space<vmem>>, vector<1x128xf32>,
    } else {
    }
    %c0_i32_402 = arith.constant 0 : i32
    %557 = arith.cmpi slt, %87, %c0_i32_402 : i32
    %c128_i32_403 = arith.constant 128 : i32
    %558 = arith.cmpi sge, %87, %c128_i32_403 : i32
    %559 = arith.ori %557, %558 : i1
    %560 = arith.extui %559 : i1 to i32
    %c0_i32_404 = arith.constant 0 : i32
    %561 = arith.cmpi ne, %560, %c0_i32_404 : i32
    scf.if %561 {
      %cst = arith.constant 0.000000e+00 : f32
      %577 = vector.broadcast %cst : f32 to vector<1x128xf32>
      %c28 = arith.constant 28 : index
      %c0 = arith.constant 0 : index
      %578 = vector.load %arg3[%c28, %c0] : memref<32x128xf32, #tpu.memory_space<vmem>>, vector<1x128xf32>
      tpu.vector_store %arg3[%c28, %c0], %577 {strides = array<i32>} : memref<32x128xf32, #tpu.memory_space<vmem>>, vector<1x128xf32>,
    } else {
    }
    %c0_i32_405 = arith.constant 0 : i32
    %562 = arith.cmpi slt, %90, %c0_i32_405 : i32
    %c128_i32_406 = arith.constant 128 : i32
    %563 = arith.cmpi sge, %90, %c128_i32_406 : i32
    %564 = arith.ori %562, %563 : i1
    %565 = arith.extui %564 : i1 to i32
    %c0_i32_407 = arith.constant 0 : i32
    %566 = arith.cmpi ne, %565, %c0_i32_407 : i32
    scf.if %566 {
      %cst = arith.constant 0.000000e+00 : f32
      %577 = vector.broadcast %cst : f32 to vector<1x128xf32>
      %c29 = arith.constant 29 : index
      %c0 = arith.constant 0 : index
      %578 = vector.load %arg3[%c29, %c0] : memref<32x128xf32, #tpu.memory_space<vmem>>, vector<1x128xf32>
      tpu.vector_store %arg3[%c29, %c0], %577 {strides = array<i32>} : memref<32x128xf32, #tpu.memory_space<vmem>>, vector<1x128xf32>,
    } else {
    }
    %c0_i32_408 = arith.constant 0 : i32
    %567 = arith.cmpi slt, %93, %c0_i32_408 : i32
    %c128_i32_409 = arith.constant 128 : i32
    %568 = arith.cmpi sge, %93, %c128_i32_409 : i32
    %569 = arith.ori %567, %568 : i1
    %570 = arith.extui %569 : i1 to i32
    %c0_i32_410 = arith.constant 0 : i32
    %571 = arith.cmpi ne, %570, %c0_i32_410 : i32
    scf.if %571 {
      %cst = arith.constant 0.000000e+00 : f32
      %577 = vector.broadcast %cst : f32 to vector<1x128xf32>
      %c30 = arith.constant 30 : index
      %c0 = arith.constant 0 : index
      %578 = vector.load %arg3[%c30, %c0] : memref<32x128xf32, #tpu.memory_space<vmem>>, vector<1x128xf32>
      tpu.vector_store %arg3[%c30, %c0], %577 {strides = array<i32>} : memref<32x128xf32, #tpu.memory_space<vmem>>, vector<1x128xf32>,
    } else {
    }
    %c0_i32_411 = arith.constant 0 : i32
    %572 = arith.cmpi slt, %96, %c0_i32_411 : i32
    %c128_i32_412 = arith.constant 128 : i32
    %573 = arith.cmpi sge, %96, %c128_i32_412 : i32
    %574 = arith.ori %572, %573 : i1
    %575 = arith.extui %574 : i1 to i32
    %c0_i32_413 = arith.constant 0 : i32
    %576 = arith.cmpi ne, %575, %c0_i32_413 : i32
    scf.if %576 {
      %cst = arith.constant 0.000000e+00 : f32
      %577 = vector.broadcast %cst : f32 to vector<1x128xf32>
      %c31 = arith.constant 31 : index
      %c0 = arith.constant 0 : index
      %578 = vector.load %arg3[%c31, %c0] : memref<32x128xf32, #tpu.memory_space<vmem>>, vector<1x128xf32>
      tpu.vector_store %arg3[%c31, %c0], %577 {strides = array<i32>} : memref<32x128xf32, #tpu.memory_space<vmem>>, vector<1x128xf32>,
    } else {
    }
    return
  }
  func.func @transform_1(%arg0: i32, %arg1: memref<96xi32, #tpu.memory_space<smem>>) -> (i32, i32) {
    %c0_i32 = arith.constant 0 : i32
    %c0_i32_0 = arith.constant 0 : i32
    return %arg0, %c0_i32 : i32, i32
  }
}

</mosaic_0001>

<llo_original>
// kernel: tpu_custom_call.1
$region0: #{tpu_custom_call.1}
  #allocation0 [shape = 'u32[]', space=smem, size = 0x4, offset = 0x4, fixed_abs, tag = 'smem constant byte address 0x4 - core index']
  #allocation1 [shape = 'u32[72,128]{1,0:T(1,128)}', space=vmem, size = 0x9000, scoped, tag = 'internal scratch']
  #allocation2 [shape = 's32[32]{0}', space=sflag, size = 0x80, scoped, tag = 'scratch operand']
  #allocation3 [shape = 's32[1]{0}', space=sflag, size = 0x4, scoped, tag = 'scoped memory for tpu_custom_call.1']
  #allocation4 [shape = 'u8[512]{0}', space=smem, size = 0x200, scoped, tag = 'prefetched SMEM operand 0']
  #allocation7 [shape = 's32[]', space=sflag, size = 0x4, offset = 0, fixed_abs, tag = 'sflag constant byte address 0x0 - dummy sync flag']
  #allocation8 [shape = 's32[]', space=sflag, size = 0x4, offset = 0, fixed_abs, tag = 'sflag constant byte address 0x0 - dummy sync flag']
  #allocation9 [shape = 'u32[]', space=smem, size = 0x4, offset = 0x44, fixed_abs, tag = 'smem constant byte address 0x44 - assertion arg 0']
  #allocation10 [shape = 'u32[]', space=smem, size = 0x4, offset = 0x48, fixed_abs, tag = 'smem constant byte address 0x48 - assertion arg 1']
  #allocation11 [shape = 's32[]', space=sflag, size = 0x4, offset = 0, fixed_abs, tag = 'sflag constant byte address 0x0 - dummy sync flag']
  #allocation12 [shape = 's32[]', space=sflag, size = 0x4, offset = 0, fixed_abs, tag = 'sflag constant byte address 0x0 - dummy sync flag']
  #allocation13 [shape = 's32[]', space=sflag, size = 0x4, offset = 0, fixed_abs, tag = 'sflag constant byte address 0x0 - dummy sync flag']
  #allocation14 [shape = 's32[]', space=sflag, size = 0x4, offset = 0, fixed_abs, tag = 'sflag constant byte address 0x0 - dummy sync flag']
  #allocation15 [shape = 's32[]', space=sflag, size = 0x4, offset = 0, fixed_abs, tag = 'sflag constant byte address 0x0 - dummy sync flag']
  #allocation16 [shape = 's32[]', space=sflag, size = 0x4, offset = 0, fixed_abs, tag = 'sflag constant byte address 0x0 - dummy sync flag']
  #allocation17 [shape = 's32[]', space=sflag, size = 0x4, offset = 0, fixed_abs, tag = 'sflag constant byte address 0x0 - dummy sync flag']
  #allocation18 [shape = 's32[]', space=sflag, size = 0x4, offset = 0, fixed_abs, tag = 'sflag constant byte address 0x0 - dummy sync flag']
  #allocation19 [shape = 's32[]', space=sflag, size = 0x4, offset = 0, fixed_abs, tag = 'sflag constant byte address 0x0 - dummy sync flag']
  #allocation20 [shape = 's32[]', space=sflag, size = 0x4, offset = 0, fixed_abs, tag = 'sflag constant byte address 0x0 - dummy sync flag']
  #allocation21 [shape = 's32[]', space=sflag, size = 0x4, offset = 0, fixed_abs, tag = 'sflag constant byte address 0x0 - dummy sync flag']
  #allocation22 [shape = 's32[]', space=sflag, size = 0x4, offset = 0, fixed_abs, tag = 'sflag constant byte address 0x0 - dummy sync flag']
  #allocation23 [shape = 's32[]', space=sflag, size = 0x4, offset = 0, fixed_abs, tag = 'sflag constant byte address 0x0 - dummy sync flag']
  #allocation24 [shape = 's32[]', space=sflag, size = 0x4, offset = 0, fixed_abs, tag = 'sflag constant byte address 0x0 - dummy sync flag']
  #allocation25 [shape = 's32[]', space=sflag, size = 0x4, offset = 0, fixed_abs, tag = 'sflag constant byte address 0x0 - dummy sync flag']
  #allocation26 [shape = 's32[]', space=sflag, size = 0x4, offset = 0, fixed_abs, tag = 'sflag constant byte address 0x0 - dummy sync flag']
  #allocation27 [shape = 's32[]', space=sflag, size = 0x4, offset = 0, fixed_abs, tag = 'sflag constant byte address 0x0 - dummy sync flag']
  #allocation28 [shape = 's32[]', space=sflag, size = 0x4, offset = 0, fixed_abs, tag = 'sflag constant byte address 0x0 - dummy sync flag']
  #allocation29 [shape = 's32[]', space=sflag, size = 0x4, offset = 0, fixed_abs, tag = 'sflag constant byte address 0x0 - dummy sync flag']
  #allocation30 [shape = 's32[]', space=sflag, size = 0x4, offset = 0, fixed_abs, tag = 'sflag constant byte address 0x0 - dummy sync flag']
  #allocation31 [shape = 's32[]', space=sflag, size = 0x4, offset = 0, fixed_abs, tag = 'sflag constant byte address 0x0 - dummy sync flag']
  #allocation32 [shape = 's32[]', space=sflag, size = 0x4, offset = 0, fixed_abs, tag = 'sflag constant byte address 0x0 - dummy sync flag']
  #allocation33 [shape = 's32[]', space=sflag, size = 0x4, offset = 0, fixed_abs, tag = 'sflag constant byte address 0x0 - dummy sync flag']
  #allocation34 [shape = 's32[]', space=sflag, size = 0x4, offset = 0, fixed_abs, tag = 'sflag constant byte address 0x0 - dummy sync flag']
  #allocation35 [shape = 's32[]', space=sflag, size = 0x4, offset = 0, fixed_abs, tag = 'sflag constant byte address 0x0 - dummy sync flag']
  #allocation36 [shape = 's32[]', space=sflag, size = 0x4, offset = 0, fixed_abs, tag = 'sflag constant byte address 0x0 - dummy sync flag']
  #allocation37 [shape = 's32[]', space=sflag, size = 0x4, offset = 0, fixed_abs, tag = 'sflag constant byte address 0x0 - dummy sync flag']
  #allocation38 [shape = 's32[]', space=sflag, size = 0x4, offset = 0, fixed_abs, tag = 'sflag constant byte address 0x0 - dummy sync flag']
  #allocation39 [shape = 's32[]', space=sflag, size = 0x4, offset = 0, fixed_abs, tag = 'sflag constant byte address 0x0 - dummy sync flag']
  #allocation40 [shape = 's32[]', space=sflag, size = 0x4, offset = 0, fixed_abs, tag = 'sflag constant byte address 0x0 - dummy sync flag']
  #allocation41 [shape = 's32[]', space=sflag, size = 0x4, offset = 0, fixed_abs, tag = 'sflag constant byte address 0x0 - dummy sync flag']
  #allocation42 [shape = 's32[]', space=sflag, size = 0x4, offset = 0, fixed_abs, tag = 'sflag constant byte address 0x0 - dummy sync flag']
  #allocation43 [shape = 's32[]', space=sflag, size = 0x4, offset = 0, fixed_abs, tag = 'sflag constant byte address 0x0 - dummy sync flag']
  #allocation44 [shape = 's32[]', space=sflag, size = 0x4, offset = 0, fixed_abs, tag = 'sflag constant byte address 0x0 - dummy sync flag']
  #allocation45 [shape = 's32[]', space=sflag, size = 0x4, offset = 0, fixed_abs, tag = 'sflag constant byte address 0x0 - dummy sync flag']
  #allocation46 [shape = 's32[]', space=sflag, size = 0x4, offset = 0, fixed_abs, tag = 'sflag constant byte address 0x0 - dummy sync flag']
  #allocation47 [shape = 's32[]', space=sflag, size = 0x4, offset = 0, fixed_abs, tag = 'sflag constant byte address 0x0 - dummy sync flag']
  #allocation48 [shape = 's32[]', space=sflag, size = 0x4, offset = 0, fixed_abs, tag = 'sflag constant byte address 0x0 - dummy sync flag']
  #allocation49 [shape = 's32[]', space=sflag, size = 0x4, offset = 0, fixed_abs, tag = 'sflag constant byte address 0x0 - dummy sync flag']
  #allocation50 [shape = 's32[]', space=sflag, size = 0x4, offset = 0, fixed_abs, tag = 'sflag constant byte address 0x0 - dummy sync flag']
  #allocation51 [shape = 's32[]', space=sflag, size = 0x4, offset = 0, fixed_abs, tag = 'sflag constant byte address 0x0 - dummy sync flag']
  #allocation52 [shape = 's32[]', space=sflag, size = 0x4, offset = 0, fixed_abs, tag = 'sflag constant byte address 0x0 - dummy sync flag']
  #allocation53 [shape = 's32[]', space=sflag, size = 0x4, offset = 0, fixed_abs, tag = 'sflag constant byte address 0x0 - dummy sync flag']
  #allocation54 [shape = 's32[]', space=sflag, size = 0x4, offset = 0, fixed_abs, tag = 'sflag constant byte address 0x0 - dummy sync flag']
  #allocation55 [shape = 's32[]', space=sflag, size = 0x4, offset = 0, fixed_abs, tag = 'sflag constant byte address 0x0 - dummy sync flag']
  #allocation56 [shape = 's32[]', space=sflag, size = 0x4, offset = 0, fixed_abs, tag = 'sflag constant byte address 0x0 - dummy sync flag']
  #allocation57 [shape = 's32[]', space=sflag, size = 0x4, offset = 0, fixed_abs, tag = 'sflag constant byte address 0x0 - dummy sync flag']
  #allocation58 [shape = 's32[]', space=sflag, size = 0x4, offset = 0, fixed_abs, tag = 'sflag constant byte address 0x0 - dummy sync flag']
  #allocation59 [shape = 's32[]', space=sflag, size = 0x4, offset = 0, fixed_abs, tag = 'sflag constant byte address 0x0 - dummy sync flag']
  #allocation60 [shape = 's32[]', space=sflag, size = 0x4, offset = 0, fixed_abs, tag = 'sflag constant byte address 0x0 - dummy sync flag']
  #allocation61 [shape = 's32[]', space=sflag, size = 0x4, offset = 0, fixed_abs, tag = 'sflag constant byte address 0x0 - dummy sync flag']
  #allocation62 [shape = 's32[]', space=sflag, size = 0x4, offset = 0, fixed_abs, tag = 'sflag constant byte address 0x0 - dummy sync flag']
  #allocation63 [shape = 's32[]', space=sflag, size = 0x4, offset = 0, fixed_abs, tag = 'sflag constant byte address 0x0 - dummy sync flag']
  #allocation64 [shape = 's32[]', space=sflag, size = 0x4, offset = 0, fixed_abs, tag = 'sflag constant byte address 0x0 - dummy sync flag']
  #allocation65 [shape = 's32[]', space=sflag, size = 0x4, offset = 0, fixed_abs, tag = 'sflag constant byte address 0x0 - dummy sync flag']
  #allocation66 [shape = 's32[]', space=sflag, size = 0x4, offset = 0, fixed_abs, tag = 'sflag constant byte address 0x0 - dummy sync flag']
  #allocation67 [shape = 's32[]', space=sflag, size = 0x4, offset = 0, fixed_abs, tag = 'sflag constant byte address 0x0 - dummy sync flag']
  #allocation68 [shape = 's32[]', space=sflag, size = 0x4, offset = 0, fixed_abs, tag = 'sflag constant byte address 0x0 - dummy sync flag']
  #allocation69 [shape = 's32[]', space=sflag, size = 0x4, offset = 0, fixed_abs, tag = 'sflag constant byte address 0x0 - dummy sync flag']
  #allocation70 [shape = 's32[]', space=sflag, size = 0x4, offset = 0, fixed_abs, tag = 'sflag constant byte address 0x0 - dummy sync flag']
  #allocation71 [shape = 's32[]', space=sflag, size = 0x4, offset = 0, fixed_abs, tag = 'sflag constant byte address 0x0 - dummy sync flag']
  #allocation72 [shape = 's32[]', space=sflag, size = 0x4, offset = 0, fixed_abs, tag = 'sflag constant byte address 0x0 - dummy sync flag']
  %s0 = inlined_call_operand.hbm [shape: s32[96], index: 0, kind: input, shape index: {}]
  %s1 = inlined_call_operand.hbm [shape: f32[128,128], index: 1, kind: input, shape index: {}]
  %s2 = inlined_call_operand.hbm [shape: f32[96,128], index: 2, kind: output, shape index: {}]
  %s3 = sld [smem:[#allocation0]]
  $region281: #{tpu_custom_call.1} parent=0
    _
  %s5 = ssub.s32 1, %s3
  %s6 = scalar_select 0, %s5, %s3
  %s8 = sshll.u32 %s0, 4
  %s9 = int_to_ptr.hbm [resolvable:$true] %s8
  %11 = dma.hbm_to_smem %s9, 16, [#allocation4], [#allocation3]
  %13 = dma.done [#allocation3], 16
  %14 = sfence
  $region1: #{tpu_custom_call.1} parent=0
    #allocation5 [shape = 'u8[32768]{0}', space=vmem, size = 0x8000, scoped, tag = 'output window, operand 0']
    #allocation6 [shape = 's32[2]{0}', space=sflag, size = 0x8, scoped, tag = 'scoped memory for tpu_custom_call.1']
    %15 = vsyncpa [#allocation6], 0
    %s16 = scalar_lea.sflag [#allocation6], 1
    %17 = vsyncpa %s16, 0
    loop: start=0, step=1, limit=4
    $region2: #{tpu_custom_call.1} parent=1 // loop_pre_header
      _
    $region3: #{tpu_custom_call.1} parent=1 // loop_header
      %s19 = sphi 0, %s23
      %p20 = scmp.ge.s32.totalorder %s19, 4
      %s28 = sphi 0, %s30
      %s31 = sphi 0, %s28
      %s41 = sphi 0, %s31
    $region4: #{tpu_custom_call.1} parent=1 // loop_header_branch
      %22 = sbr.rel (%p20) target = $region8
    $region5: #{tpu_custom_call.1} parent=1 // loop_body
      %s24 = ssub.s32 %s19, 1
      %s25 = sadd.s32 %s19, 1
      %s26 = ssub.s32 %s19, %s25
      %p27 = scmp.eq.s32.totalorder %s26, 0
      %s29 = sadd.s32 %s28, 1
      %s30 = scalar_select %p27, %s28, %s29
      %p32 = pneg %p27
      %p33 = scmp.eq.s32.totalorder %s19, 2
      %p34 = por %p32, %p33
      %p35 = scmp.ne.s32.totalorder %s28, %s31
      %p36 = scmp.eq.s32.totalorder %s19, 0
      %p37 = por %p35, %p36
      %p38 = scmp.ne.s32.totalorder %s28, %s31
      %p39 = scmp.eq.s32.totalorder %s24, 2
      %p40 = por %p38, %p39
      %p42 = scmp.ne.s32.totalorder %s31, %s41
      %p43 = scmp.eq.s32.totalorder %s24, 0
      %p44 = por %p42, %p43
      %p45 = scmp.lt.s32.totalorder %s19, 3
      // Predicated region
      $region9: #{tpu_custom_call.1} parent=5 // pred_check
        %p46 = pneg %p45
      $region10: #{tpu_custom_call.1} parent=5 // pred_check_branch
        %48 = sbr.rel (%p46) target = $region12
      $region11: #{tpu_custom_call.1} parent=5 // pred_region
        %p49 = pneg %p37
        %p50 = pneg %p34
        %s51 = sand.u32 %s28, 1
        %s52 = scalar_lea.sflag [#allocation6], %s51
        %s53 = sand.u32 %s28, 1
        %s54 = smul.addr %s53, 32
        %s55 = scalar_lea.vmem [#allocation5], %s54
        %s56 = smul.u32 4, %s19
        %s57 = smul.u32 %s19, 32
        %s58 = sld [smem:[#allocation4 + %s57]]
        %s59 = sadd.s32 %s57, 1
        %s60 = sld [smem:[#allocation4 + %s59]]
        %s61 = sadd.s32 %s57, 2
        %s62 = sld [smem:[#allocation4 + %s61]]
        %s63 = sadd.s32 %s57, 3
        %s64 = sld [smem:[#allocation4 + %s63]]
        %s65 = sadd.s32 %s57, 4
        %s66 = sld [smem:[#allocation4 + %s65]]
        %s67 = sadd.s32 %s57, 5
        %s68 = sld [smem:[#allocation4 + %s67]]
        %s69 = sadd.s32 %s57, 6
        %s70 = sld [smem:[#allocation4 + %s69]]
        %s71 = sadd.s32 %s57, 7
        %s72 = sld [smem:[#allocation4 + %s71]]
        %s73 = sadd.s32 %s57, 8
        %s74 = sld [smem:[#allocation4 + %s73]]
        %s75 = sadd.s32 %s57, 9
        %s76 = sld [smem:[#allocation4 + %s75]]
        %s77 = sadd.s32 %s57, 10
        %s78 = sld [smem:[#allocation4 + %s77]]
        %s79 = sadd.s32 %s57, 11
        %s80 = sld [smem:[#allocation4 + %s79]]
        %s81 = sadd.s32 %s57, 12
        %s82 = sld [smem:[#allocation4 + %s81]]
        %s83 = sadd.s32 %s57, 13
        %s84 = sld [smem:[#allocation4 + %s83]]
        %s85 = sadd.s32 %s57, 14
        %s86 = sld [smem:[#allocation4 + %s85]]
        %s87 = sadd.s32 %s57, 15
        %s88 = sld [smem:[#allocation4 + %s87]]
        %s89 = sadd.s32 %s57, 16
        %s90 = sld [smem:[#allocation4 + %s89]]
        %s91 = sadd.s32 %s57, 17
        %s92 = sld [smem:[#allocation4 + %s91]]
        %s93 = sadd.s32 %s57, 18
        %s94 = sld [smem:[#allocation4 + %s93]]
        %s95 = sadd.s32 %s57, 19
        %s96 = sld [smem:[#allocation4 + %s95]]
        %s97 = sadd.s32 %s57, 20
        %s98 = sld [smem:[#allocation4 + %s97]]
        %s99 = sadd.s32 %s57, 21
        %s100 = sld [smem:[#allocation4 + %s99]]
        %s101 = sadd.s32 %s57, 22
        %s102 = sld [smem:[#allocation4 + %s101]]
        %s103 = sadd.s32 %s57, 23
        %s104 = sld [smem:[#allocation4 + %s103]]
        %s105 = sadd.s32 %s57, 24
        %s106 = sld [smem:[#allocation4 + %s105]]
        %s107 = sadd.s32 %s57, 25
        %s108 = sld [smem:[#allocation4 + %s107]]
        %s109 = sadd.s32 %s57, 26
        %s110 = sld [smem:[#allocation4 + %s109]]
        %s111 = sadd.s32 %s57, 27
        %s112 = sld [smem:[#allocation4 + %s111]]
        %s113 = sadd.s32 %s57, 28
        %s114 = sld [smem:[#allocation4 + %s113]]
        %s115 = sadd.s32 %s57, 29
        %s116 = sld [smem:[#allocation4 + %s115]]
        %s117 = sadd.s32 %s57, 30
        %s118 = sld [smem:[#allocation4 + %s117]]
        %s119 = sadd.s32 %s57, 31
        %s120 = sld [smem:[#allocation4 + %s119]]
        %p121 = scmp.gt.s32.totalorder %s58, 0
        %s122 = scalar_select %p121, %s58, 0
        %p123 = scmp.lt.s32.totalorder %s122, 127
        %s124 = scalar_select %p123, %s122, 127
        %s125 = scalar_lea.hbm %s1, %s124
        // Predicated region
        $region13: #{tpu_custom_call.1} parent=11 // pred_check
          _
        $region14: #{tpu_custom_call.1} parent=11 // pred_check_branch
          %127 = sbr.rel target = $region16
        $region15: #{tpu_custom_call.1} parent=11 // pred_region
          %128 = sst [smem:[#allocation9]] [#allocation8]
          %129 = sst [smem:[#allocation10]] [#allocation7]
        $region16: #{tpu_custom_call.1} parent=11 // pred_fallthru
          _
        %131 = shalt.err (0)
        %s133 = sshll.u32 %s125, 4
        %s134 = int_to_ptr.hbm [resolvable:$true] %s133
        %s135 = sshll.u32 %s55, 4
        %s136 = int_to_ptr.vmem [resolvable:$true] %s135
        %138 = dma.hbm_to_vmem [thread:$0]  %s134, 16, %s136, [#allocation2]
        %p139 = scmp.gt.s32.totalorder %s60, 0
        %s140 = scalar_select %p139, %s60, 0
        %p141 = scmp.lt.s32.totalorder %s140, 127
        %s142 = scalar_select %p141, %s140, 127
        %s143 = scalar_lea.hbm %s1, %s142
        %s144 = scalar_lea.vmem %s55, 1 [#allocation5]
        %s145 = scalar_lea.sflag [#allocation2], 1
        // Predicated region
        $region17: #{tpu_custom_call.1} parent=11 // pred_check
          _
        $region18: #{tpu_custom_call.1} parent=11 // pred_check_branch
          %147 = sbr.rel target = $region20
        $region19: #{tpu_custom_call.1} parent=11 // pred_region
          %148 = sst [smem:[#allocation9]] [#allocation12]
          %149 = sst [smem:[#allocation10]] [#allocation11]
        $region20: #{tpu_custom_call.1} parent=11 // pred_fallthru
          _
        %151 = shalt.err (0)
        %s153 = sshll.u32 %s143, 4
        %s154 = int_to_ptr.hbm [resolvable:$true] %s153
        %s155 = sshll.u32 %s144, 4
        %s156 = int_to_ptr.vmem [resolvable:$true] %s155
        %158 = dma.hbm_to_vmem [thread:$0]  %s154, 16, %s156, %s145
        %p159 = scmp.gt.s32.totalorder %s62, 0
        %s160 = scalar_select %p159, %s62, 0
        %p161 = scmp.lt.s32.totalorder %s160, 127
        %s162 = scalar_select %p161, %s160, 127
        %s163 = scalar_lea.hbm %s1, %s162
        %s164 = scalar_lea.vmem %s55, 2 [#allocation5]
        %s165 = scalar_lea.sflag [#allocation2], 2
        // Predicated region
        $region21: #{tpu_custom_call.1} parent=11 // pred_check
          _
        $region22: #{tpu_custom_call.1} parent=11 // pred_check_branch
          %167 = sbr.rel target = $region24
        $region23: #{tpu_custom_call.1} parent=11 // pred_region
          %168 = sst [smem:[#allocation9]] [#allocation14]
          %169 = sst [smem:[#allocation10]] [#allocation13]
        $region24: #{tpu_custom_call.1} parent=11 // pred_fallthru
          _
        %171 = shalt.err (0)
        %s173 = sshll.u32 %s163, 4
        %s174 = int_to_ptr.hbm [resolvable:$true] %s173
        %s175 = sshll.u32 %s164, 4
        %s176 = int_to_ptr.vmem [resolvable:$true] %s175
        %178 = dma.hbm_to_vmem [thread:$0]  %s174, 16, %s176, %s165
        %p179 = scmp.gt.s32.totalorder %s64, 0
        %s180 = scalar_select %p179, %s64, 0
        %p181 = scmp.lt.s32.totalorder %s180, 127
        %s182 = scalar_select %p181, %s180, 127
        %s183 = scalar_lea.hbm %s1, %s182
        %s184 = scalar_lea.vmem %s55, 3 [#allocation5]
        %s185 = scalar_lea.sflag [#allocation2], 3
        // Predicated region
        $region25: #{tpu_custom_call.1} parent=11 // pred_check
          _
        $region26: #{tpu_custom_call.1} parent=11 // pred_check_branch
          %187 = sbr.rel target = $region28
        $region27: #{tpu_custom_call.1} parent=11 // pred_region
          %188 = sst [smem:[#allocation9]] [#allocation16]
          %189 = sst [smem:[#allocation10]] [#allocation15]
        $region28: #{tpu_custom_call.1} parent=11 // pred_fallthru
          _
        %191 = shalt.err (0)
        %s193 = sshll.u32 %s183, 4
        %s194 = int_to_ptr.hbm [resolvable:$true] %s193
        %s195 = sshll.u32 %s184, 4
        %s196 = int_to_ptr.vmem [resolvable:$true] %s195
        %198 = dma.hbm_to_vmem [thread:$0]  %s194, 16, %s196, %s185
        %p199 = scmp.gt.s32.totalorder %s66, 0
        %s200 = scalar_select %p199, %s66, 0
        %p201 = scmp.lt.s32.totalorder %s200, 127
        %s202 = scalar_select %p201, %s200, 127
        %s203 = scalar_lea.hbm %s1, %s202
        %s204 = scalar_lea.vmem %s55, 4 [#allocation5]
        %s205 = scalar_lea.sflag [#allocation2], 4
        // Predicated region
        $region29: #{tpu_custom_call.1} parent=11 // pred_check
          _
        $region30: #{tpu_custom_call.1} parent=11 // pred_check_branch
          %207 = sbr.rel target = $region32
        $region31: #{tpu_custom_call.1} parent=11 // pred_region
          %208 = sst [smem:[#allocation9]] [#allocation18]
          %209 = sst [smem:[#allocation10]] [#allocation17]
        $region32: #{tpu_custom_call.1} parent=11 // pred_fallthru
          _
        %211 = shalt.err (0)
        %s213 = sshll.u32 %s203, 4
        %s214 = int_to_ptr.hbm [resolvable:$true] %s213
        %s215 = sshll.u32 %s204, 4
        %s216 = int_to_ptr.vmem [resolvable:$true] %s215
        %218 = dma.hbm_to_vmem [thread:$0]  %s214, 16, %s216, %s205
        %p219 = scmp.gt.s32.totalorder %s68, 0
        %s220 = scalar_select %p219, %s68, 0
        %p221 = scmp.lt.s32.totalorder %s220, 127
        %s222 = scalar_select %p221, %s220, 127
        %s223 = scalar_lea.hbm %s1, %s222
        %s224 = scalar_lea.vmem %s55, 5 [#allocation5]
        %s225 = scalar_lea.sflag [#allocation2], 5
        // Predicated region
        $region33: #{tpu_custom_call.1} parent=11 // pred_check
          _
        $region34: #{tpu_custom_call.1} parent=11 // pred_check_branch
          %227 = sbr.rel target = $region36
        $region35: #{tpu_custom_call.1} parent=11 // pred_region
          %228 = sst [smem:[#allocation9]] [#allocation20]
          %229 = sst [smem:[#allocation10]] [#allocation19]
        $region36: #{tpu_custom_call.1} parent=11 // pred_fallthru
          _
        %231 = shalt.err (0)
        %s233 = sshll.u32 %s223, 4
        %s234 = int_to_ptr.hbm [resolvable:$true] %s233
        %s235 = sshll.u32 %s224, 4
        %s236 = int_to_ptr.vmem [resolvable:$true] %s235
        %238 = dma.hbm_to_vmem [thread:$0]  %s234, 16, %s236, %s225
        %p239 = scmp.gt.s32.totalorder %s70, 0
        %s240 = scalar_select %p239, %s70, 0
        %p241 = scmp.lt.s32.totalorder %s240, 127
        %s242 = scalar_select %p241, %s240, 127
        %s243 = scalar_lea.hbm %s1, %s242
        %s244 = scalar_lea.vmem %s55, 6 [#allocation5]
        %s245 = scalar_lea.sflag [#allocation2], 6
        // Predicated region
        $region37: #{tpu_custom_call.1} parent=11 // pred_check
          _
        $region38: #{tpu_custom_call.1} parent=11 // pred_check_branch
          %247 = sbr.rel target = $region40
        $region39: #{tpu_custom_call.1} parent=11 // pred_region
          %248 = sst [smem:[#allocation9]] [#allocation22]
          %249 = sst [smem:[#allocation10]] [#allocation21]
        $region40: #{tpu_custom_call.1} parent=11 // pred_fallthru
          _
        %251 = shalt.err (0)
        %s253 = sshll.u32 %s243, 4
        %s254 = int_to_ptr.hbm [resolvable:$true] %s253
        %s255 = sshll.u32 %s244, 4
        %s256 = int_to_ptr.vmem [resolvable:$true] %s255
        %258 = dma.hbm_to_vmem [thread:$0]  %s254, 16, %s256, %s245
        %p259 = scmp.gt.s32.totalorder %s72, 0
        %s260 = scalar_select %p259, %s72, 0
        %p261 = scmp.lt.s32.totalorder %s260, 127
        %s262 = scalar_select %p261, %s260, 127
        %s263 = scalar_lea.hbm %s1, %s262
        %s264 = scalar_lea.vmem %s55, 7 [#allocation5]
        %s265 = scalar_lea.sflag [#allocation2], 7
        // Predicated region
        $region41: #{tpu_custom_call.1} parent=11 // pred_check
          _
        $region42: #{tpu_custom_call.1} parent=11 // pred_check_branch
          %267 = sbr.rel target = $region44
        $region43: #{tpu_custom_call.1} parent=11 // pred_region
          %268 = sst [smem:[#allocation9]] [#allocation24]
          %269 = sst [smem:[#allocation10]] [#allocation23]
        $region44: #{tpu_custom_call.1} parent=11 // pred_fallthru
          _
        %271 = shalt.err (0)
        %s273 = sshll.u32 %s263, 4
        %s274 = int_to_ptr.hbm [resolvable:$true] %s273
        %s275 = sshll.u32 %s264, 4
        %s276 = int_to_ptr.vmem [resolvable:$true] %s275
        %278 = dma.hbm_to_vmem [thread:$0]  %s274, 16, %s276, %s265
        %p279 = scmp.gt.s32.totalorder %s74, 0
        %s280 = scalar_select %p279, %s74, 0
        %p281 = scmp.lt.s32.totalorder %s280, 127
        %s282 = scalar_select %p281, %s280, 127
        %s283 = scalar_lea.hbm %s1, %s282
        %s284 = scalar_lea.vmem %s55, 8 [#allocation5]
        %s285 = scalar_lea.sflag [#allocation2], 8
        // Predicated region
        $region45: #{tpu_custom_call.1} parent=11 // pred_check
          _
        $region46: #{tpu_custom_call.1} parent=11 // pred_check_branch
          %287 = sbr.rel target = $region48
        $region47: #{tpu_custom_call.1} parent=11 // pred_region
          %288 = sst [smem:[#allocation9]] [#allocation26]
          %289 = sst [smem:[#allocation10]] [#allocation25]
        $region48: #{tpu_custom_call.1} parent=11 // pred_fallthru
          _
        %291 = shalt.err (0)
        %s293 = sshll.u32 %s283, 4
        %s294 = int_to_ptr.hbm [resolvable:$true] %s293
        %s295 = sshll.u32 %s284, 4
        %s296 = int_to_ptr.vmem [resolvable:$true] %s295
        %298 = dma.hbm_to_vmem [thread:$0]  %s294, 16, %s296, %s285
        %p299 = scmp.gt.s32.totalorder %s76, 0
        %s300 = scalar_select %p299, %s76, 0
        %p301 = scmp.lt.s32.totalorder %s300, 127
        %s302 = scalar_select %p301, %s300, 127
        %s303 = scalar_lea.hbm %s1, %s302
        %s304 = scalar_lea.vmem %s55, 9 [#allocation5]
        %s305 = scalar_lea.sflag [#allocation2], 9
        // Predicated region
        $region49: #{tpu_custom_call.1} parent=11 // pred_check
          _
        $region50: #{tpu_custom_call.1} parent=11 // pred_check_branch
          %307 = sbr.rel target = $region52
        $region51: #{tpu_custom_call.1} parent=11 // pred_region
          %308 = sst [smem:[#allocation9]] [#allocation28]
          %309 = sst [smem:[#allocation10]] [#allocation27]
        $region52: #{tpu_custom_call.1} parent=11 // pred_fallthru
          _
        %311 = shalt.err (0)
        %s313 = sshll.u32 %s303, 4
        %s314 = int_to_ptr.hbm [resolvable:$true] %s313
        %s315 = sshll.u32 %s304, 4
        %s316 = int_to_ptr.vmem [resolvable:$true] %s315
        %318 = dma.hbm_to_vmem [thread:$0]  %s314, 16, %s316, %s305
        %p319 = scmp.gt.s32.totalorder %s78, 0
        %s320 = scalar_select %p319, %s78, 0
        %p321 = scmp.lt.s32.totalorder %s320, 127
        %s322 = scalar_select %p321, %s320, 127
        %s323 = scalar_lea.hbm %s1, %s322
        %s324 = scalar_lea.vmem %s55, 10 [#allocation5]
        %s325 = scalar_lea.sflag [#allocation2], 10
        // Predicated region
        $region53: #{tpu_custom_call.1} parent=11 // pred_check
          _
        $region54: #{tpu_custom_call.1} parent=11 // pred_check_branch
          %327 = sbr.rel target = $region56
        $region55: #{tpu_custom_call.1} parent=11 // pred_region
          %328 = sst [smem:[#allocation9]] [#allocation30]
          %329 = sst [smem:[#allocation10]] [#allocation29]
        $region56: #{tpu_custom_call.1} parent=11 // pred_fallthru
          _
        %331 = shalt.err (0)
        %s333 = sshll.u32 %s323, 4
        %s334 = int_to_ptr.hbm [resolvable:$true] %s333
        %s335 = sshll.u32 %s324, 4
        %s336 = int_to_ptr.vmem [resolvable:$true] %s335
        %338 = dma.hbm_to_vmem [thread:$0]  %s334, 16, %s336, %s325
        %p339 = scmp.gt.s32.totalorder %s80, 0
        %s340 = scalar_select %p339, %s80, 0
        %p341 = scmp.lt.s32.totalorder %s340, 127
        %s342 = scalar_select %p341, %s340, 127
        %s343 = scalar_lea.hbm %s1, %s342
        %s344 = scalar_lea.vmem %s55, 11 [#allocation5]
        %s345 = scalar_lea.sflag [#allocation2], 11
        // Predicated region
        $region57: #{tpu_custom_call.1} parent=11 // pred_check
          _
        $region58: #{tpu_custom_call.1} parent=11 // pred_check_branch
          %347 = sbr.rel target = $region60
        $region59: #{tpu_custom_call.1} parent=11 // pred_region
          %348 = sst [smem:[#allocation9]] [#allocation32]
          %349 = sst [smem:[#allocation10]] [#allocation31]
        $region60: #{tpu_custom_call.1} parent=11 // pred_fallthru
          _
        %351 = shalt.err (0)
        %s353 = sshll.u32 %s343, 4
        %s354 = int_to_ptr.hbm [resolvable:$true] %s353
        %s355 = sshll.u32 %s344, 4
        %s356 = int_to_ptr.vmem [resolvable:$true] %s355
        %358 = dma.hbm_to_vmem [thread:$0]  %s354, 16, %s356, %s345
        %p359 = scmp.gt.s32.totalorder %s82, 0
        %s360 = scalar_select %p359, %s82, 0
        %p361 = scmp.lt.s32.totalorder %s360, 127
        %s362 = scalar_select %p361, %s360, 127
        %s363 = scalar_lea.hbm %s1, %s362
        %s364 = scalar_lea.vmem %s55, 12 [#allocation5]
        %s365 = scalar_lea.sflag [#allocation2], 12
        // Predicated region
        $region61: #{tpu_custom_call.1} parent=11 // pred_check
          _
        $region62: #{tpu_custom_call.1} parent=11 // pred_check_branch
          %367 = sbr.rel target = $region64
        $region63: #{tpu_custom_call.1} parent=11 // pred_region
          %368 = sst [smem:[#allocation9]] [#allocation34]
          %369 = sst [smem:[#allocation10]] [#allocation33]
        $region64: #{tpu_custom_call.1} parent=11 // pred_fallthru
          _
        %371 = shalt.err (0)
        %s373 = sshll.u32 %s363, 4
        %s374 = int_to_ptr.hbm [resolvable:$true] %s373
        %s375 = sshll.u32 %s364, 4
        %s376 = int_to_ptr.vmem [resolvable:$true] %s375
        %378 = dma.hbm_to_vmem [thread:$0]  %s374, 16, %s376, %s365
        %p379 = scmp.gt.s32.totalorder %s84, 0
        %s380 = scalar_select %p379, %s84, 0
        %p381 = scmp.lt.s32.totalorder %s380, 127
        %s382 = scalar_select %p381, %s380, 127
        %s383 = scalar_lea.hbm %s1, %s382
        %s384 = scalar_lea.vmem %s55, 13 [#allocation5]
        %s385 = scalar_lea.sflag [#allocation2], 13
        // Predicated region
        $region65: #{tpu_custom_call.1} parent=11 // pred_check
          _
        $region66: #{tpu_custom_call.1} parent=11 // pred_check_branch
          %387 = sbr.rel target = $region68
        $region67: #{tpu_custom_call.1} parent=11 // pred_region
          %388 = sst [smem:[#allocation9]] [#allocation36]
          %389 = sst [smem:[#allocation10]] [#allocation35]
        $region68: #{tpu_custom_call.1} parent=11 // pred_fallthru
          _
        %391 = shalt.err (0)
        %s393 = sshll.u32 %s383, 4
        %s394 = int_to_ptr.hbm [resolvable:$true] %s393
        %s395 = sshll.u32 %s384, 4
        %s396 = int_to_ptr.vmem [resolvable:$true] %s395
        %398 = dma.hbm_to_vmem [thread:$0]  %s394, 16, %s396, %s385
        %p399 = scmp.gt.s32.totalorder %s86, 0
        %s400 = scalar_select %p399, %s86, 0
        %p401 = scmp.lt.s32.totalorder %s400, 127
        %s402 = scalar_select %p401, %s400, 127
        %s403 = scalar_lea.hbm %s1, %s402
        %s404 = scalar_lea.vmem %s55, 14 [#allocation5]
        %s405 = scalar_lea.sflag [#allocation2], 14
        // Predicated region
        $region69: #{tpu_custom_call.1} parent=11 // pred_check
          _
        $region70: #{tpu_custom_call.1} parent=11 // pred_check_branch
          %407 = sbr.rel target = $region72
        $region71: #{tpu_custom_call.1} parent=11 // pred_region
          %408 = sst [smem:[#allocation9]] [#allocation38]
          %409 = sst [smem:[#allocation10]] [#allocation37]
        $region72: #{tpu_custom_call.1} parent=11 // pred_fallthru
          _
        %411 = shalt.err (0)
        %s413 = sshll.u32 %s403, 4
        %s414 = int_to_ptr.hbm [resolvable:$true] %s413
        %s415 = sshll.u32 %s404, 4
        %s416 = int_to_ptr.vmem [resolvable:$true] %s415
        %418 = dma.hbm_to_vmem [thread:$0]  %s414, 16, %s416, %s405
        %p419 = scmp.gt.s32.totalorder %s88, 0
        %s420 = scalar_select %p419, %s88, 0
        %p421 = scmp.lt.s32.totalorder %s420, 127
        %s422 = scalar_select %p421, %s420, 127
        %s423 = scalar_lea.hbm %s1, %s422
        %s424 = scalar_lea.vmem %s55, 15 [#allocation5]
        %s425 = scalar_lea.sflag [#allocation2], 15
        // Predicated region
        $region73: #{tpu_custom_call.1} parent=11 // pred_check
          _
        $region74: #{tpu_custom_call.1} parent=11 // pred_check_branch
          %427 = sbr.rel target = $region76
        $region75: #{tpu_custom_call.1} parent=11 // pred_region
          %428 = sst [smem:[#allocation9]] [#allocation40]
          %429 = sst [smem:[#allocation10]] [#allocation39]
        $region76: #{tpu_custom_call.1} parent=11 // pred_fallthru
          _
        %431 = shalt.err (0)
        %s433 = sshll.u32 %s423, 4
        %s434 = int_to_ptr.hbm [resolvable:$true] %s433
        %s435 = sshll.u32 %s424, 4
        %s436 = int_to_ptr.vmem [resolvable:$true] %s435
        %438 = dma.hbm_to_vmem [thread:$0]  %s434, 16, %s436, %s425
        %p439 = scmp.gt.s32.totalorder %s90, 0
        %s440 = scalar_select %p439, %s90, 0
        %p441 = scmp.lt.s32.totalorder %s440, 127
        %s442 = scalar_select %p441, %s440, 127
        %s443 = scalar_lea.hbm %s1, %s442
        %s444 = scalar_lea.vmem %s55, 16 [#allocation5]
        %s445 = scalar_lea.sflag [#allocation2], 16
        // Predicated region
        $region77: #{tpu_custom_call.1} parent=11 // pred_check
          _
        $region78: #{tpu_custom_call.1} parent=11 // pred_check_branch
          %447 = sbr.rel target = $region80
        $region79: #{tpu_custom_call.1} parent=11 // pred_region
          %448 = sst [smem:[#allocation9]] [#allocation42]
          %449 = sst [smem:[#allocation10]] [#allocation41]
        $region80: #{tpu_custom_call.1} parent=11 // pred_fallthru
          _
        %451 = shalt.err (0)
        %s453 = sshll.u32 %s443, 4
        %s454 = int_to_ptr.hbm [resolvable:$true] %s453
        %s455 = sshll.u32 %s444, 4
        %s456 = int_to_ptr.vmem [resolvable:$true] %s455
        %458 = dma.hbm_to_vmem [thread:$0]  %s454, 16, %s456, %s445
        %p459 = scmp.gt.s32.totalorder %s92, 0
        %s460 = scalar_select %p459, %s92, 0
        %p461 = scmp.lt.s32.totalorder %s460, 127
        %s462 = scalar_select %p461, %s460, 127
        %s463 = scalar_lea.hbm %s1, %s462
        %s464 = scalar_lea.vmem %s55, 17 [#allocation5]
        %s465 = scalar_lea.sflag [#allocation2], 17
        // Predicated region
        $region81: #{tpu_custom_call.1} parent=11 // pred_check
          _
        $region82: #{tpu_custom_call.1} parent=11 // pred_check_branch
          %467 = sbr.rel target = $region84
        $region83: #{tpu_custom_call.1} parent=11 // pred_region
          %468 = sst [smem:[#allocation9]] [#allocation44]
          %469 = sst [smem:[#allocation10]] [#allocation43]
        $region84: #{tpu_custom_call.1} parent=11 // pred_fallthru
          _
        %471 = shalt.err (0)
        %s473 = sshll.u32 %s463, 4
        %s474 = int_to_ptr.hbm [resolvable:$true] %s473
        %s475 = sshll.u32 %s464, 4
        %s476 = int_to_ptr.vmem [resolvable:$true] %s475
        %478 = dma.hbm_to_vmem [thread:$0]  %s474, 16, %s476, %s465
        %p479 = scmp.gt.s32.totalorder %s94, 0
        %s480 = scalar_select %p479, %s94, 0
        %p481 = scmp.lt.s32.totalorder %s480, 127
        %s482 = scalar_select %p481, %s480, 127
        %s483 = scalar_lea.hbm %s1, %s482
        %s484 = scalar_lea.vmem %s55, 18 [#allocation5]
        %s485 = scalar_lea.sflag [#allocation2], 18
        // Predicated region
        $region85: #{tpu_custom_call.1} parent=11 // pred_check
          _
        $region86: #{tpu_custom_call.1} parent=11 // pred_check_branch
          %487 = sbr.rel target = $region88
        $region87: #{tpu_custom_call.1} parent=11 // pred_region
          %488 = sst [smem:[#allocation9]] [#allocation46]
          %489 = sst [smem:[#allocation10]] [#allocation45]
        $region88: #{tpu_custom_call.1} parent=11 // pred_fallthru
          _
        %491 = shalt.err (0)
        %s493 = sshll.u32 %s483, 4
        %s494 = int_to_ptr.hbm [resolvable:$true] %s493
        %s495 = sshll.u32 %s484, 4
        %s496 = int_to_ptr.vmem [resolvable:$true] %s495
        %498 = dma.hbm_to_vmem [thread:$0]  %s494, 16, %s496, %s485
        %p499 = scmp.gt.s32.totalorder %s96, 0
        %s500 = scalar_select %p499, %s96, 0
        %p501 = scmp.lt.s32.totalorder %s500, 127
        %s502 = scalar_select %p501, %s500, 127
        %s503 = scalar_lea.hbm %s1, %s502
        %s504 = scalar_lea.vmem %s55, 19 [#allocation5]
        %s505 = scalar_lea.sflag [#allocation2], 19
        // Predicated region
        $region89: #{tpu_custom_call.1} parent=11 // pred_check
          _
        $region90: #{tpu_custom_call.1} parent=11 // pred_check_branch
          %507 = sbr.rel target = $region92
        $region91: #{tpu_custom_call.1} parent=11 // pred_region
          %508 = sst [smem:[#allocation9]] [#allocation48]
          %509 = sst [smem:[#allocation10]] [#allocation47]
        $region92: #{tpu_custom_call.1} parent=11 // pred_fallthru
          _
        %511 = shalt.err (0)
        %s513 = sshll.u32 %s503, 4
        %s514 = int_to_ptr.hbm [resolvable:$true] %s513
        %s515 = sshll.u32 %s504, 4
        %s516 = int_to_ptr.vmem [resolvable:$true] %s515
        %518 = dma.hbm_to_vmem [thread:$0]  %s514, 16, %s516, %s505
        %p519 = scmp.gt.s32.totalorder %s98, 0
        %s520 = scalar_select %p519, %s98, 0
        %p521 = scmp.lt.s32.totalorder %s520, 127
        %s522 = scalar_select %p521, %s520, 127
        %s523 = scalar_lea.hbm %s1, %s522
        %s524 = scalar_lea.vmem %s55, 20 [#allocation5]
        %s525 = scalar_lea.sflag [#allocation2], 20
        // Predicated region
        $region93: #{tpu_custom_call.1} parent=11 // pred_check
          _
        $region94: #{tpu_custom_call.1} parent=11 // pred_check_branch
          %527 = sbr.rel target = $region96
        $region95: #{tpu_custom_call.1} parent=11 // pred_region
          %528 = sst [smem:[#allocation9]] [#allocation50]
          %529 = sst [smem:[#allocation10]] [#allocation49]
        $region96: #{tpu_custom_call.1} parent=11 // pred_fallthru
          _
        %531 = shalt.err (0)
        %s533 = sshll.u32 %s523, 4
        %s534 = int_to_ptr.hbm [resolvable:$true] %s533
        %s535 = sshll.u32 %s524, 4
        %s536 = int_to_ptr.vmem [resolvable:$true] %s535
        %538 = dma.hbm_to_vmem [thread:$0]  %s534, 16, %s536, %s525
        %p539 = scmp.gt.s32.totalorder %s100, 0
        %s540 = scalar_select %p539, %s100, 0
        %p541 = scmp.lt.s32.totalorder %s540, 127
        %s542 = scalar_select %p541, %s540, 127
        %s543 = scalar_lea.hbm %s1, %s542
        %s544 = scalar_lea.vmem %s55, 21 [#allocation5]
        %s545 = scalar_lea.sflag [#allocation2], 21
        // Predicated region
        $region97: #{tpu_custom_call.1} parent=11 // pred_check
          _
        $region98: #{tpu_custom_call.1} parent=11 // pred_check_branch
          %547 = sbr.rel target = $region100
        $region99: #{tpu_custom_call.1} parent=11 // pred_region
          %548 = sst [smem:[#allocation9]] [#allocation52]
          %549 = sst [smem:[#allocation10]] [#allocation51]
        $region100: #{tpu_custom_call.1} parent=11 // pred_fallthru
          _
        %551 = shalt.err (0)
        %s553 = sshll.u32 %s543, 4
        %s554 = int_to_ptr.hbm [resolvable:$true] %s553
        %s555 = sshll.u32 %s544, 4
        %s556 = int_to_ptr.vmem [resolvable:$true] %s555
        %558 = dma.hbm_to_vmem [thread:$0]  %s554, 16, %s556, %s545
        %p559 = scmp.gt.s32.totalorder %s102, 0
        %s560 = scalar_select %p559, %s102, 0
        %p561 = scmp.lt.s32.totalorder %s560, 127
        %s562 = scalar_select %p561, %s560, 127
        %s563 = scalar_lea.hbm %s1, %s562
        %s564 = scalar_lea.vmem %s55, 22 [#allocation5]
        %s565 = scalar_lea.sflag [#allocation2], 22
        // Predicated region
        $region101: #{tpu_custom_call.1} parent=11 // pred_check
          _
        $region102: #{tpu_custom_call.1} parent=11 // pred_check_branch
          %567 = sbr.rel target = $region104
        $region103: #{tpu_custom_call.1} parent=11 // pred_region
          %568 = sst [smem:[#allocation9]] [#allocation54]
          %569 = sst [smem:[#allocation10]] [#allocation53]
        $region104: #{tpu_custom_call.1} parent=11 // pred_fallthru
          _
        %571 = shalt.err (0)
        %s573 = sshll.u32 %s563, 4
        %s574 = int_to_ptr.hbm [resolvable:$true] %s573
        %s575 = sshll.u32 %s564, 4
        %s576 = int_to_ptr.vmem [resolvable:$true] %s575
        %578 = dma.hbm_to_vmem [thread:$0]  %s574, 16, %s576, %s565
        %p579 = scmp.gt.s32.totalorder %s104, 0
        %s580 = scalar_select %p579, %s104, 0
        %p581 = scmp.lt.s32.totalorder %s580, 127
        %s582 = scalar_select %p581, %s580, 127
        %s583 = scalar_lea.hbm %s1, %s582
        %s584 = scalar_lea.vmem %s55, 23 [#allocation5]
        %s585 = scalar_lea.sflag [#allocation2], 23
        // Predicated region
        $region105: #{tpu_custom_call.1} parent=11 // pred_check
          _
        $region106: #{tpu_custom_call.1} parent=11 // pred_check_branch
          %587 = sbr.rel target = $region108
        $region107: #{tpu_custom_call.1} parent=11 // pred_region
          %588 = sst [smem:[#allocation9]] [#allocation56]
          %589 = sst [smem:[#allocation10]] [#allocation55]
        $region108: #{tpu_custom_call.1} parent=11 // pred_fallthru
          _
        %591 = shalt.err (0)
        %s593 = sshll.u32 %s583, 4
        %s594 = int_to_ptr.hbm [resolvable:$true] %s593
        %s595 = sshll.u32 %s584, 4
        %s596 = int_to_ptr.vmem [resolvable:$true] %s595
        %598 = dma.hbm_to_vmem [thread:$0]  %s594, 16, %s596, %s585
        %p599 = scmp.gt.s32.totalorder %s106, 0
        %s600 = scalar_select %p599, %s106, 0
        %p601 = scmp.lt.s32.totalorder %s600, 127
        %s602 = scalar_select %p601, %s600, 127
        %s603 = scalar_lea.hbm %s1, %s602
        %s604 = scalar_lea.vmem %s55, 24 [#allocation5]
        %s605 = scalar_lea.sflag [#allocation2], 24
        // Predicated region
        $region109: #{tpu_custom_call.1} parent=11 // pred_check
          _
        $region110: #{tpu_custom_call.1} parent=11 // pred_check_branch
          %607 = sbr.rel target = $region112
        $region111: #{tpu_custom_call.1} parent=11 // pred_region
          %608 = sst [smem:[#allocation9]] [#allocation58]
          %609 = sst [smem:[#allocation10]] [#allocation57]
        $region112: #{tpu_custom_call.1} parent=11 // pred_fallthru
          _
        %611 = shalt.err (0)
        %s613 = sshll.u32 %s603, 4
        %s614 = int_to_ptr.hbm [resolvable:$true] %s613
        %s615 = sshll.u32 %s604, 4
        %s616 = int_to_ptr.vmem [resolvable:$true] %s615
        %618 = dma.hbm_to_vmem [thread:$0]  %s614, 16, %s616, %s605
        %p619 = scmp.gt.s32.totalorder %s108, 0
        %s620 = scalar_select %p619, %s108, 0
        %p621 = scmp.lt.s32.totalorder %s620, 127
        %s622 = scalar_select %p621, %s620, 127
        %s623 = scalar_lea.hbm %s1, %s622
        %s624 = scalar_lea.vmem %s55, 25 [#allocation5]
        %s625 = scalar_lea.sflag [#allocation2], 25
        // Predicated region
        $region113: #{tpu_custom_call.1} parent=11 // pred_check
          _
        $region114: #{tpu_custom_call.1} parent=11 // pred_check_branch
          %627 = sbr.rel target = $region116
        $region115: #{tpu_custom_call.1} parent=11 // pred_region
          %628 = sst [smem:[#allocation9]] [#allocation60]
          %629 = sst [smem:[#allocation10]] [#allocation59]
        $region116: #{tpu_custom_call.1} parent=11 // pred_fallthru
          _
        %631 = shalt.err (0)
        %s633 = sshll.u32 %s623, 4
        %s634 = int_to_ptr.hbm [resolvable:$true] %s633
        %s635 = sshll.u32 %s624, 4
        %s636 = int_to_ptr.vmem [resolvable:$true] %s635
        %638 = dma.hbm_to_vmem [thread:$0]  %s634, 16, %s636, %s625
        %p639 = scmp.gt.s32.totalorder %s110, 0
        %s640 = scalar_select %p639, %s110, 0
        %p641 = scmp.lt.s32.totalorder %s640, 127
        %s642 = scalar_select %p641, %s640, 127
        %s643 = scalar_lea.hbm %s1, %s642
        %s644 = scalar_lea.vmem %s55, 26 [#allocation5]
        %s645 = scalar_lea.sflag [#allocation2], 26
        // Predicated region
        $region117: #{tpu_custom_call.1} parent=11 // pred_check
          _
        $region118: #{tpu_custom_call.1} parent=11 // pred_check_branch
          %647 = sbr.rel target = $region120
        $region119: #{tpu_custom_call.1} parent=11 // pred_region
          %648 = sst [smem:[#allocation9]] [#allocation62]
          %649 = sst [smem:[#allocation10]] [#allocation61]
        $region120: #{tpu_custom_call.1} parent=11 // pred_fallthru
          _
        %651 = shalt.err (0)
        %s653 = sshll.u32 %s643, 4
        %s654 = int_to_ptr.hbm [resolvable:$true] %s653
        %s655 = sshll.u32 %s644, 4
        %s656 = int_to_ptr.vmem [resolvable:$true] %s655
        %658 = dma.hbm_to_vmem [thread:$0]  %s654, 16, %s656, %s645
        %p659 = scmp.gt.s32.totalorder %s112, 0
        %s660 = scalar_select %p659, %s112, 0
        %p661 = scmp.lt.s32.totalorder %s660, 127
        %s662 = scalar_select %p661, %s660, 127
        %s663 = scalar_lea.hbm %s1, %s662
        %s664 = scalar_lea.vmem %s55, 27 [#allocation5]
        %s665 = scalar_lea.sflag [#allocation2], 27
        // Predicated region
        $region121: #{tpu_custom_call.1} parent=11 // pred_check
          _
        $region122: #{tpu_custom_call.1} parent=11 // pred_check_branch
          %667 = sbr.rel target = $region124
        $region123: #{tpu_custom_call.1} parent=11 // pred_region
          %668 = sst [smem:[#allocation9]] [#allocation64]
          %669 = sst [smem:[#allocation10]] [#allocation63]
        $region124: #{tpu_custom_call.1} parent=11 // pred_fallthru
          _
        %671 = shalt.err (0)
        %s673 = sshll.u32 %s663, 4
        %s674 = int_to_ptr.hbm [resolvable:$true] %s673
        %s675 = sshll.u32 %s664, 4
        %s676 = int_to_ptr.vmem [resolvable:$true] %s675
        %678 = dma.hbm_to_vmem [thread:$0]  %s674, 16, %s676, %s665
        %p679 = scmp.gt.s32.totalorder %s114, 0
        %s680 = scalar_select %p679, %s114, 0
        %p681 = scmp.lt.s32.totalorder %s680, 127
        %s682 = scalar_select %p681, %s680, 127
        %s683 = scalar_lea.hbm %s1, %s682
        %s684 = scalar_lea.vmem %s55, 28 [#allocation5]
        %s685 = scalar_lea.sflag [#allocation2], 28
        // Predicated region
        $region125: #{tpu_custom_call.1} parent=11 // pred_check
          _
        $region126: #{tpu_custom_call.1} parent=11 // pred_check_branch
          %687 = sbr.rel target = $region128
        $region127: #{tpu_custom_call.1} parent=11 // pred_region
          %688 = sst [smem:[#allocation9]] [#allocation66]
          %689 = sst [smem:[#allocation10]] [#allocation65]
        $region128: #{tpu_custom_call.1} parent=11 // pred_fallthru
          _
        %691 = shalt.err (0)
        %s693 = sshll.u32 %s683, 4
        %s694 = int_to_ptr.hbm [resolvable:$true] %s693
        %s695 = sshll.u32 %s684, 4
        %s696 = int_to_ptr.vmem [resolvable:$true] %s695
        %698 = dma.hbm_to_vmem [thread:$0]  %s694, 16, %s696, %s685
        %p699 = scmp.gt.s32.totalorder %s116, 0
        %s700 = scalar_select %p699, %s116, 0
        %p701 = scmp.lt.s32.totalorder %s700, 127
        %s702 = scalar_select %p701, %s700, 127
        %s703 = scalar_lea.hbm %s1, %s702
        %s704 = scalar_lea.vmem %s55, 29 [#allocation5]
        %s705 = scalar_lea.sflag [#allocation2], 29
        // Predicated region
        $region129: #{tpu_custom_call.1} parent=11 // pred_check
          _
        $region130: #{tpu_custom_call.1} parent=11 // pred_check_branch
          %707 = sbr.rel target = $region132
        $region131: #{tpu_custom_call.1} parent=11 // pred_region
          %708 = sst [smem:[#allocation9]] [#allocation68]
          %709 = sst [smem:[#allocation10]] [#allocation67]
        $region132: #{tpu_custom_call.1} parent=11 // pred_fallthru
          _
        %711 = shalt.err (0)
        %s713 = sshll.u32 %s703, 4
        %s714 = int_to_ptr.hbm [resolvable:$true] %s713
        %s715 = sshll.u32 %s704, 4
        %s716 = int_to_ptr.vmem [resolvable:$true] %s715
        %718 = dma.hbm_to_vmem [thread:$0]  %s714, 16, %s716, %s705
        %p719 = scmp.gt.s32.totalorder %s118, 0
        %s720 = scalar_select %p719, %s118, 0
        %p721 = scmp.lt.s32.totalorder %s720, 127
        %s722 = scalar_select %p721, %s720, 127
        %s723 = scalar_lea.hbm %s1, %s722
        %s724 = scalar_lea.vmem %s55, 30 [#allocation5]
        %s725 = scalar_lea.sflag [#allocation2], 30
        // Predicated region
        $region133: #{tpu_custom_call.1} parent=11 // pred_check
          _
        $region134: #{tpu_custom_call.1} parent=11 // pred_check_branch
          %727 = sbr.rel target = $region136
        $region135: #{tpu_custom_call.1} parent=11 // pred_region
          %728 = sst [smem:[#allocation9]] [#allocation70]
          %729 = sst [smem:[#allocation10]] [#allocation69]
        $region136: #{tpu_custom_call.1} parent=11 // pred_fallthru
          _
        %731 = shalt.err (0)
        %s733 = sshll.u32 %s723, 4
        %s734 = int_to_ptr.hbm [resolvable:$true] %s733
        %s735 = sshll.u32 %s724, 4
        %s736 = int_to_ptr.vmem [resolvable:$true] %s735
        %738 = dma.hbm_to_vmem [thread:$0]  %s734, 16, %s736, %s725
        %p739 = scmp.gt.s32.totalorder %s120, 0
        %s740 = scalar_select %p739, %s120, 0
        %p741 = scmp.lt.s32.totalorder %s740, 127
        %s742 = scalar_select %p741, %s740, 127
        %s743 = scalar_lea.hbm %s1, %s742
        %s744 = scalar_lea.vmem %s55, 31 [#allocation5]
        %s745 = scalar_lea.sflag [#allocation2], 31
        // Predicated region
        $region137: #{tpu_custom_call.1} parent=11 // pred_check
          _
        $region138: #{tpu_custom_call.1} parent=11 // pred_check_branch
          %747 = sbr.rel target = $region140
        $region139: #{tpu_custom_call.1} parent=11 // pred_region
          %748 = sst [smem:[#allocation9]] [#allocation72]
          %749 = sst [smem:[#allocation10]] [#allocation71]
        $region140: #{tpu_custom_call.1} parent=11 // pred_fallthru
          _
        %751 = shalt.err (0)
        %s753 = sshll.u32 %s743, 4
        %s754 = int_to_ptr.hbm [resolvable:$true] %s753
        %s755 = sshll.u32 %s744, 4
        %s756 = int_to_ptr.vmem [resolvable:$true] %s755
        %758 = dma.hbm_to_vmem [thread:$0]  %s754, 16, %s756, %s745
        %s759 = smul.u32 1, 1
        %s760 = sshll.u32 %s759, 4
        %761 = dma.done [#allocation2], %s760
        %s762 = sshll.u32 %s759, 4
        %763 = dma.done %s145, %s762
        %s764 = sshll.u32 %s759, 4
        %765 = dma.done %s165, %s764
        %s766 = sshll.u32 %s759, 4
        %767 = dma.done %s185, %s766
        %s768 = sshll.u32 %s759, 4
        %769 = dma.done %s205, %s768
        %s770 = sshll.u32 %s759, 4
        %771 = dma.done %s225, %s770
        %s772 = sshll.u32 %s759, 4
        %773 = dma.done %s245, %s772
        %s774 = sshll.u32 %s759, 4
        %775 = dma.done %s265, %s774
        %s776 = sshll.u32 %s759, 4
        %777 = dma.done %s285, %s776
        %s778 = sshll.u32 %s759, 4
        %779 = dma.done %s305, %s778
        %s780 = sshll.u32 %s759, 4
        %781 = dma.done %s325, %s780
        %s782 = sshll.u32 %s759, 4
        %783 = dma.done %s345, %s782
        %s784 = sshll.u32 %s759, 4
        %785 = dma.done %s365, %s784
        %s786 = sshll.u32 %s759, 4
        %787 = dma.done %s385, %s786
        %s788 = sshll.u32 %s759, 4
        %789 = dma.done %s405, %s788
        %s790 = sshll.u32 %s759, 4
        %791 = dma.done %s425, %s790
        %s792 = sshll.u32 %s759, 4
        %793 = dma.done %s445, %s792
        %s794 = sshll.u32 %s759, 4
        %795 = dma.done %s465, %s794
        %s796 = sshll.u32 %s759, 4
        %797 = dma.done %s485, %s796
        %s798 = sshll.u32 %s759, 4
        %799 = dma.done %s505, %s798
        %s800 = sshll.u32 %s759, 4
        %801 = dma.done %s525, %s800
        %s802 = sshll.u32 %s759, 4
        %803 = dma.done %s545, %s802
        %s804 = sshll.u32 %s759, 4
        %805 = dma.done %s565, %s804
        %s806 = sshll.u32 %s759, 4
        %807 = dma.done %s585, %s806
        %s808 = sshll.u32 %s759, 4
        %809 = dma.done %s605, %s808
        %s810 = sshll.u32 %s759, 4
        %811 = dma.done %s625, %s810
        %s812 = sshll.u32 %s759, 4
        %813 = dma.done %s645, %s812
        %s814 = sshll.u32 %s759, 4
        %815 = dma.done %s665, %s814
        %s816 = sshll.u32 %s759, 4
        %817 = dma.done %s685, %s816
        %s818 = sshll.u32 %s759, 4
        %819 = dma.done %s705, %s818
        %s820 = sshll.u32 %s759, 4
        %821 = dma.done %s725, %s820
        %s822 = sshll.u32 %s759, 4
        %823 = dma.done %s745, %s822
        %p824 = scmp.lt.s32.totalorder %s58, 0
        %p825 = scmp.ge.s32.totalorder %s58, 128
        %p826 = por %p824, %p825
        // Predicated region
        $region141: #{tpu_custom_call.1} parent=11 // pred_check
          %p827 = pneg %p826
        $region142: #{tpu_custom_call.1} parent=11 // pred_check_branch
          %829 = sbr.rel (%p827) target = $region144
        $region143: #{tpu_custom_call.1} parent=11 // pred_region
          %830 = vst [vmem:[%s55] sm:$0x1] 0.0
        $region144: #{tpu_custom_call.1} parent=11 // pred_fallthru
          _
        %p831 = scmp.lt.s32.totalorder %s60, 0
        %p832 = scmp.ge.s32.totalorder %s60, 128
        %p833 = por %p831, %p832
        // Predicated region
        $region145: #{tpu_custom_call.1} parent=11 // pred_check
          %p834 = pneg %p833
        $region146: #{tpu_custom_call.1} parent=11 // pred_check_branch
          %836 = sbr.rel (%p834) target = $region148
        $region147: #{tpu_custom_call.1} parent=11 // pred_region
          %837 = vst [vmem:[%s55 + $0x1] sm:$0x1] 0.0
        $region148: #{tpu_custom_call.1} parent=11 // pred_fallthru
          _
        %p838 = scmp.lt.s32.totalorder %s62, 0
        %p839 = scmp.ge.s32.totalorder %s62, 128
        %p840 = por %p838, %p839
        // Predicated region
        $region149: #{tpu_custom_call.1} parent=11 // pred_check
          %p841 = pneg %p840
        $region150: #{tpu_custom_call.1} parent=11 // pred_check_branch
          %843 = sbr.rel (%p841) target = $region152
        $region151: #{tpu_custom_call.1} parent=11 // pred_region
          %844 = vst [vmem:[%s55 + $0x2] sm:$0x1] 0.0
        $region152: #{tpu_custom_call.1} parent=11 // pred_fallthru
          _
        %p845 = scmp.lt.s32.totalorder %s64, 0
        %p846 = scmp.ge.s32.totalorder %s64, 128
        %p847 = por %p845, %p846
        // Predicated region
        $region153: #{tpu_custom_call.1} parent=11 // pred_check
          %p848 = pneg %p847
        $region154: #{tpu_custom_call.1} parent=11 // pred_check_branch
          %850 = sbr.rel (%p848) target = $region156
        $region155: #{tpu_custom_call.1} parent=11 // pred_region
          %851 = vst [vmem:[%s55 + $0x3] sm:$0x1] 0.0
        $region156: #{tpu_custom_call.1} parent=11 // pred_fallthru
          _
        %p852 = scmp.lt.s32.totalorder %s66, 0
        %p853 = scmp.ge.s32.totalorder %s66, 128
        %p854 = por %p852, %p853
        // Predicated region
        $region157: #{tpu_custom_call.1} parent=11 // pred_check
          %p855 = pneg %p854
        $region158: #{tpu_custom_call.1} parent=11 // pred_check_branch
          %857 = sbr.rel (%p855) target = $region160
        $region159: #{tpu_custom_call.1} parent=11 // pred_region
          %858 = vst [vmem:[%s55 + $0x4] sm:$0x1] 0.0
        $region160: #{tpu_custom_call.1} parent=11 // pred_fallthru
          _
        %p859 = scmp.lt.s32.totalorder %s68, 0
        %p860 = scmp.ge.s32.totalorder %s68, 128
        %p861 = por %p859, %p860
        // Predicated region
        $region161: #{tpu_custom_call.1} parent=11 // pred_check
          %p862 = pneg %p861
        $region162: #{tpu_custom_call.1} parent=11 // pred_check_branch
          %864 = sbr.rel (%p862) target = $region164
        $region163: #{tpu_custom_call.1} parent=11 // pred_region
          %865 = vst [vmem:[%s55 + $0x5] sm:$0x1] 0.0
        $region164: #{tpu_custom_call.1} parent=11 // pred_fallthru
          _
        %p866 = scmp.lt.s32.totalorder %s70, 0
        %p867 = scmp.ge.s32.totalorder %s70, 128
        %p868 = por %p866, %p867
        // Predicated region
        $region165: #{tpu_custom_call.1} parent=11 // pred_check
          %p869 = pneg %p868
        $region166: #{tpu_custom_call.1} parent=11 // pred_check_branch
          %871 = sbr.rel (%p869) target = $region168
        $region167: #{tpu_custom_call.1} parent=11 // pred_region
          %872 = vst [vmem:[%s55 + $0x6] sm:$0x1] 0.0
        $region168: #{tpu_custom_call.1} parent=11 // pred_fallthru
          _
        %p873 = scmp.lt.s32.totalorder %s72, 0
        %p874 = scmp.ge.s32.totalorder %s72, 128
        %p875 = por %p873, %p874
        // Predicated region
        $region169: #{tpu_custom_call.1} parent=11 // pred_check
          %p876 = pneg %p875
        $region170: #{tpu_custom_call.1} parent=11 // pred_check_branch
          %878 = sbr.rel (%p876) target = $region172
        $region171: #{tpu_custom_call.1} parent=11 // pred_region
          %879 = vst [vmem:[%s55 + $0x7] sm:$0x1] 0.0
        $region172: #{tpu_custom_call.1} parent=11 // pred_fallthru
          _
        %p880 = scmp.lt.s32.totalorder %s74, 0
        %p881 = scmp.ge.s32.totalorder %s74, 128
        %p882 = por %p880, %p881
        // Predicated region
        $region173: #{tpu_custom_call.1} parent=11 // pred_check
          %p883 = pneg %p882
        $region174: #{tpu_custom_call.1} parent=11 // pred_check_branch
          %885 = sbr.rel (%p883) target = $region176
        $region175: #{tpu_custom_call.1} parent=11 // pred_region
          %886 = vst [vmem:[%s55 + $0x8] sm:$0x1] 0.0
        $region176: #{tpu_custom_call.1} parent=11 // pred_fallthru
          _
        %p887 = scmp.lt.s32.totalorder %s76, 0
        %p888 = scmp.ge.s32.totalorder %s76, 128
        %p889 = por %p887, %p888
        // Predicated region
        $region177: #{tpu_custom_call.1} parent=11 // pred_check
          %p890 = pneg %p889
        $region178: #{tpu_custom_call.1} parent=11 // pred_check_branch
          %892 = sbr.rel (%p890) target = $region180
        $region179: #{tpu_custom_call.1} parent=11 // pred_region
          %893 = vst [vmem:[%s55 + $0x9] sm:$0x1] 0.0
        $region180: #{tpu_custom_call.1} parent=11 // pred_fallthru
          _
        %p894 = scmp.lt.s32.totalorder %s78, 0
        %p895 = scmp.ge.s32.totalorder %s78, 128
        %p896 = por %p894, %p895
        // Predicated region
        $region181: #{tpu_custom_call.1} parent=11 // pred_check
          %p897 = pneg %p896
        $region182: #{tpu_custom_call.1} parent=11 // pred_check_branch
          %899 = sbr.rel (%p897) target = $region184
        $region183: #{tpu_custom_call.1} parent=11 // pred_region
          %900 = vst [vmem:[%s55 + $0xa] sm:$0x1] 0.0
        $region184: #{tpu_custom_call.1} parent=11 // pred_fallthru
          _
        %p901 = scmp.lt.s32.totalorder %s80, 0
        %p902 = scmp.ge.s32.totalorder %s80, 128
        %p903 = por %p901, %p902
        // Predicated region
        $region185: #{tpu_custom_call.1} parent=11 // pred_check
          %p904 = pneg %p903
        $region186: #{tpu_custom_call.1} parent=11 // pred_check_branch
          %906 = sbr.rel (%p904) target = $region188
        $region187: #{tpu_custom_call.1} parent=11 // pred_region
          %907 = vst [vmem:[%s55 + $0xb] sm:$0x1] 0.0
        $region188: #{tpu_custom_call.1} parent=11 // pred_fallthru
          _
        %p908 = scmp.lt.s32.totalorder %s82, 0
        %p909 = scmp.ge.s32.totalorder %s82, 128
        %p910 = por %p908, %p909
        // Predicated region
        $region189: #{tpu_custom_call.1} parent=11 // pred_check
          %p911 = pneg %p910
        $region190: #{tpu_custom_call.1} parent=11 // pred_check_branch
          %913 = sbr.rel (%p911) target = $region192
        $region191: #{tpu_custom_call.1} parent=11 // pred_region
          %914 = vst [vmem:[%s55 + $0xc] sm:$0x1] 0.0
        $region192: #{tpu_custom_call.1} parent=11 // pred_fallthru
          _
        %p915 = scmp.lt.s32.totalorder %s84, 0
        %p916 = scmp.ge.s32.totalorder %s84, 128
        %p917 = por %p915, %p916
        // Predicated region
        $region193: #{tpu_custom_call.1} parent=11 // pred_check
          %p918 = pneg %p917
        $region194: #{tpu_custom_call.1} parent=11 // pred_check_branch
          %920 = sbr.rel (%p918) target = $region196
        $region195: #{tpu_custom_call.1} parent=11 // pred_region
          %921 = vst [vmem:[%s55 + $0xd] sm:$0x1] 0.0
        $region196: #{tpu_custom_call.1} parent=11 // pred_fallthru
          _
        %p922 = scmp.lt.s32.totalorder %s86, 0
        %p923 = scmp.ge.s32.totalorder %s86, 128
        %p924 = por %p922, %p923
        // Predicated region
        $region197: #{tpu_custom_call.1} parent=11 // pred_check
          %p925 = pneg %p924
        $region198: #{tpu_custom_call.1} parent=11 // pred_check_branch
          %927 = sbr.rel (%p925) target = $region200
        $region199: #{tpu_custom_call.1} parent=11 // pred_region
          %928 = vst [vmem:[%s55 + $0xe] sm:$0x1] 0.0
        $region200: #{tpu_custom_call.1} parent=11 // pred_fallthru
          _
        %p929 = scmp.lt.s32.totalorder %s88, 0
        %p930 = scmp.ge.s32.totalorder %s88, 128
        %p931 = por %p929, %p930
        // Predicated region
        $region201: #{tpu_custom_call.1} parent=11 // pred_check
          %p932 = pneg %p931
        $region202: #{tpu_custom_call.1} parent=11 // pred_check_branch
          %934 = sbr.rel (%p932) target = $region204
        $region203: #{tpu_custom_call.1} parent=11 // pred_region
          %935 = vst [vmem:[%s55 + $0xf] sm:$0x1] 0.0
        $region204: #{tpu_custom_call.1} parent=11 // pred_fallthru
          _
        %p936 = scmp.lt.s32.totalorder %s90, 0
        %p937 = scmp.ge.s32.totalorder %s90, 128
        %p938 = por %p936, %p937
        // Predicated region
        $region205: #{tpu_custom_call.1} parent=11 // pred_check
          %p939 = pneg %p938
        $region206: #{tpu_custom_call.1} parent=11 // pred_check_branch
          %941 = sbr.rel (%p939) target = $region208
        $region207: #{tpu_custom_call.1} parent=11 // pred_region
          %942 = vst [vmem:[%s55 + $0x10] sm:$0x1] 0.0
        $region208: #{tpu_custom_call.1} parent=11 // pred_fallthru
          _
        %p943 = scmp.lt.s32.totalorder %s92, 0
        %p944 = scmp.ge.s32.totalorder %s92, 128
        %p945 = por %p943, %p944
        // Predicated region
        $region209: #{tpu_custom_call.1} parent=11 // pred_check
          %p946 = pneg %p945
        $region210: #{tpu_custom_call.1} parent=11 // pred_check_branch
          %948 = sbr.rel (%p946) target = $region212
        $region211: #{tpu_custom_call.1} parent=11 // pred_region
          %949 = vst [vmem:[%s55 + $0x11] sm:$0x1] 0.0
        $region212: #{tpu_custom_call.1} parent=11 // pred_fallthru
          _
        %p950 = scmp.lt.s32.totalorder %s94, 0
        %p951 = scmp.ge.s32.totalorder %s94, 128
        %p952 = por %p950, %p951
        // Predicated region
        $region213: #{tpu_custom_call.1} parent=11 // pred_check
          %p953 = pneg %p952
        $region214: #{tpu_custom_call.1} parent=11 // pred_check_branch
          %955 = sbr.rel (%p953) target = $region216
        $region215: #{tpu_custom_call.1} parent=11 // pred_region
          %956 = vst [vmem:[%s55 + $0x12] sm:$0x1] 0.0
        $region216: #{tpu_custom_call.1} parent=11 // pred_fallthru
          _
        %p957 = scmp.lt.s32.totalorder %s96, 0
        %p958 = scmp.ge.s32.totalorder %s96, 128
        %p959 = por %p957, %p958
        // Predicated region
        $region217: #{tpu_custom_call.1} parent=11 // pred_check
          %p960 = pneg %p959
        $region218: #{tpu_custom_call.1} parent=11 // pred_check_branch
          %962 = sbr.rel (%p960) target = $region220
        $region219: #{tpu_custom_call.1} parent=11 // pred_region
          %963 = vst [vmem:[%s55 + $0x13] sm:$0x1] 0.0
        $region220: #{tpu_custom_call.1} parent=11 // pred_fallthru
          _
        %p964 = scmp.lt.s32.totalorder %s98, 0
        %p965 = scmp.ge.s32.totalorder %s98, 128
        %p966 = por %p964, %p965
        // Predicated region
        $region221: #{tpu_custom_call.1} parent=11 // pred_check
          %p967 = pneg %p966
        $region222: #{tpu_custom_call.1} parent=11 // pred_check_branch
          %969 = sbr.rel (%p967) target = $region224
        $region223: #{tpu_custom_call.1} parent=11 // pred_region
          %970 = vst [vmem:[%s55 + $0x14] sm:$0x1] 0.0
        $region224: #{tpu_custom_call.1} parent=11 // pred_fallthru
          _
        %p971 = scmp.lt.s32.totalorder %s100, 0
        %p972 = scmp.ge.s32.totalorder %s100, 128
        %p973 = por %p971, %p972
        // Predicated region
        $region225: #{tpu_custom_call.1} parent=11 // pred_check
          %p974 = pneg %p973
        $region226: #{tpu_custom_call.1} parent=11 // pred_check_branch
          %976 = sbr.rel (%p974) target = $region228
        $region227: #{tpu_custom_call.1} parent=11 // pred_region
          %977 = vst [vmem:[%s55 + $0x15] sm:$0x1] 0.0
        $region228: #{tpu_custom_call.1} parent=11 // pred_fallthru
          _
        %p978 = scmp.lt.s32.totalorder %s102, 0
        %p979 = scmp.ge.s32.totalorder %s102, 128
        %p980 = por %p978, %p979
        // Predicated region
        $region229: #{tpu_custom_call.1} parent=11 // pred_check
          %p981 = pneg %p980
        $region230: #{tpu_custom_call.1} parent=11 // pred_check_branch
          %983 = sbr.rel (%p981) target = $region232
        $region231: #{tpu_custom_call.1} parent=11 // pred_region
          %984 = vst [vmem:[%s55 + $0x16] sm:$0x1] 0.0
        $region232: #{tpu_custom_call.1} parent=11 // pred_fallthru
          _
        %p985 = scmp.lt.s32.totalorder %s104, 0
        %p986 = scmp.ge.s32.totalorder %s104, 128
        %p987 = por %p985, %p986
        // Predicated region
        $region233: #{tpu_custom_call.1} parent=11 // pred_check
          %p988 = pneg %p987
        $region234: #{tpu_custom_call.1} parent=11 // pred_check_branch
          %990 = sbr.rel (%p988) target = $region236
        $region235: #{tpu_custom_call.1} parent=11 // pred_region
          %991 = vst [vmem:[%s55 + $0x17] sm:$0x1] 0.0
        $region236: #{tpu_custom_call.1} parent=11 // pred_fallthru
          _
        %p992 = scmp.lt.s32.totalorder %s106, 0
        %p993 = scmp.ge.s32.totalorder %s106, 128
        %p994 = por %p992, %p993
        // Predicated region
        $region237: #{tpu_custom_call.1} parent=11 // pred_check
          %p995 = pneg %p994
        $region238: #{tpu_custom_call.1} parent=11 // pred_check_branch
          %997 = sbr.rel (%p995) target = $region240
        $region239: #{tpu_custom_call.1} parent=11 // pred_region
          %998 = vst [vmem:[%s55 + $0x18] sm:$0x1] 0.0
        $region240: #{tpu_custom_call.1} parent=11 // pred_fallthru
          _
        %p999 = scmp.lt.s32.totalorder %s108, 0
        %p1000 = scmp.ge.s32.totalorder %s108, 128
        %p1001 = por %p999, %p1000
        // Predicated region
        $region241: #{tpu_custom_call.1} parent=11 // pred_check
          %p1002 = pneg %p1001
        $region242: #{tpu_custom_call.1} parent=11 // pred_check_branch
          %1004 = sbr.rel (%p1002) target = $region244
        $region243: #{tpu_custom_call.1} parent=11 // pred_region
          %1005 = vst [vmem:[%s55 + $0x19] sm:$0x1] 0.0
        $region244: #{tpu_custom_call.1} parent=11 // pred_fallthru
          _
        %p1006 = scmp.lt.s32.totalorder %s110, 0
        %p1007 = scmp.ge.s32.totalorder %s110, 128
        %p1008 = por %p1006, %p1007
        // Predicated region
        $region245: #{tpu_custom_call.1} parent=11 // pred_check
          %p1009 = pneg %p1008
        $region246: #{tpu_custom_call.1} parent=11 // pred_check_branch
          %1011 = sbr.rel (%p1009) target = $region248
        $region247: #{tpu_custom_call.1} parent=11 // pred_region
          %1012 = vst [vmem:[%s55 + $0x1a] sm:$0x1] 0.0
        $region248: #{tpu_custom_call.1} parent=11 // pred_fallthru
          _
        %p1013 = scmp.lt.s32.totalorder %s112, 0
        %p1014 = scmp.ge.s32.totalorder %s112, 128
        %p1015 = por %p1013, %p1014
        // Predicated region
        $region249: #{tpu_custom_call.1} parent=11 // pred_check
          %p1016 = pneg %p1015
        $region250: #{tpu_custom_call.1} parent=11 // pred_check_branch
          %1018 = sbr.rel (%p1016) target = $region252
        $region251: #{tpu_custom_call.1} parent=11 // pred_region
          %1019 = vst [vmem:[%s55 + $0x1b] sm:$0x1] 0.0
        $region252: #{tpu_custom_call.1} parent=11 // pred_fallthru
          _
        %p1020 = scmp.lt.s32.totalorder %s114, 0
        %p1021 = scmp.ge.s32.totalorder %s114, 128
        %p1022 = por %p1020, %p1021
        // Predicated region
        $region253: #{tpu_custom_call.1} parent=11 // pred_check
          %p1023 = pneg %p1022
        $region254: #{tpu_custom_call.1} parent=11 // pred_check_branch
          %1025 = sbr.rel (%p1023) target = $region256
        $region255: #{tpu_custom_call.1} parent=11 // pred_region
          %1026 = vst [vmem:[%s55 + $0x1c] sm:$0x1] 0.0
        $region256: #{tpu_custom_call.1} parent=11 // pred_fallthru
          _
        %p1027 = scmp.lt.s32.totalorder %s116, 0
        %p1028 = scmp.ge.s32.totalorder %s116, 128
        %p1029 = por %p1027, %p1028
        // Predicated region
        $region257: #{tpu_custom_call.1} parent=11 // pred_check
          %p1030 = pneg %p1029
        $region258: #{tpu_custom_call.1} parent=11 // pred_check_branch
          %1032 = sbr.rel (%p1030) target = $region260
        $region259: #{tpu_custom_call.1} parent=11 // pred_region
          %1033 = vst [vmem:[%s55 + $0x1d] sm:$0x1] 0.0
        $region260: #{tpu_custom_call.1} parent=11 // pred_fallthru
          _
        %p1034 = scmp.lt.s32.totalorder %s118, 0
        %p1035 = scmp.ge.s32.totalorder %s118, 128
        %p1036 = por %p1034, %p1035
        // Predicated region
        $region261: #{tpu_custom_call.1} parent=11 // pred_check
          %p1037 = pneg %p1036
        $region262: #{tpu_custom_call.1} parent=11 // pred_check_branch
          %1039 = sbr.rel (%p1037) target = $region264
        $region263: #{tpu_custom_call.1} parent=11 // pred_region
          %1040 = vst [vmem:[%s55 + $0x1e] sm:$0x1] 0.0
        $region264: #{tpu_custom_call.1} parent=11 // pred_fallthru
          _
        %p1041 = scmp.lt.s32.totalorder %s120, 0
        %p1042 = scmp.ge.s32.totalorder %s120, 128
        %p1043 = por %p1041, %p1042
        // Predicated region
        $region265: #{tpu_custom_call.1} parent=11 // pred_check
          %p1044 = pneg %p1043
        $region266: #{tpu_custom_call.1} parent=11 // pred_check_branch
          %1046 = sbr.rel (%p1044) target = $region268
        $region267: #{tpu_custom_call.1} parent=11 // pred_region
          %1047 = vst [vmem:[%s55 + $0x1f] sm:$0x1] 0.0
        $region268: #{tpu_custom_call.1} parent=11 // pred_fallthru
          _
        %s1048 = sand.u32 %s28, 1
        %s1049 = scalar_lea.sflag [#allocation6], %s1048
        %s1050 = sand.u32 %s28, 1
        %s1051 = smul.addr %s1050, 32
        %s1052 = scalar_lea.vmem [#allocation5], %s1051
        // Predicated region
        $region269: #{tpu_custom_call.1} parent=11 // pred_check
          %p1053 = pneg %p34
        $region270: #{tpu_custom_call.1} parent=11 // pred_check_branch
          %1055 = sbr.rel (%p1053) target = $region272
        $region271: #{tpu_custom_call.1} parent=11 // pred_region
          %s1056 = smul.u32 4, %s19
          %1058 = vsyncadd %s1049, 0
          %s1059 = smul.addr %s1056, 8
          %s1060 = scalar_lea.hbm %s2, %s1059
          %s1061 = sshll.u32 %s1052, 4
          %s1062 = int_to_ptr.vmem [resolvable:$true] %s1061
          %s1063 = sshll.u32 %s1060, 4
          %s1064 = int_to_ptr.hbm [resolvable:$true] %s1063
          %1069 = dma.vmem_to_hbm [thread:$0]  %s1062, 512, %s1064, %s1049, 128, 128, 8
        $region272: #{tpu_custom_call.1} parent=11 // pred_fallthru
          _
      $region12: #{tpu_custom_call.1} parent=5 // pred_fallthru
        _
      %p1070 = scmp.le.s32.totalorder 1, %s19
      // Predicated region
      $region273: #{tpu_custom_call.1} parent=5 // pred_check
        %p1071 = pneg %p1070
      $region274: #{tpu_custom_call.1} parent=5 // pred_check_branch
        %1073 = sbr.rel (%p1071) target = $region276
      $region275: #{tpu_custom_call.1} parent=5 // pred_region
        %s1074 = ssub.s32 %s19, 1
        // Predicated region
        $region277: #{tpu_custom_call.1} parent=275 // pred_check
          %p1075 = pneg %p40
        $region278: #{tpu_custom_call.1} parent=275 // pred_check_branch
          %1077 = sbr.rel (%p1075) target = $region280
        $region279: #{tpu_custom_call.1} parent=275 // pred_region
          %s1078 = sand.u32 %s31, 1
          %s1079 = scalar_lea.sflag [#allocation6], %s1078
          %s1080 = sand.u32 %s31, 1
          %s1081 = smul.addr %s1080, 32
          %s1082 = scalar_lea.vmem [#allocation5], %s1081
          %1084 = dma.done %s1079, 512
        $region280: #{tpu_custom_call.1} parent=275 // pred_fallthru
          _
      $region276: #{tpu_custom_call.1} parent=5 // pred_fallthru
        _
    $region6: #{tpu_custom_call.1} parent=1 // loop_footer
      %s23 = sadd.s32 1, %s19
    $region7: #{tpu_custom_call.1} parent=1 // loop_footer_branch
      %18 = sbr.rel target = $region3
    $region8: #{tpu_custom_call.1} parent=1 // loop_exit
      _
    %1085 = vsyncpa [#allocation6], 1
    %s1086 = scalar_lea.sflag [#allocation6], 1
    %1087 = vsyncpa %s1086, 1
  %1088 = vsyncmov [#allocation2]
  %s1089 = vpop.sfrf %1088
  %p1090 = scmp.eq.s32.totalorder %s1089, 0
  %p1091 = pneg %p1090
  %1093 = shalt.err (%p1091)
  %s1094 = scalar_lea.sflag [#allocation2], 1
  %1095 = vsyncmov %s1094
  %s1096 = vpop.sfrf %1095
  %p1097 = scmp.eq.s32.totalorder %s1096, 0
  %p1098 = pneg %p1097
  %1100 = shalt.err (%p1098)
  %s1101 = scalar_lea.sflag [#allocation2], 2
  %1102 = vsyncmov %s1101
  %s1103 = vpop.sfrf %1102
  %p1104 = scmp.eq.s32.totalorder %s1103, 0
  %p1105 = pneg %p1104
  %1107 = shalt.err (%p1105)
  %s1108 = scalar_lea.sflag [#allocation2], 3
  %1109 = vsyncmov %s1108
  %s1110 = vpop.sfrf %1109
  %p1111 = scmp.eq.s32.totalorder %s1110, 0
  %p1112 = pneg %p1111
  %1114 = shalt.err (%p1112)
  %s1115 = scalar_lea.sflag [#allocation2], 4
  %1116 = vsyncmov %s1115
  %s1117 = vpop.sfrf %1116
  %p1118 = scmp.eq.s32.totalorder %s1117, 0
  %p1119 = pneg %p1118
  %1121 = shalt.err (%p1119)
  %s1122 = scalar_lea.sflag [#allocation2], 5
  %1123 = vsyncmov %s1122
  %s1124 = vpop.sfrf %1123
  %p1125 = scmp.eq.s32.totalorder %s1124, 0
  %p1126 = pneg %p1125
  %1128 = shalt.err (%p1126)
  %s1129 = scalar_lea.sflag [#allocation2], 6
  %1130 = vsyncmov %s1129
  %s1131 = vpop.sfrf %1130
  %p1132 = scmp.eq.s32.totalorder %s1131, 0
  %p1133 = pneg %p1132
  %1135 = shalt.err (%p1133)
  %s1136 = scalar_lea.sflag [#allocation2], 7
  %1137 = vsyncmov %s1136
  %s1138 = vpop.sfrf %1137
  %p1139 = scmp.eq.s32.totalorder %s1138, 0
  %p1140 = pneg %p1139
  %1142 = shalt.err (%p1140)
  %s1143 = scalar_lea.sflag [#allocation2], 8
  %1144 = vsyncmov %s1143
  %s1145 = vpop.sfrf %1144
  %p1146 = scmp.eq.s32.totalorder %s1145, 0
  %p1147 = pneg %p1146
  %1149 = shalt.err (%p1147)
  %s1150 = scalar_lea.sflag [#allocation2], 9
  %1151 = vsyncmov %s1150
  %s1152 = vpop.sfrf %1151
  %p1153 = scmp.eq.s32.totalorder %s1152, 0
  %p1154 = pneg %p1153
  %1156 = shalt.err (%p1154)
  %s1157 = scalar_lea.sflag [#allocation2], 10
  %1158 = vsyncmov %s1157
  %s1159 = vpop.sfrf %1158
  %p1160 = scmp.eq.s32.totalorder %s1159, 0
  %p1161 = pneg %p1160
  %1163 = shalt.err (%p1161)
  %s1164 = scalar_lea.sflag [#allocation2], 11
  %1165 = vsyncmov %s1164
  %s1166 = vpop.sfrf %1165
  %p1167 = scmp.eq.s32.totalorder %s1166, 0
  %p1168 = pneg %p1167
  %1170 = shalt.err (%p1168)
  %s1171 = scalar_lea.sflag [#allocation2], 12
  %1172 = vsyncmov %s1171
  %s1173 = vpop.sfrf %1172
  %p1174 = scmp.eq.s32.totalorder %s1173, 0
  %p1175 = pneg %p1174
  %1177 = shalt.err (%p1175)
  %s1178 = scalar_lea.sflag [#allocation2], 13
  %1179 = vsyncmov %s1178
  %s1180 = vpop.sfrf %1179
  %p1181 = scmp.eq.s32.totalorder %s1180, 0
  %p1182 = pneg %p1181
  %1184 = shalt.err (%p1182)
  %s1185 = scalar_lea.sflag [#allocation2], 14
  %1186 = vsyncmov %s1185
  %s1187 = vpop.sfrf %1186
  %p1188 = scmp.eq.s32.totalorder %s1187, 0
  %p1189 = pneg %p1188
  %1191 = shalt.err (%p1189)
  %s1192 = scalar_lea.sflag [#allocation2], 15
  %1193 = vsyncmov %s1192
  %s1194 = vpop.sfrf %1193
  %p1195 = scmp.eq.s32.totalorder %s1194, 0
  %p1196 = pneg %p1195
  %1198 = shalt.err (%p1196)
  %s1199 = scalar_lea.sflag [#allocation2], 16
  %1200 = vsyncmov %s1199
  %s1201 = vpop.sfrf %1200
  %p1202 = scmp.eq.s32.totalorder %s1201, 0
  %p1203 = pneg %p1202
  %1205 = shalt.err (%p1203)
  %s1206 = scalar_lea.sflag [#allocation2], 17
  %1207 = vsyncmov %s1206
  %s1208 = vpop.sfrf %1207
  %p1209 = scmp.eq.s32.totalorder %s1208, 0
  %p1210 = pneg %p1209
  %1212 = shalt.err (%p1210)
  %s1213 = scalar_lea.sflag [#allocation2], 18
  %1214 = vsyncmov %s1213
  %s1215 = vpop.sfrf %1214
  %p1216 = scmp.eq.s32.totalorder %s1215, 0
  %p1217 = pneg %p1216
  %1219 = shalt.err (%p1217)
  %s1220 = scalar_lea.sflag [#allocation2], 19
  %1221 = vsyncmov %s1220
  %s1222 = vpop.sfrf %1221
  %p1223 = scmp.eq.s32.totalorder %s1222, 0
  %p1224 = pneg %p1223
  %1226 = shalt.err (%p1224)
  %s1227 = scalar_lea.sflag [#allocation2], 20
  %1228 = vsyncmov %s1227
  %s1229 = vpop.sfrf %1228
  %p1230 = scmp.eq.s32.totalorder %s1229, 0
  %p1231 = pneg %p1230
  %1233 = shalt.err (%p1231)
  %s1234 = scalar_lea.sflag [#allocation2], 21
  %1235 = vsyncmov %s1234
  %s1236 = vpop.sfrf %1235
  %p1237 = scmp.eq.s32.totalorder %s1236, 0
  %p1238 = pneg %p1237
  %1240 = shalt.err (%p1238)
  %s1241 = scalar_lea.sflag [#allocation2], 22
  %1242 = vsyncmov %s1241
  %s1243 = vpop.sfrf %1242
  %p1244 = scmp.eq.s32.totalorder %s1243, 0
  %p1245 = pneg %p1244
  %1247 = shalt.err (%p1245)
  %s1248 = scalar_lea.sflag [#allocation2], 23
  %1249 = vsyncmov %s1248
  %s1250 = vpop.sfrf %1249
  %p1251 = scmp.eq.s32.totalorder %s1250, 0
  %p1252 = pneg %p1251
  %1254 = shalt.err (%p1252)
  %s1255 = scalar_lea.sflag [#allocation2], 24
  %1256 = vsyncmov %s1255
  %s1257 = vpop.sfrf %1256
  %p1258 = scmp.eq.s32.totalorder %s1257, 0
  %p1259 = pneg %p1258
  %1261 = shalt.err (%p1259)
  %s1262 = scalar_lea.sflag [#allocation2], 25
  %1263 = vsyncmov %s1262
  %s1264 = vpop.sfrf %1263
  %p1265 = scmp.eq.s32.totalorder %s1264, 0
  %p1266 = pneg %p1265
  %1268 = shalt.err (%p1266)
  %s1269 = scalar_lea.sflag [#allocation2], 26
  %1270 = vsyncmov %s1269
  %s1271 = vpop.sfrf %1270
  %p1272 = scmp.eq.s32.totalorder %s1271, 0
  %p1273 = pneg %p1272
  %1275 = shalt.err (%p1273)
  %s1276 = scalar_lea.sflag [#allocation2], 27
  %1277 = vsyncmov %s1276
  %s1278 = vpop.sfrf %1277
  %p1279 = scmp.eq.s32.totalorder %s1278, 0
  %p1280 = pneg %p1279
  %1282 = shalt.err (%p1280)
  %s1283 = scalar_lea.sflag [#allocation2], 28
  %1284 = vsyncmov %s1283
  %s1285 = vpop.sfrf %1284
  %p1286 = scmp.eq.s32.totalorder %s1285, 0
  %p1287 = pneg %p1286
  %1289 = shalt.err (%p1287)
  %s1290 = scalar_lea.sflag [#allocation2], 29
  %1291 = vsyncmov %s1290
  %s1292 = vpop.sfrf %1291
  %p1293 = scmp.eq.s32.totalorder %s1292, 0
  %p1294 = pneg %p1293
  %1296 = shalt.err (%p1294)
  %s1297 = scalar_lea.sflag [#allocation2], 30
  %1298 = vsyncmov %s1297
  %s1299 = vpop.sfrf %1298
  %p1300 = scmp.eq.s32.totalorder %s1299, 0
  %p1301 = pneg %p1300
  %1303 = shalt.err (%p1301)
  %s1304 = scalar_lea.sflag [#allocation2], 31
  %1305 = vsyncmov %s1304
  %s1306 = vpop.sfrf %1305
  %p1307 = scmp.eq.s32.totalorder %s1306, 0
  %p1308 = pneg %p1307
  %1310 = shalt.err (%p1308)

</llo_original>
